<compile_context>
chip_gen: v7x
topology: tpu7x:2x2x1
jax: 0.10.0
libtpu: 0.0.40
codegen_flags: <defaults>
</compile_context>

<pallas_src>
import math

import jax
import jax.numpy as jnp
from jax import lax
from jax.experimental import pallas as pl
from jax.experimental.pallas import tpu as pltpu


# ----------------------------- config ---------------------------------------
class Config:
    vocab_size = 16
    n_embd = 32
    n_attn = 32
    n_head = 4
    n_ffn = 32
    ctx_len = 8
    n_layer = 2
    model_type = "RWKV"


VP = 128  # lane-dense padded vocab / logits width


# ------------------------------ fused kernel ---------------------------------
def gpt_fwd_kernel(
    onehot_ref,                    # (1, T, VP)  one-hot(idx), zero-padded to VP
    emb_ref,                       # (VP, C)     zero-padded token embedding
    ln1_g_ref, ln1_b_ref,          # (L, 1, C)
    ln2_g_ref, ln2_b_ref,          # (L, 1, C)
    wchan_ref,                     # (L, TT, TT, A) per-channel causal decay w
    tg_ref,                        # (L, TT, 1)  time_gamma
    tm_kw_ref, tm_kb_ref,          # (L, C, A), (L, 1, A)
    tm_vw_ref, tm_vb_ref,          # (L, C, A), (L, 1, A)
    tm_rw_ref, tm_rb_ref,          # (L, C, A), (L, 1, A)
    tm_ow_ref, tm_ob_ref,          # (L, A, C), (L, 1, C)
    cm_kw_ref, cm_kb_ref,          # (L, C, HID), (L, 1, HID)
    cm_vw_ref, cm_vb_ref,          # (L, C, HID), (L, 1, HID)
    cm_rw_ref, cm_rb_ref,          # (L, C, C), (L, 1, C)
    cm_ww_ref, cm_wb_ref,          # (L, HID, C), (L, 1, C)
    lnf_g_ref, lnf_b_ref,          # (1, C)
    tout_ref,                      # (TT, 1)     time_out
    hq_w_ref, hq_b_ref,            # (C, 256), (1, 256)
    hk_w_ref, hk_b_ref,            # (C, 256), (1, 256)
    head_w_ref,                    # (C, VP)     zero-padded lm head (no bias)
    o_ref,                         # (1, T, VP)  padded logits
):
    T = onehot_ref.shape[1]
    C = emb_ref.shape[1]
    L = ln1_g_ref.shape[0]
    f32 = jnp.float32

    # ---- hoisted constants, built once and reused by every layer ----
    row = lax.broadcasted_iota(jnp.int32, (T, T), 0)
    col = lax.broadcasted_iota(jnp.int32, (T, T), 1)
    tril = col <= row
    tril_f = tril.astype(f32)                   # causal cumsum matrix
    shift_f = (col + 1 == row).astype(f32)      # one-step time shift, row0 -> 0
    chan = lax.broadcasted_iota(jnp.int32, (T, C), 1)
    first_half = chan < (C // 2)

    def layer_norm(z, g, b):
        mu = jnp.mean(z, axis=-1, keepdims=True)
        var = jnp.mean(jnp.square(z - mu), axis=-1, keepdims=True)
        return (z - mu) * lax.rsqrt(var + 1e-5) * g + b

    def time_shift_half(z):
        # ZeroPad2d((0,0,1,-1)) on the first C//2 channels, identity on the rest
        shifted = jnp.dot(shift_f, z, preferred_element_type=f32)
        return jnp.where(first_half, shifted, z)

    def mish(z):
        sp = jnp.maximum(z, 0.0) + jnp.log(1.0 + jnp.exp(-jnp.abs(z)))
        return z * jnp.tanh(sp)

    oh = onehot_ref[0]                                               # (T, VP)
    x = jnp.dot(oh, emb_ref[...], preferred_element_type=f32)        # embedding

    # n_layer is small & static -> unrolled inside the single kernel
    for l in range(L):
        # ---------------- RWKV_TimeMix ----------------
        xn = layer_norm(x, ln1_g_ref[l], ln1_b_ref[l])
        xs = time_shift_half(xn)
        k = jnp.dot(xs, tm_kw_ref[l], preferred_element_type=f32) + tm_kb_ref[l]
        v = jnp.dot(xs, tm_vw_ref[l], preferred_element_type=f32) + tm_vb_ref[l]
        r = jnp.dot(xs, tm_rw_ref[l], preferred_element_type=f32) + tm_rb_ref[l]
        kexp = jnp.exp(jnp.clip(k, -60.0, 30.0))
        sum_k = jnp.dot(tril_f, kexp, preferred_element_type=f32)    # cumsum_t
        kv = kexp * v                                                # (T, A)
        # wkv[t,a] = sum_u wchan[t,u,a] * kv[u,a]  (vectorized over heads/chans)
        wch = wchan_ref[l][:T, :T, :]                                # (T, T, A)
        wkv = jnp.sum(wch * kv[None, :, :], axis=1)                  # (T, A)
        rwkv = jax.nn.sigmoid(r) * wkv * pl.reciprocal(sum_k, approx=True)
        tm_out = (jnp.dot(rwkv, tm_ow_ref[l], preferred_element_type=f32)
                  + tm_ob_ref[l])
        x = x + tm_out * tg_ref[l][:T, :]

        # ---------------- RWKV_ChannelMix -------------
        xn2 = layer_norm(x, ln2_g_ref[l], ln2_b_ref[l])
        xs2 = time_shift_half(xn2)
        ck = jnp.dot(xs2, cm_kw_ref[l], preferred_element_type=f32) + cm_kb_ref[l]
        cv = jnp.dot(xs2, cm_vw_ref[l], preferred_element_type=f32) + cm_vb_ref[l]
        cr = jnp.dot(xs2, cm_rw_ref[l], preferred_element_type=f32) + cm_rb_ref[l]
        cwkv = (jnp.dot(mish(ck) * cv, cm_ww_ref[l], preferred_element_type=f32)
                + cm_wb_ref[l])
        x = x + jax.nn.sigmoid(cr) * cwkv

    # -------------------- GPT head --------------------
    xf = layer_norm(x, lnf_g_ref[...], lnf_b_ref[...])
    q = jnp.dot(xf, hq_w_ref[...], preferred_element_type=f32) + hq_b_ref[...]
    kh = jnp.dot(xf, hk_w_ref[...], preferred_element_type=f32) + hk_b_ref[...]
    att = lax.dot_general(q, kh, (((1,), (1,)), ((), ())),
                          preferred_element_type=f32)                # (T, T)
    att = jnp.where(tril, att, 0.0) * (1.0 / float(hq_w_ref.shape[1]))
    copy_logits = jnp.dot(att, oh, preferred_element_type=f32)       # (T, VP)
    tout = tout_ref[...][:T, :]                                      # (T, 1)
    logits = (jnp.dot(xf * tout, head_w_ref[...], preferred_element_type=f32)
              + copy_logits)                                         # (T, VP)
    o_ref[0] = logits.astype(o_ref.dtype)


# --------------------------- wrapper / forward --------------------------------
ARG_ORDER = (
    "emb", "ln1_g", "ln1_b", "ln2_g", "ln2_b", "wchan", "tg",
    "tm_kw", "tm_kb", "tm_vw", "tm_vb", "tm_rw", "tm_rb", "tm_ow", "tm_ob",
    "cm_kw", "cm_kb", "cm_vw", "cm_vb", "cm_rw", "cm_rb", "cm_ww", "cm_wb",
    "lnf_g", "lnf_b", "tout", "hq_w", "hq_b", "hk_w", "hk_b", "head_w",
)


def gpt_forward(packed, idx, cfg):
    B, T = idx.shape
    onehot = jax.nn.one_hot(idx, VP, dtype=jnp.float32)         # (B, T, VP)

    args = [onehot] + [packed[k] for k in ARG_ORDER]
    in_specs = [pl.BlockSpec((1, T, VP), lambda b: (b, 0, 0))]
    for a in args[1:]:
        zeros = (0,) * a.ndim
        in_specs.append(pl.BlockSpec(a.shape, lambda b, z=zeros: z))

    logits_p = pl.pallas_call(
        gpt_fwd_kernel,
        out_shape=jax.ShapeDtypeStruct((B, T, VP), jnp.float32),
        grid=(B,),
        in_specs=in_specs,
        out_specs=pl.BlockSpec((1, T, VP), lambda b: (b, 0, 0)),
        compiler_params=pltpu.CompilerParams(
            dimension_semantics=("parallel",)),
    )(*args)
    # TODO(synk): cross-entropy loss branch (targets is not None) is not implemented.
    return logits_p[:, :, :cfg.vocab_size], None


# ----------------------------- parameters ------------------------------------
def init_params(cfg, key):
    keys = iter(jax.random.split(key, 256))

    def dense(out_f, in_f, std=0.02):
        return {"w": jax.random.normal(next(keys), (out_f, in_f), jnp.float32) * std,
                "b": jnp.zeros((out_f,), jnp.float32)}

    C, A, H, TT, V = cfg.n_embd, cfg.n_attn, cfg.n_head, cfg.ctx_len, cfg.vocab_size
    hid_cm = 5 * cfg.n_ffn // 2

    # time_w decay init, exactly as in RWKV_TimeMix.__init__ (deterministic)
    curve = jnp.arange(TT, dtype=jnp.float32) - (TT - 1)
    rows = []
    for h in range(H):
        decay = math.pow(TT, -(h + 1) / (H - 1)) if h < H - 1 else 0.0
        rows.append(jnp.exp(curve * decay))
    time_w_init = jnp.stack(rows)

    params = {
        "tok_emb": jax.random.normal(next(keys), (V, C), jnp.float32) * 0.02,
        "ln_f_g": jnp.ones((C,), jnp.float32),
        "ln_f_b": jnp.zeros((C,), jnp.float32),
        "time_out": jnp.ones((1, TT, 1), jnp.float32),
        "head_w": jax.random.normal(next(keys), (V, C), jnp.float32) * 0.02,
        "head_q": dense(256, C),
        "head_k": dense(256, C),
        "blocks": [],
    }
    for _ in range(cfg.n_layer):
        blk = {
            "ln1_g": jnp.ones((C,), jnp.float32), "ln1_b": jnp.zeros((C,), jnp.float32),
            "ln2_g": jnp.ones((C,), jnp.float32), "ln2_b": jnp.zeros((C,), jnp.float32),
            "tm": {
                "time_w": time_w_init,
                "alpha": jnp.ones((H, 1, TT), jnp.float32),
                "beta": jnp.ones((H, TT, 1), jnp.float32),
                "gamma": jnp.ones((TT, 1), jnp.float32),
                "key": dense(A, C), "value": dense(A, C),
                "receptance": dense(A, C), "output": dense(C, A),
            },
            "cm": {
                "key": dense(hid_cm, C), "value": dense(hid_cm, C),
                "receptance": dense(C, C), "weight": dense(C, hid_cm),
            },
        }
        params["blocks"].append(blk)
    return params


def pack_params(params, cfg):
    """One-time packing: stack per-layer weights, pre-transpose to (in, out),
    zero-pad vocab dims to VP lanes, and fold build_time_w into a precomputed
    per-channel causal Toeplitz decay tensor."""
    C, A, H = cfg.n_embd, cfg.n_attn, cfg.n_head
    TT, V = cfg.ctx_len, cfg.vocab_size
    hs = A // H
    blocks = params["blocks"]

    def stack(fn):
        return jnp.stack([fn(b) for b in blocks])

    # wchan[l, t, u, h*hs + c] = time_w[l, h, TT-1-(t-u)] * alpha[l,h,0,u] * beta[l,h,t,0]
    # for u <= t, else 0  (identical to the pad/tile/reshape/slice in the reference)
    t_idx = jnp.arange(TT)[:, None]
    u_idx = jnp.arange(TT)[None, :]
    gidx = jnp.clip(TT - 1 - t_idx + u_idx, 0, TT - 1)
    causal = (u_idx <= t_idx).astype(jnp.float32)

    def build_wchan(blk):
        tm = blk["tm"]
        w = tm["time_w"][:, gidx] * causal[None]          # (H, TT, TT)
        w = w * tm["alpha"] * tm["beta"]                  # alpha:(H,1,TT) beta:(H,TT,1)
        return jnp.repeat(jnp.transpose(w, (1, 2, 0)), hs, axis=-1)  # (TT, TT, A)

    emb_p = jnp.zeros((VP, C), jnp.float32).at[:V].set(params["tok_emb"])
    head_w_p = jnp.zeros((C, VP), jnp.float32).at[:, :V].set(params["head_w"].T)

    packed = {
        "emb": emb_p,
        "ln1_g": stack(lambda b: b["ln1_g"][None, :]),
        "ln1_b": stack(lambda b: b["ln1_b"][None, :]),
        "ln2_g": stack(lambda b: b["ln2_g"][None, :]),
        "ln2_b": stack(lambda b: b["ln2_b"][None, :]),
        "wchan": stack(build_wchan),
        "tg": stack(lambda b: b["tm"]["gamma"]),
        "tm_kw": stack(lambda b: b["tm"]["key"]["w"].T),
        "tm_kb": stack(lambda b: b["tm"]["key"]["b"][None, :]),
        "tm_vw": stack(lambda b: b["tm"]["value"]["w"].T),
        "tm_vb": stack(lambda b: b["tm"]["value"]["b"][None, :]),
        "tm_rw": stack(lambda b: b["tm"]["receptance"]["w"].T),
        "tm_rb": stack(lambda b: b["tm"]["receptance"]["b"][None, :]),
        "tm_ow": stack(lambda b: b["tm"]["output"]["w"].T),
        "tm_ob": stack(lambda b: b["tm"]["output"]["b"][None, :]),
        "cm_kw": stack(lambda b: b["cm"]["key"]["w"].T),
        "cm_kb": stack(lambda b: b["cm"]["key"]["b"][None, :]),
        "cm_vw": stack(lambda b: b["cm"]["value"]["w"].T),
        "cm_vb": stack(lambda b: b["cm"]["value"]["b"][None, :]),
        "cm_rw": stack(lambda b: b["cm"]["receptance"]["w"].T),
        "cm_rb": stack(lambda b: b["cm"]["receptance"]["b"][None, :]),
        "cm_ww": stack(lambda b: b["cm"]["weight"]["w"].T),
        "cm_wb": stack(lambda b: b["cm"]["weight"]["b"][None, :]),
        "lnf_g": params["ln_f_g"][None, :],
        "lnf_b": params["ln_f_b"][None, :],
        "tout": params["time_out"].reshape(TT, 1),
        "hq_w": params["head_q"]["w"].T, "hq_b": params["head_q"]["b"][None, :],
        "hk_w": params["head_k"]["w"].T, "hk_b": params["head_k"]["b"][None, :],
        "head_w": head_w_p,
    }
    return packed


# -------------------------------- main ----------------------------------------
if __name__ == "__main__":
    cfg = Config()
    key = jax.random.PRNGKey(0)
    pkey, ikey = jax.random.split(key)
    params = init_params(cfg, pkey)
    packed = pack_params(params, cfg)          # one-time packing (outside jit)

    B, T = 2, cfg.ctx_len
    idx = jax.random.randint(ikey, (B, T), 0, cfg.vocab_size, dtype=jnp.int32)

    @jax.jit
    def fwd(p, i):
        return gpt_forward(p, i, cfg)

    logits, loss = fwd(packed, idx)
    jax.block_until_ready(logits)
    assert logits.shape == (B, T, cfg.vocab_size)
    assert bool(jnp.all(jnp.isfinite(logits)))
    print("KERNEL_OK")
</pallas_src>

<mosaic_0001>
module attributes {stable_mosaic.version = 11 : i64} {
  func.func @gpt_fwd_kernel(%arg0: i32, %arg1: memref<1x8x128xf32, #tpu.memory_space<vmem>>, %arg2: memref<128x32xf32, #tpu.memory_space<vmem>>, %arg3: memref<2x1x32xf32, #tpu.memory_space<vmem>>, %arg4: memref<2x1x32xf32, #tpu.memory_space<vmem>>, %arg5: memref<2x1x32xf32, #tpu.memory_space<vmem>>, %arg6: memref<2x1x32xf32, #tpu.memory_space<vmem>>, %arg7: memref<2x8x8x32xf32, #tpu.memory_space<vmem>>, %arg8: memref<2x8x1xf32, #tpu.memory_space<vmem>>, %arg9: memref<2x32x32xf32, #tpu.memory_space<vmem>>, %arg10: memref<2x1x32xf32, #tpu.memory_space<vmem>>, %arg11: memref<2x32x32xf32, #tpu.memory_space<vmem>>, %arg12: memref<2x1x32xf32, #tpu.memory_space<vmem>>, %arg13: memref<2x32x32xf32, #tpu.memory_space<vmem>>, %arg14: memref<2x1x32xf32, #tpu.memory_space<vmem>>, %arg15: memref<2x32x32xf32, #tpu.memory_space<vmem>>, %arg16: memref<2x1x32xf32, #tpu.memory_space<vmem>>, %arg17: memref<2x32x80xf32, #tpu.memory_space<vmem>>, %arg18: memref<2x1x80xf32, #tpu.memory_space<vmem>>, %arg19: memref<2x32x80xf32, #tpu.memory_space<vmem>>, %arg20: memref<2x1x80xf32, #tpu.memory_space<vmem>>, %arg21: memref<2x32x32xf32, #tpu.memory_space<vmem>>, %arg22: memref<2x1x32xf32, #tpu.memory_space<vmem>>, %arg23: memref<2x80x32xf32, #tpu.memory_space<vmem>>, %arg24: memref<2x1x32xf32, #tpu.memory_space<vmem>>, %arg25: memref<1x32xf32, #tpu.memory_space<vmem>>, %arg26: memref<1x32xf32, #tpu.memory_space<vmem>>, %arg27: memref<8x1xf32, #tpu.memory_space<vmem>>, %arg28: memref<32x256xf32, #tpu.memory_space<vmem>>, %arg29: memref<1x256xf32, #tpu.memory_space<vmem>>, %arg30: memref<32x256xf32, #tpu.memory_space<vmem>>, %arg31: memref<1x256xf32, #tpu.memory_space<vmem>>, %arg32: memref<32x128xf32, #tpu.memory_space<vmem>>, %arg33: memref<1x8x128xf32, #tpu.memory_space<vmem>>) attributes {dimension_semantics = [#tpu.dimension_semantics<parallel>], iteration_bounds = array<i64: 2>, scalar_prefetch = 0 : i64, scratch_operands = 0 : i64, tpu.core_type = #tpu.core_type<tc>, window_params = [{transform_indices = @transform_0, window_bounds = array<i64: 1, 8, 128>}, {pipeline_mode = #tpu.pipeline_mode<synchronous>, transform_indices = @transform_1, window_bounds = array<i64: 128, 32>}, {pipeline_mode = #tpu.pipeline_mode<synchronous>, transform_indices = @transform_2, window_bounds = array<i64: 2, 1, 32>}, {pipeline_mode = #tpu.pipeline_mode<synchronous>, transform_indices = @transform_3, window_bounds = array<i64: 2, 1, 32>}, {pipeline_mode = #tpu.pipeline_mode<synchronous>, transform_indices = @transform_4, window_bounds = array<i64: 2, 1, 32>}, {pipeline_mode = #tpu.pipeline_mode<synchronous>, transform_indices = @transform_5, window_bounds = array<i64: 2, 1, 32>}, {pipeline_mode = #tpu.pipeline_mode<synchronous>, transform_indices = @transform_6, window_bounds = array<i64: 2, 8, 8, 32>}, {pipeline_mode = #tpu.pipeline_mode<synchronous>, transform_indices = @transform_7, window_bounds = array<i64: 2, 8, 1>}, {pipeline_mode = #tpu.pipeline_mode<synchronous>, transform_indices = @transform_8, window_bounds = array<i64: 2, 32, 32>}, {pipeline_mode = #tpu.pipeline_mode<synchronous>, transform_indices = @transform_9, window_bounds = array<i64: 2, 1, 32>}, {pipeline_mode = #tpu.pipeline_mode<synchronous>, transform_indices = @transform_10, window_bounds = array<i64: 2, 32, 32>}, {pipeline_mode = #tpu.pipeline_mode<synchronous>, transform_indices = @transform_11, window_bounds = array<i64: 2, 1, 32>}, {pipeline_mode = #tpu.pipeline_mode<synchronous>, transform_indices = @transform_12, window_bounds = array<i64: 2, 32, 32>}, {pipeline_mode = #tpu.pipeline_mode<synchronous>, transform_indices = @transform_13, window_bounds = array<i64: 2, 1, 32>}, {pipeline_mode = #tpu.pipeline_mode<synchronous>, transform_indices = @transform_14, window_bounds = array<i64: 2, 32, 32>}, {pipeline_mode = #tpu.pipeline_mode<synchronous>, transform_indices = @transform_15, window_bounds = array<i64: 2, 1, 32>}, {pipeline_mode = #tpu.pipeline_mode<synchronous>, transform_indices = @transform_16, window_bounds = array<i64: 2, 32, 80>}, {pipeline_mode = #tpu.pipeline_mode<synchronous>, transform_indices = @transform_17, window_bounds = array<i64: 2, 1, 80>}, {pipeline_mode = #tpu.pipeline_mode<synchronous>, transform_indices = @transform_18, window_bounds = array<i64: 2, 32, 80>}, {pipeline_mode = #tpu.pipeline_mode<synchronous>, transform_indices = @transform_19, window_bounds = array<i64: 2, 1, 80>}, {pipeline_mode = #tpu.pipeline_mode<synchronous>, transform_indices = @transform_20, window_bounds = array<i64: 2, 32, 32>}, {pipeline_mode = #tpu.pipeline_mode<synchronous>, transform_indices = @transform_21, window_bounds = array<i64: 2, 1, 32>}, {pipeline_mode = #tpu.pipeline_mode<synchronous>, transform_indices = @transform_22, window_bounds = array<i64: 2, 80, 32>}, {pipeline_mode = #tpu.pipeline_mode<synchronous>, transform_indices = @transform_23, window_bounds = array<i64: 2, 1, 32>}, {pipeline_mode = #tpu.pipeline_mode<synchronous>, transform_indices = @transform_24, window_bounds = array<i64: 1, 32>}, {pipeline_mode = #tpu.pipeline_mode<synchronous>, transform_indices = @transform_25, window_bounds = array<i64: 1, 32>}, {pipeline_mode = #tpu.pipeline_mode<synchronous>, transform_indices = @transform_26, window_bounds = array<i64: 8, 1>}, {pipeline_mode = #tpu.pipeline_mode<synchronous>, transform_indices = @transform_27, window_bounds = array<i64: 32, 256>}, {pipeline_mode = #tpu.pipeline_mode<synchronous>, transform_indices = @transform_28, window_bounds = array<i64: 1, 256>}, {pipeline_mode = #tpu.pipeline_mode<synchronous>, transform_indices = @transform_29, window_bounds = array<i64: 32, 256>}, {pipeline_mode = #tpu.pipeline_mode<synchronous>, transform_indices = @transform_30, window_bounds = array<i64: 1, 256>}, {pipeline_mode = #tpu.pipeline_mode<synchronous>, transform_indices = @transform_31, window_bounds = array<i64: 32, 128>}, {transform_indices = @transform_32, window_bounds = array<i64: 1, 8, 128>}]} {
    %0 = tpu.iota {dimensions = array<i32: 0>} : vector<8x8xi32>
    %1 = tpu.iota {dimensions = array<i32: 1>} : vector<8x8xi32>
    %2 = arith.cmpi sle, %1, %0 : vector<8x8xi32>
    %3 = arith.extui %2 : vector<8x8xi1> to vector<8x8xi32>
    %4 = arith.sitofp %3 : vector<8x8xi32> to vector<8x8xf32>
    %c1_i32 = arith.constant 1 : i32
    %5 = vector.broadcast %c1_i32 : i32 to vector<8x8xi32>
    %6 = arith.addi %1, %5 : vector<8x8xi32>
    %7 = arith.cmpi eq, %6, %0 : vector<8x8xi32>
    %8 = arith.extui %7 : vector<8x8xi1> to vector<8x8xi32>
    %9 = arith.sitofp %8 : vector<8x8xi32> to vector<8x8xf32>
    %10 = tpu.iota {dimensions = array<i32: 1>} : vector<8x32xi32>
    %c16_i32 = arith.constant 16 : i32
    %11 = vector.broadcast %c16_i32 : i32 to vector<8x32xi32>
    %12 = arith.cmpi slt, %10, %11 : vector<8x32xi32>
    %c0 = arith.constant 0 : index
    %c0_0 = arith.constant 0 : index
    %c0_1 = arith.constant 0 : index
    %13 = vector.load %arg1[%c0, %c0_0, %c0_1] : memref<1x8x128xf32, #tpu.memory_space<vmem>>, vector<1x8x128xf32>
    %14 = vector.shape_cast %13 : vector<1x8x128xf32> to vector<8x128xf32>
    %c0_2 = arith.constant 0 : index
    %c0_3 = arith.constant 0 : index
    %15 = vector.load %arg2[%c0_2, %c0_3] : memref<128x32xf32, #tpu.memory_space<vmem>>, vector<128x32xf32>
    %cst = arith.constant dense<0.000000e+00> : vector<8x32xf32>
    %16 = tpu.matmul %14, %15, %cst {dimension_numbers = #tpu.dot_dimension_numbers<[1], [0], [0], [1], [0, 0, 1, 1], [], []>} : vector<8x128xf32>, vector<128x32xf32>, vector<8x32xf32> -> vector<8x32xf32>
    %c0_4 = arith.constant 0 : index
    %c0_5 = arith.constant 0 : index
    %c0_6 = arith.constant 0 : index
    %17 = vector.load %arg3[%c0_4, %c0_5, %c0_6] : memref<2x1x32xf32, #tpu.memory_space<vmem>>, vector<1x1x32xf32>
    %18 = vector.shape_cast %17 : vector<1x1x32xf32> to vector<1x32xf32>
    %c0_7 = arith.constant 0 : index
    %c0_8 = arith.constant 0 : index
    %c0_9 = arith.constant 0 : index
    %19 = vector.load %arg4[%c0_7, %c0_8, %c0_9] : memref<2x1x32xf32, #tpu.memory_space<vmem>>, vector<1x1x32xf32>
    %20 = vector.shape_cast %19 : vector<1x1x32xf32> to vector<1x32xf32>
    %cst_10 = arith.constant dense<0.000000e+00> : vector<8xf32>
    %21 = vector.multi_reduction <add>, %16, %cst_10 [1] : vector<8x32xf32> to vector<8xf32>
    %22 = vector.shape_cast %21 : vector<8xf32> to vector<8x1xf32>
    %cst_11 = arith.constant 3.200000e+01 : f32
    %23 = vector.broadcast %cst_11 : f32 to vector<8x1xf32>
    %24 = arith.divf %22, %23 : vector<8x1xf32>
    %25 = vector.broadcast %24 : vector<8x1xf32> to vector<8x32xf32>
    %26 = arith.subf %16, %25 : vector<8x32xf32>
    %27 = arith.mulf %26, %26 : vector<8x32xf32>
    %cst_12 = arith.constant dense<0.000000e+00> : vector<8xf32>
    %28 = vector.multi_reduction <add>, %27, %cst_12 [1] : vector<8x32xf32> to vector<8xf32>
    %29 = vector.shape_cast %28 : vector<8xf32> to vector<8x1xf32>
    %cst_13 = arith.constant 3.200000e+01 : f32
    %30 = vector.broadcast %cst_13 : f32 to vector<8x1xf32>
    %31 = arith.divf %29, %30 : vector<8x1xf32>
    %32 = vector.broadcast %24 : vector<8x1xf32> to vector<8x32xf32>
    %33 = arith.subf %16, %32 : vector<8x32xf32>
    %cst_14 = arith.constant 9.99999974E-6 : f32
    %34 = vector.broadcast %cst_14 : f32 to vector<8x1xf32>
    %35 = arith.addf %31, %34 : vector<8x1xf32>
    %36 = math.rsqrt %35 : vector<8x1xf32>
    %37 = vector.broadcast %36 : vector<8x1xf32> to vector<8x32xf32>
    %38 = arith.mulf %33, %37 : vector<8x32xf32>
    %39 = vector.broadcast %18 : vector<1x32xf32> to vector<8x32xf32>
    %40 = arith.mulf %38, %39 : vector<8x32xf32>
    %41 = vector.broadcast %20 : vector<1x32xf32> to vector<8x32xf32>
    %42 = arith.addf %40, %41 : vector<8x32xf32>
    %cst_15 = arith.constant dense<0.000000e+00> : vector<8x32xf32>
    %43 = tpu.matmul %9, %42, %cst_15 {dimension_numbers = #tpu.dot_dimension_numbers<[1], [0], [0], [1], [0, 0, 1, 1], [], []>} : vector<8x8xf32>, vector<8x32xf32>, vector<8x32xf32> -> vector<8x32xf32>
    %44 = arith.select %12, %43, %42 : vector<8x32xi1>, vector<8x32xf32>
    %c0_16 = arith.constant 0 : index
    %c0_17 = arith.constant 0 : index
    %c0_18 = arith.constant 0 : index
    %45 = vector.load %arg9[%c0_16, %c0_17, %c0_18] : memref<2x32x32xf32, #tpu.memory_space<vmem>>, vector<1x32x32xf32>
    %46 = vector.shape_cast %45 : vector<1x32x32xf32> to vector<32x32xf32>
    %cst_19 = arith.constant dense<0.000000e+00> : vector<8x32xf32>
    %47 = tpu.matmul %44, %46, %cst_19 {dimension_numbers = #tpu.dot_dimension_numbers<[1], [0], [0], [1], [0, 0, 1, 1], [], []>} : vector<8x32xf32>, vector<32x32xf32>, vector<8x32xf32> -> vector<8x32xf32>
    %c0_20 = arith.constant 0 : index
    %c0_21 = arith.constant 0 : index
    %c0_22 = arith.constant 0 : index
    %48 = vector.load %arg10[%c0_20, %c0_21, %c0_22] : memref<2x1x32xf32, #tpu.memory_space<vmem>>, vector<1x1x32xf32>
    %49 = vector.shape_cast %48 : vector<1x1x32xf32> to vector<1x32xf32>
    %50 = vector.broadcast %49 : vector<1x32xf32> to vector<8x32xf32>
    %51 = arith.addf %47, %50 : vector<8x32xf32>
    %c0_23 = arith.constant 0 : index
    %c0_24 = arith.constant 0 : index
    %c0_25 = arith.constant 0 : index
    %52 = vector.load %arg11[%c0_23, %c0_24, %c0_25] : memref<2x32x32xf32, #tpu.memory_space<vmem>>, vector<1x32x32xf32>
    %53 = vector.shape_cast %52 : vector<1x32x32xf32> to vector<32x32xf32>
    %cst_26 = arith.constant dense<0.000000e+00> : vector<8x32xf32>
    %54 = tpu.matmul %44, %53, %cst_26 {dimension_numbers = #tpu.dot_dimension_numbers<[1], [0], [0], [1], [0, 0, 1, 1], [], []>} : vector<8x32xf32>, vector<32x32xf32>, vector<8x32xf32> -> vector<8x32xf32>
    %c0_27 = arith.constant 0 : index
    %c0_28 = arith.constant 0 : index
    %c0_29 = arith.constant 0 : index
    %55 = vector.load %arg12[%c0_27, %c0_28, %c0_29] : memref<2x1x32xf32, #tpu.memory_space<vmem>>, vector<1x1x32xf32>
    %56 = vector.shape_cast %55 : vector<1x1x32xf32> to vector<1x32xf32>
    %57 = vector.broadcast %56 : vector<1x32xf32> to vector<8x32xf32>
    %58 = arith.addf %54, %57 : vector<8x32xf32>
    %c0_30 = arith.constant 0 : index
    %c0_31 = arith.constant 0 : index
    %c0_32 = arith.constant 0 : index
    %59 = vector.load %arg13[%c0_30, %c0_31, %c0_32] : memref<2x32x32xf32, #tpu.memory_space<vmem>>, vector<1x32x32xf32>
    %60 = vector.shape_cast %59 : vector<1x32x32xf32> to vector<32x32xf32>
    %cst_33 = arith.constant dense<0.000000e+00> : vector<8x32xf32>
    %61 = tpu.matmul %44, %60, %cst_33 {dimension_numbers = #tpu.dot_dimension_numbers<[1], [0], [0], [1], [0, 0, 1, 1], [], []>} : vector<8x32xf32>, vector<32x32xf32>, vector<8x32xf32> -> vector<8x32xf32>
    %c0_34 = arith.constant 0 : index
    %c0_35 = arith.constant 0 : index
    %c0_36 = arith.constant 0 : index
    %62 = vector.load %arg14[%c0_34, %c0_35, %c0_36] : memref<2x1x32xf32, #tpu.memory_space<vmem>>, vector<1x1x32xf32>
    %63 = vector.shape_cast %62 : vector<1x1x32xf32> to vector<1x32xf32>
    %64 = vector.broadcast %63 : vector<1x32xf32> to vector<8x32xf32>
    %65 = arith.addf %61, %64 : vector<8x32xf32>
    %cst_37 = arith.constant -6.000000e+01 : f32
    %cst_38 = arith.constant 3.000000e+01 : f32
    %66 = vector.broadcast %cst_37 : f32 to vector<8x32xf32>
    %67 = arith.maximumf %66, %51 : vector<8x32xf32>
    %68 = vector.broadcast %cst_38 : f32 to vector<8x32xf32>
    %69 = arith.minimumf %68, %67 : vector<8x32xf32>
    %70 = math.exp %69 : vector<8x32xf32>
    %cst_39 = arith.constant dense<0.000000e+00> : vector<8x32xf32>
    %71 = tpu.matmul %4, %70, %cst_39 {dimension_numbers = #tpu.dot_dimension_numbers<[1], [0], [0], [1], [0, 0, 1, 1], [], []>} : vector<8x8xf32>, vector<8x32xf32>, vector<8x32xf32> -> vector<8x32xf32>
    %72 = arith.mulf %70, %58 : vector<8x32xf32>
    %c0_40 = arith.constant 0 : index
    %c0_41 = arith.constant 0 : index
    %c0_42 = arith.constant 0 : index
    %c0_43 = arith.constant 0 : index
    %73 = vector.load %arg7[%c0_40, %c0_41, %c0_42, %c0_43] : memref<2x8x8x32xf32, #tpu.memory_space<vmem>>, vector<1x8x8x32xf32>
    %74 = vector.shape_cast %73 : vector<1x8x8x32xf32> to vector<8x8x32xf32>
    %75 = vector.shape_cast %72 : vector<8x32xf32> to vector<1x8x32xf32>
    %76 = vector.broadcast %75 : vector<1x8x32xf32> to vector<8x8x32xf32>
    %77 = arith.mulf %74, %76 : vector<8x8x32xf32>
    %cst_44 = arith.constant dense<0.000000e+00> : vector<8x32xf32>
    %78 = vector.multi_reduction <add>, %77, %cst_44 [1] : vector<8x8x32xf32> to vector<8x32xf32>
    %79 = arith.negf %65 : vector<8x32xf32>
    %80 = math.exp %79 : vector<8x32xf32>
    %cst_45 = arith.constant 1.000000e+00 : f32
    %81 = vector.broadcast %cst_45 : f32 to vector<8x32xf32>
    %82 = arith.addf %81, %80 : vector<8x32xf32>
    %83 = arith.divf %81, %82 : vector<8x32xf32>
    %84 = arith.mulf %83, %78 : vector<8x32xf32>
    %85 = tpu.reciprocal %71 {approx = true} : vector<8x32xf32> -> vector<8x32xf32>
    %86 = arith.mulf %84, %85 : vector<8x32xf32>
    %c0_46 = arith.constant 0 : index
    %c0_47 = arith.constant 0 : index
    %c0_48 = arith.constant 0 : index
    %87 = vector.load %arg15[%c0_46, %c0_47, %c0_48] : memref<2x32x32xf32, #tpu.memory_space<vmem>>, vector<1x32x32xf32>
    %88 = vector.shape_cast %87 : vector<1x32x32xf32> to vector<32x32xf32>
    %cst_49 = arith.constant dense<0.000000e+00> : vector<8x32xf32>
    %89 = tpu.matmul %86, %88, %cst_49 {dimension_numbers = #tpu.dot_dimension_numbers<[1], [0], [0], [1], [0, 0, 1, 1], [], []>} : vector<8x32xf32>, vector<32x32xf32>, vector<8x32xf32> -> vector<8x32xf32>
    %c0_50 = arith.constant 0 : index
    %c0_51 = arith.constant 0 : index
    %c0_52 = arith.constant 0 : index
    %90 = vector.load %arg16[%c0_50, %c0_51, %c0_52] : memref<2x1x32xf32, #tpu.memory_space<vmem>>, vector<1x1x32xf32>
    %91 = vector.shape_cast %90 : vector<1x1x32xf32> to vector<1x32xf32>
    %92 = vector.broadcast %91 : vector<1x32xf32> to vector<8x32xf32>
    %93 = arith.addf %89, %92 : vector<8x32xf32>
    %c0_53 = arith.constant 0 : index
    %c0_54 = arith.constant 0 : index
    %c0_55 = arith.constant 0 : index
    %94 = vector.load %arg8[%c0_53, %c0_54, %c0_55] : memref<2x8x1xf32, #tpu.memory_space<vmem>>, vector<1x8x1xf32>
    %95 = vector.shape_cast %94 : vector<1x8x1xf32> to vector<8x1xf32>
    %96 = vector.broadcast %95 : vector<8x1xf32> to vector<8x32xf32>
    %97 = arith.mulf %93, %96 : vector<8x32xf32>
    %98 = arith.addf %16, %97 : vector<8x32xf32>
    %c0_56 = arith.constant 0 : index
    %c0_57 = arith.constant 0 : index
    %c0_58 = arith.constant 0 : index
    %99 = vector.load %arg5[%c0_56, %c0_57, %c0_58] : memref<2x1x32xf32, #tpu.memory_space<vmem>>, vector<1x1x32xf32>
    %100 = vector.shape_cast %99 : vector<1x1x32xf32> to vector<1x32xf32>
    %c0_59 = arith.constant 0 : index
    %c0_60 = arith.constant 0 : index
    %c0_61 = arith.constant 0 : index
    %101 = vector.load %arg6[%c0_59, %c0_60, %c0_61] : memref<2x1x32xf32, #tpu.memory_space<vmem>>, vector<1x1x32xf32>
    %102 = vector.shape_cast %101 : vector<1x1x32xf32> to vector<1x32xf32>
    %cst_62 = arith.constant dense<0.000000e+00> : vector<8xf32>
    %103 = vector.multi_reduction <add>, %98, %cst_62 [1] : vector<8x32xf32> to vector<8xf32>
    %104 = vector.shape_cast %103 : vector<8xf32> to vector<8x1xf32>
    %cst_63 = arith.constant 3.200000e+01 : f32
    %105 = vector.broadcast %cst_63 : f32 to vector<8x1xf32>
    %106 = arith.divf %104, %105 : vector<8x1xf32>
    %107 = vector.broadcast %106 : vector<8x1xf32> to vector<8x32xf32>
    %108 = arith.subf %98, %107 : vector<8x32xf32>
    %109 = arith.mulf %108, %108 : vector<8x32xf32>
    %cst_64 = arith.constant dense<0.000000e+00> : vector<8xf32>
    %110 = vector.multi_reduction <add>, %109, %cst_64 [1] : vector<8x32xf32> to vector<8xf32>
    %111 = vector.shape_cast %110 : vector<8xf32> to vector<8x1xf32>
    %cst_65 = arith.constant 3.200000e+01 : f32
    %112 = vector.broadcast %cst_65 : f32 to vector<8x1xf32>
    %113 = arith.divf %111, %112 : vector<8x1xf32>
    %114 = vector.broadcast %106 : vector<8x1xf32> to vector<8x32xf32>
    %115 = arith.subf %98, %114 : vector<8x32xf32>
    %cst_66 = arith.constant 9.99999974E-6 : f32
    %116 = vector.broadcast %cst_66 : f32 to vector<8x1xf32>
    %117 = arith.addf %113, %116 : vector<8x1xf32>
    %118 = math.rsqrt %117 : vector<8x1xf32>
    %119 = vector.broadcast %118 : vector<8x1xf32> to vector<8x32xf32>
    %120 = arith.mulf %115, %119 : vector<8x32xf32>
    %121 = vector.broadcast %100 : vector<1x32xf32> to vector<8x32xf32>
    %122 = arith.mulf %120, %121 : vector<8x32xf32>
    %123 = vector.broadcast %102 : vector<1x32xf32> to vector<8x32xf32>
    %124 = arith.addf %122, %123 : vector<8x32xf32>
    %cst_67 = arith.constant dense<0.000000e+00> : vector<8x32xf32>
    %125 = tpu.matmul %9, %124, %cst_67 {dimension_numbers = #tpu.dot_dimension_numbers<[1], [0], [0], [1], [0, 0, 1, 1], [], []>} : vector<8x8xf32>, vector<8x32xf32>, vector<8x32xf32> -> vector<8x32xf32>
    %126 = arith.select %12, %125, %124 : vector<8x32xi1>, vector<8x32xf32>
    %c0_68 = arith.constant 0 : index
    %c0_69 = arith.constant 0 : index
    %c0_70 = arith.constant 0 : index
    %127 = vector.load %arg17[%c0_68, %c0_69, %c0_70] : memref<2x32x80xf32, #tpu.memory_space<vmem>>, vector<1x32x80xf32>
    %128 = vector.shape_cast %127 : vector<1x32x80xf32> to vector<32x80xf32>
    %cst_71 = arith.constant dense<0.000000e+00> : vector<8x80xf32>
    %129 = tpu.matmul %126, %128, %cst_71 {dimension_numbers = #tpu.dot_dimension_numbers<[1], [0], [0], [1], [0, 0, 1, 1], [], []>} : vector<8x32xf32>, vector<32x80xf32>, vector<8x80xf32> -> vector<8x80xf32>
    %c0_72 = arith.constant 0 : index
    %c0_73 = arith.constant 0 : index
    %c0_74 = arith.constant 0 : index
    %130 = vector.load %arg18[%c0_72, %c0_73, %c0_74] : memref<2x1x80xf32, #tpu.memory_space<vmem>>, vector<1x1x80xf32>
    %131 = vector.shape_cast %130 : vector<1x1x80xf32> to vector<1x80xf32>
    %132 = vector.broadcast %131 : vector<1x80xf32> to vector<8x80xf32>
    %133 = arith.addf %129, %132 : vector<8x80xf32>
    %c0_75 = arith.constant 0 : index
    %c0_76 = arith.constant 0 : index
    %c0_77 = arith.constant 0 : index
    %134 = vector.load %arg19[%c0_75, %c0_76, %c0_77] : memref<2x32x80xf32, #tpu.memory_space<vmem>>, vector<1x32x80xf32>
    %135 = vector.shape_cast %134 : vector<1x32x80xf32> to vector<32x80xf32>
    %cst_78 = arith.constant dense<0.000000e+00> : vector<8x80xf32>
    %136 = tpu.matmul %126, %135, %cst_78 {dimension_numbers = #tpu.dot_dimension_numbers<[1], [0], [0], [1], [0, 0, 1, 1], [], []>} : vector<8x32xf32>, vector<32x80xf32>, vector<8x80xf32> -> vector<8x80xf32>
    %c0_79 = arith.constant 0 : index
    %c0_80 = arith.constant 0 : index
    %c0_81 = arith.constant 0 : index
    %137 = vector.load %arg20[%c0_79, %c0_80, %c0_81] : memref<2x1x80xf32, #tpu.memory_space<vmem>>, vector<1x1x80xf32>
    %138 = vector.shape_cast %137 : vector<1x1x80xf32> to vector<1x80xf32>
    %139 = vector.broadcast %138 : vector<1x80xf32> to vector<8x80xf32>
    %140 = arith.addf %136, %139 : vector<8x80xf32>
    %c0_82 = arith.constant 0 : index
    %c0_83 = arith.constant 0 : index
    %c0_84 = arith.constant 0 : index
    %141 = vector.load %arg21[%c0_82, %c0_83, %c0_84] : memref<2x32x32xf32, #tpu.memory_space<vmem>>, vector<1x32x32xf32>
    %142 = vector.shape_cast %141 : vector<1x32x32xf32> to vector<32x32xf32>
    %cst_85 = arith.constant dense<0.000000e+00> : vector<8x32xf32>
    %143 = tpu.matmul %126, %142, %cst_85 {dimension_numbers = #tpu.dot_dimension_numbers<[1], [0], [0], [1], [0, 0, 1, 1], [], []>} : vector<8x32xf32>, vector<32x32xf32>, vector<8x32xf32> -> vector<8x32xf32>
    %c0_86 = arith.constant 0 : index
    %c0_87 = arith.constant 0 : index
    %c0_88 = arith.constant 0 : index
    %144 = vector.load %arg22[%c0_86, %c0_87, %c0_88] : memref<2x1x32xf32, #tpu.memory_space<vmem>>, vector<1x1x32xf32>
    %145 = vector.shape_cast %144 : vector<1x1x32xf32> to vector<1x32xf32>
    %146 = vector.broadcast %145 : vector<1x32xf32> to vector<8x32xf32>
    %147 = arith.addf %143, %146 : vector<8x32xf32>
    %cst_89 = arith.constant 0.000000e+00 : f32
    %148 = vector.broadcast %cst_89 : f32 to vector<8x80xf32>
    %149 = arith.maximumf %133, %148 : vector<8x80xf32>
    %150 = math.absf %133 : vector<8x80xf32>
    %cst_90 = arith.constant 0.000000e+00 : f32
    %151 = vector.broadcast %cst_90 : f32 to vector<8x80xf32>
    %152 = arith.subf %151, %150 : vector<8x80xf32>
    %153 = math.exp %152 : vector<8x80xf32>
    %cst_91 = arith.constant 1.000000e+00 : f32
    %154 = vector.broadcast %cst_91 : f32 to vector<8x80xf32>
    %155 = arith.addf %154, %153 : vector<8x80xf32>
    %156 = math.log %155 : vector<8x80xf32>
    %157 = arith.addf %149, %156 : vector<8x80xf32>
    %158 = math.tanh %157 : vector<8x80xf32>
    %159 = arith.mulf %133, %158 : vector<8x80xf32>
    %160 = arith.mulf %159, %140 : vector<8x80xf32>
    %c0_92 = arith.constant 0 : index
    %c0_93 = arith.constant 0 : index
    %c0_94 = arith.constant 0 : index
    %161 = vector.load %arg23[%c0_92, %c0_93, %c0_94] : memref<2x80x32xf32, #tpu.memory_space<vmem>>, vector<1x80x32xf32>
    %162 = vector.shape_cast %161 : vector<1x80x32xf32> to vector<80x32xf32>
    %cst_95 = arith.constant dense<0.000000e+00> : vector<8x32xf32>
    %163 = tpu.matmul %160, %162, %cst_95 {dimension_numbers = #tpu.dot_dimension_numbers<[1], [0], [0], [1], [0, 0, 1, 1], [], []>} : vector<8x80xf32>, vector<80x32xf32>, vector<8x32xf32> -> vector<8x32xf32>
    %c0_96 = arith.constant 0 : index
    %c0_97 = arith.constant 0 : index
    %c0_98 = arith.constant 0 : index
    %164 = vector.load %arg24[%c0_96, %c0_97, %c0_98] : memref<2x1x32xf32, #tpu.memory_space<vmem>>, vector<1x1x32xf32>
    %165 = vector.shape_cast %164 : vector<1x1x32xf32> to vector<1x32xf32>
    %166 = vector.broadcast %165 : vector<1x32xf32> to vector<8x32xf32>
    %167 = arith.addf %163, %166 : vector<8x32xf32>
    %168 = arith.negf %147 : vector<8x32xf32>
    %169 = math.exp %168 : vector<8x32xf32>
    %cst_99 = arith.constant 1.000000e+00 : f32
    %170 = vector.broadcast %cst_99 : f32 to vector<8x32xf32>
    %171 = arith.addf %170, %169 : vector<8x32xf32>
    %172 = arith.divf %170, %171 : vector<8x32xf32>
    %173 = arith.mulf %172, %167 : vector<8x32xf32>
    %174 = arith.addf %98, %173 : vector<8x32xf32>
    %c1 = arith.constant 1 : index
    %c0_100 = arith.constant 0 : index
    %c0_101 = arith.constant 0 : index
    %175 = vector.load %arg3[%c1, %c0_100, %c0_101] : memref<2x1x32xf32, #tpu.memory_space<vmem>>, vector<1x1x32xf32>
    %176 = vector.shape_cast %175 : vector<1x1x32xf32> to vector<1x32xf32>
    %c1_102 = arith.constant 1 : index
    %c0_103 = arith.constant 0 : index
    %c0_104 = arith.constant 0 : index
    %177 = vector.load %arg4[%c1_102, %c0_103, %c0_104] : memref<2x1x32xf32, #tpu.memory_space<vmem>>, vector<1x1x32xf32>
    %178 = vector.shape_cast %177 : vector<1x1x32xf32> to vector<1x32xf32>
    %cst_105 = arith.constant dense<0.000000e+00> : vector<8xf32>
    %179 = vector.multi_reduction <add>, %174, %cst_105 [1] : vector<8x32xf32> to vector<8xf32>
    %180 = vector.shape_cast %179 : vector<8xf32> to vector<8x1xf32>
    %cst_106 = arith.constant 3.200000e+01 : f32
    %181 = vector.broadcast %cst_106 : f32 to vector<8x1xf32>
    %182 = arith.divf %180, %181 : vector<8x1xf32>
    %183 = vector.broadcast %182 : vector<8x1xf32> to vector<8x32xf32>
    %184 = arith.subf %174, %183 : vector<8x32xf32>
    %185 = arith.mulf %184, %184 : vector<8x32xf32>
    %cst_107 = arith.constant dense<0.000000e+00> : vector<8xf32>
    %186 = vector.multi_reduction <add>, %185, %cst_107 [1] : vector<8x32xf32> to vector<8xf32>
    %187 = vector.shape_cast %186 : vector<8xf32> to vector<8x1xf32>
    %cst_108 = arith.constant 3.200000e+01 : f32
    %188 = vector.broadcast %cst_108 : f32 to vector<8x1xf32>
    %189 = arith.divf %187, %188 : vector<8x1xf32>
    %190 = vector.broadcast %182 : vector<8x1xf32> to vector<8x32xf32>
    %191 = arith.subf %174, %190 : vector<8x32xf32>
    %cst_109 = arith.constant 9.99999974E-6 : f32
    %192 = vector.broadcast %cst_109 : f32 to vector<8x1xf32>
    %193 = arith.addf %189, %192 : vector<8x1xf32>
    %194 = math.rsqrt %193 : vector<8x1xf32>
    %195 = vector.broadcast %194 : vector<8x1xf32> to vector<8x32xf32>
    %196 = arith.mulf %191, %195 : vector<8x32xf32>
    %197 = vector.broadcast %176 : vector<1x32xf32> to vector<8x32xf32>
    %198 = arith.mulf %196, %197 : vector<8x32xf32>
    %199 = vector.broadcast %178 : vector<1x32xf32> to vector<8x32xf32>
    %200 = arith.addf %198, %199 : vector<8x32xf32>
    %cst_110 = arith.constant dense<0.000000e+00> : vector<8x32xf32>
    %201 = tpu.matmul %9, %200, %cst_110 {dimension_numbers = #tpu.dot_dimension_numbers<[1], [0], [0], [1], [0, 0, 1, 1], [], []>} : vector<8x8xf32>, vector<8x32xf32>, vector<8x32xf32> -> vector<8x32xf32>
    %202 = arith.select %12, %201, %200 : vector<8x32xi1>, vector<8x32xf32>
    %c1_111 = arith.constant 1 : index
    %c0_112 = arith.constant 0 : index
    %c0_113 = arith.constant 0 : index
    %203 = vector.load %arg9[%c1_111, %c0_112, %c0_113] : memref<2x32x32xf32, #tpu.memory_space<vmem>>, vector<1x32x32xf32>
    %204 = vector.shape_cast %203 : vector<1x32x32xf32> to vector<32x32xf32>
    %cst_114 = arith.constant dense<0.000000e+00> : vector<8x32xf32>
    %205 = tpu.matmul %202, %204, %cst_114 {dimension_numbers = #tpu.dot_dimension_numbers<[1], [0], [0], [1], [0, 0, 1, 1], [], []>} : vector<8x32xf32>, vector<32x32xf32>, vector<8x32xf32> -> vector<8x32xf32>
    %c1_115 = arith.constant 1 : index
    %c0_116 = arith.constant 0 : index
    %c0_117 = arith.constant 0 : index
    %206 = vector.load %arg10[%c1_115, %c0_116, %c0_117] : memref<2x1x32xf32, #tpu.memory_space<vmem>>, vector<1x1x32xf32>
    %207 = vector.shape_cast %206 : vector<1x1x32xf32> to vector<1x32xf32>
    %208 = vector.broadcast %207 : vector<1x32xf32> to vector<8x32xf32>
    %209 = arith.addf %205, %208 : vector<8x32xf32>
    %c1_118 = arith.constant 1 : index
    %c0_119 = arith.constant 0 : index
    %c0_120 = arith.constant 0 : index
    %210 = vector.load %arg11[%c1_118, %c0_119, %c0_120] : memref<2x32x32xf32, #tpu.memory_space<vmem>>, vector<1x32x32xf32>
    %211 = vector.shape_cast %210 : vector<1x32x32xf32> to vector<32x32xf32>
    %cst_121 = arith.constant dense<0.000000e+00> : vector<8x32xf32>
    %212 = tpu.matmul %202, %211, %cst_121 {dimension_numbers = #tpu.dot_dimension_numbers<[1], [0], [0], [1], [0, 0, 1, 1], [], []>} : vector<8x32xf32>, vector<32x32xf32>, vector<8x32xf32> -> vector<8x32xf32>
    %c1_122 = arith.constant 1 : index
    %c0_123 = arith.constant 0 : index
    %c0_124 = arith.constant 0 : index
    %213 = vector.load %arg12[%c1_122, %c0_123, %c0_124] : memref<2x1x32xf32, #tpu.memory_space<vmem>>, vector<1x1x32xf32>
    %214 = vector.shape_cast %213 : vector<1x1x32xf32> to vector<1x32xf32>
    %215 = vector.broadcast %214 : vector<1x32xf32> to vector<8x32xf32>
    %216 = arith.addf %212, %215 : vector<8x32xf32>
    %c1_125 = arith.constant 1 : index
    %c0_126 = arith.constant 0 : index
    %c0_127 = arith.constant 0 : index
    %217 = vector.load %arg13[%c1_125, %c0_126, %c0_127] : memref<2x32x32xf32, #tpu.memory_space<vmem>>, vector<1x32x32xf32>
    %218 = vector.shape_cast %217 : vector<1x32x32xf32> to vector<32x32xf32>
    %cst_128 = arith.constant dense<0.000000e+00> : vector<8x32xf32>
    %219 = tpu.matmul %202, %218, %cst_128 {dimension_numbers = #tpu.dot_dimension_numbers<[1], [0], [0], [1], [0, 0, 1, 1], [], []>} : vector<8x32xf32>, vector<32x32xf32>, vector<8x32xf32> -> vector<8x32xf32>
    %c1_129 = arith.constant 1 : index
    %c0_130 = arith.constant 0 : index
    %c0_131 = arith.constant 0 : index
    %220 = vector.load %arg14[%c1_129, %c0_130, %c0_131] : memref<2x1x32xf32, #tpu.memory_space<vmem>>, vector<1x1x32xf32>
    %221 = vector.shape_cast %220 : vector<1x1x32xf32> to vector<1x32xf32>
    %222 = vector.broadcast %221 : vector<1x32xf32> to vector<8x32xf32>
    %223 = arith.addf %219, %222 : vector<8x32xf32>
    %cst_132 = arith.constant -6.000000e+01 : f32
    %cst_133 = arith.constant 3.000000e+01 : f32
    %224 = vector.broadcast %cst_132 : f32 to vector<8x32xf32>
    %225 = arith.maximumf %224, %209 : vector<8x32xf32>
    %226 = vector.broadcast %cst_133 : f32 to vector<8x32xf32>
    %227 = arith.minimumf %226, %225 : vector<8x32xf32>
    %228 = math.exp %227 : vector<8x32xf32>
    %cst_134 = arith.constant dense<0.000000e+00> : vector<8x32xf32>
    %229 = tpu.matmul %4, %228, %cst_134 {dimension_numbers = #tpu.dot_dimension_numbers<[1], [0], [0], [1], [0, 0, 1, 1], [], []>} : vector<8x8xf32>, vector<8x32xf32>, vector<8x32xf32> -> vector<8x32xf32>
    %230 = arith.mulf %228, %216 : vector<8x32xf32>
    %c1_135 = arith.constant 1 : index
    %c0_136 = arith.constant 0 : index
    %c0_137 = arith.constant 0 : index
    %c0_138 = arith.constant 0 : index
    %231 = vector.load %arg7[%c1_135, %c0_136, %c0_137, %c0_138] : memref<2x8x8x32xf32, #tpu.memory_space<vmem>>, vector<1x8x8x32xf32>
    %232 = vector.shape_cast %231 : vector<1x8x8x32xf32> to vector<8x8x32xf32>
    %233 = vector.shape_cast %230 : vector<8x32xf32> to vector<1x8x32xf32>
    %234 = vector.broadcast %233 : vector<1x8x32xf32> to vector<8x8x32xf32>
    %235 = arith.mulf %232, %234 : vector<8x8x32xf32>
    %cst_139 = arith.constant dense<0.000000e+00> : vector<8x32xf32>
    %236 = vector.multi_reduction <add>, %235, %cst_139 [1] : vector<8x8x32xf32> to vector<8x32xf32>
    %237 = arith.negf %223 : vector<8x32xf32>
    %238 = math.exp %237 : vector<8x32xf32>
    %cst_140 = arith.constant 1.000000e+00 : f32
    %239 = vector.broadcast %cst_140 : f32 to vector<8x32xf32>
    %240 = arith.addf %239, %238 : vector<8x32xf32>
    %241 = arith.divf %239, %240 : vector<8x32xf32>
    %242 = arith.mulf %241, %236 : vector<8x32xf32>
    %243 = tpu.reciprocal %229 {approx = true} : vector<8x32xf32> -> vector<8x32xf32>
    %244 = arith.mulf %242, %243 : vector<8x32xf32>
    %c1_141 = arith.constant 1 : index
    %c0_142 = arith.constant 0 : index
    %c0_143 = arith.constant 0 : index
    %245 = vector.load %arg15[%c1_141, %c0_142, %c0_143] : memref<2x32x32xf32, #tpu.memory_space<vmem>>, vector<1x32x32xf32>
    %246 = vector.shape_cast %245 : vector<1x32x32xf32> to vector<32x32xf32>
    %cst_144 = arith.constant dense<0.000000e+00> : vector<8x32xf32>
    %247 = tpu.matmul %244, %246, %cst_144 {dimension_numbers = #tpu.dot_dimension_numbers<[1], [0], [0], [1], [0, 0, 1, 1], [], []>} : vector<8x32xf32>, vector<32x32xf32>, vector<8x32xf32> -> vector<8x32xf32>
    %c1_145 = arith.constant 1 : index
    %c0_146 = arith.constant 0 : index
    %c0_147 = arith.constant 0 : index
    %248 = vector.load %arg16[%c1_145, %c0_146, %c0_147] : memref<2x1x32xf32, #tpu.memory_space<vmem>>, vector<1x1x32xf32>
    %249 = vector.shape_cast %248 : vector<1x1x32xf32> to vector<1x32xf32>
    %250 = vector.broadcast %249 : vector<1x32xf32> to vector<8x32xf32>
    %251 = arith.addf %247, %250 : vector<8x32xf32>
    %c1_148 = arith.constant 1 : index
    %c0_149 = arith.constant 0 : index
    %c0_150 = arith.constant 0 : index
    %252 = vector.load %arg8[%c1_148, %c0_149, %c0_150] : memref<2x8x1xf32, #tpu.memory_space<vmem>>, vector<1x8x1xf32>
    %253 = vector.shape_cast %252 : vector<1x8x1xf32> to vector<8x1xf32>
    %254 = vector.broadcast %253 : vector<8x1xf32> to vector<8x32xf32>
    %255 = arith.mulf %251, %254 : vector<8x32xf32>
    %256 = arith.addf %174, %255 : vector<8x32xf32>
    %c1_151 = arith.constant 1 : index
    %c0_152 = arith.constant 0 : index
    %c0_153 = arith.constant 0 : index
    %257 = vector.load %arg5[%c1_151, %c0_152, %c0_153] : memref<2x1x32xf32, #tpu.memory_space<vmem>>, vector<1x1x32xf32>
    %258 = vector.shape_cast %257 : vector<1x1x32xf32> to vector<1x32xf32>
    %c1_154 = arith.constant 1 : index
    %c0_155 = arith.constant 0 : index
    %c0_156 = arith.constant 0 : index
    %259 = vector.load %arg6[%c1_154, %c0_155, %c0_156] : memref<2x1x32xf32, #tpu.memory_space<vmem>>, vector<1x1x32xf32>
    %260 = vector.shape_cast %259 : vector<1x1x32xf32> to vector<1x32xf32>
    %cst_157 = arith.constant dense<0.000000e+00> : vector<8xf32>
    %261 = vector.multi_reduction <add>, %256, %cst_157 [1] : vector<8x32xf32> to vector<8xf32>
    %262 = vector.shape_cast %261 : vector<8xf32> to vector<8x1xf32>
    %cst_158 = arith.constant 3.200000e+01 : f32
    %263 = vector.broadcast %cst_158 : f32 to vector<8x1xf32>
    %264 = arith.divf %262, %263 : vector<8x1xf32>
    %265 = vector.broadcast %264 : vector<8x1xf32> to vector<8x32xf32>
    %266 = arith.subf %256, %265 : vector<8x32xf32>
    %267 = arith.mulf %266, %266 : vector<8x32xf32>
    %cst_159 = arith.constant dense<0.000000e+00> : vector<8xf32>
    %268 = vector.multi_reduction <add>, %267, %cst_159 [1] : vector<8x32xf32> to vector<8xf32>
    %269 = vector.shape_cast %268 : vector<8xf32> to vector<8x1xf32>
    %cst_160 = arith.constant 3.200000e+01 : f32
    %270 = vector.broadcast %cst_160 : f32 to vector<8x1xf32>
    %271 = arith.divf %269, %270 : vector<8x1xf32>
    %272 = vector.broadcast %264 : vector<8x1xf32> to vector<8x32xf32>
    %273 = arith.subf %256, %272 : vector<8x32xf32>
    %cst_161 = arith.constant 9.99999974E-6 : f32
    %274 = vector.broadcast %cst_161 : f32 to vector<8x1xf32>
    %275 = arith.addf %271, %274 : vector<8x1xf32>
    %276 = math.rsqrt %275 : vector<8x1xf32>
    %277 = vector.broadcast %276 : vector<8x1xf32> to vector<8x32xf32>
    %278 = arith.mulf %273, %277 : vector<8x32xf32>
    %279 = vector.broadcast %258 : vector<1x32xf32> to vector<8x32xf32>
    %280 = arith.mulf %278, %279 : vector<8x32xf32>
    %281 = vector.broadcast %260 : vector<1x32xf32> to vector<8x32xf32>
    %282 = arith.addf %280, %281 : vector<8x32xf32>
    %cst_162 = arith.constant dense<0.000000e+00> : vector<8x32xf32>
    %283 = tpu.matmul %9, %282, %cst_162 {dimension_numbers = #tpu.dot_dimension_numbers<[1], [0], [0], [1], [0, 0, 1, 1], [], []>} : vector<8x8xf32>, vector<8x32xf32>, vector<8x32xf32> -> vector<8x32xf32>
    %284 = arith.select %12, %283, %282 : vector<8x32xi1>, vector<8x32xf32>
    %c1_163 = arith.constant 1 : index
    %c0_164 = arith.constant 0 : index
    %c0_165 = arith.constant 0 : index
    %285 = vector.load %arg17[%c1_163, %c0_164, %c0_165] : memref<2x32x80xf32, #tpu.memory_space<vmem>>, vector<1x32x80xf32>
    %286 = vector.shape_cast %285 : vector<1x32x80xf32> to vector<32x80xf32>
    %cst_166 = arith.constant dense<0.000000e+00> : vector<8x80xf32>
    %287 = tpu.matmul %284, %286, %cst_166 {dimension_numbers = #tpu.dot_dimension_numbers<[1], [0], [0], [1], [0, 0, 1, 1], [], []>} : vector<8x32xf32>, vector<32x80xf32>, vector<8x80xf32> -> vector<8x80xf32>
    %c1_167 = arith.constant 1 : index
    %c0_168 = arith.constant 0 : index
    %c0_169 = arith.constant 0 : index
    %288 = vector.load %arg18[%c1_167, %c0_168, %c0_169] : memref<2x1x80xf32, #tpu.memory_space<vmem>>, vector<1x1x80xf32>
    %289 = vector.shape_cast %288 : vector<1x1x80xf32> to vector<1x80xf32>
    %290 = vector.broadcast %289 : vector<1x80xf32> to vector<8x80xf32>
    %291 = arith.addf %287, %290 : vector<8x80xf32>
    %c1_170 = arith.constant 1 : index
    %c0_171 = arith.constant 0 : index
    %c0_172 = arith.constant 0 : index
    %292 = vector.load %arg19[%c1_170, %c0_171, %c0_172] : memref<2x32x80xf32, #tpu.memory_space<vmem>>, vector<1x32x80xf32>
    %293 = vector.shape_cast %292 : vector<1x32x80xf32> to vector<32x80xf32>
    %cst_173 = arith.constant dense<0.000000e+00> : vector<8x80xf32>
    %294 = tpu.matmul %284, %293, %cst_173 {dimension_numbers = #tpu.dot_dimension_numbers<[1], [0], [0], [1], [0, 0, 1, 1], [], []>} : vector<8x32xf32>, vector<32x80xf32>, vector<8x80xf32> -> vector<8x80xf32>
    %c1_174 = arith.constant 1 : index
    %c0_175 = arith.constant 0 : index
    %c0_176 = arith.constant 0 : index
    %295 = vector.load %arg20[%c1_174, %c0_175, %c0_176] : memref<2x1x80xf32, #tpu.memory_space<vmem>>, vector<1x1x80xf32>
    %296 = vector.shape_cast %295 : vector<1x1x80xf32> to vector<1x80xf32>
    %297 = vector.broadcast %296 : vector<1x80xf32> to vector<8x80xf32>
    %298 = arith.addf %294, %297 : vector<8x80xf32>
    %c1_177 = arith.constant 1 : index
    %c0_178 = arith.constant 0 : index
    %c0_179 = arith.constant 0 : index
    %299 = vector.load %arg21[%c1_177, %c0_178, %c0_179] : memref<2x32x32xf32, #tpu.memory_space<vmem>>, vector<1x32x32xf32>
    %300 = vector.shape_cast %299 : vector<1x32x32xf32> to vector<32x32xf32>
    %cst_180 = arith.constant dense<0.000000e+00> : vector<8x32xf32>
    %301 = tpu.matmul %284, %300, %cst_180 {dimension_numbers = #tpu.dot_dimension_numbers<[1], [0], [0], [1], [0, 0, 1, 1], [], []>} : vector<8x32xf32>, vector<32x32xf32>, vector<8x32xf32> -> vector<8x32xf32>
    %c1_181 = arith.constant 1 : index
    %c0_182 = arith.constant 0 : index
    %c0_183 = arith.constant 0 : index
    %302 = vector.load %arg22[%c1_181, %c0_182, %c0_183] : memref<2x1x32xf32, #tpu.memory_space<vmem>>, vector<1x1x32xf32>
    %303 = vector.shape_cast %302 : vector<1x1x32xf32> to vector<1x32xf32>
    %304 = vector.broadcast %303 : vector<1x32xf32> to vector<8x32xf32>
    %305 = arith.addf %301, %304 : vector<8x32xf32>
    %cst_184 = arith.constant 0.000000e+00 : f32
    %306 = vector.broadcast %cst_184 : f32 to vector<8x80xf32>
    %307 = arith.maximumf %291, %306 : vector<8x80xf32>
    %308 = math.absf %291 : vector<8x80xf32>
    %cst_185 = arith.constant 0.000000e+00 : f32
    %309 = vector.broadcast %cst_185 : f32 to vector<8x80xf32>
    %310 = arith.subf %309, %308 : vector<8x80xf32>
    %311 = math.exp %310 : vector<8x80xf32>
    %cst_186 = arith.constant 1.000000e+00 : f32
    %312 = vector.broadcast %cst_186 : f32 to vector<8x80xf32>
    %313 = arith.addf %312, %311 : vector<8x80xf32>
    %314 = math.log %313 : vector<8x80xf32>
    %315 = arith.addf %307, %314 : vector<8x80xf32>
    %316 = math.tanh %315 : vector<8x80xf32>
    %317 = arith.mulf %291, %316 : vector<8x80xf32>
    %318 = arith.mulf %317, %298 : vector<8x80xf32>
    %c1_187 = arith.constant 1 : index
    %c0_188 = arith.constant 0 : index
    %c0_189 = arith.constant 0 : index
    %319 = vector.load %arg23[%c1_187, %c0_188, %c0_189] : memref<2x80x32xf32, #tpu.memory_space<vmem>>, vector<1x80x32xf32>
    %320 = vector.shape_cast %319 : vector<1x80x32xf32> to vector<80x32xf32>
    %cst_190 = arith.constant dense<0.000000e+00> : vector<8x32xf32>
    %321 = tpu.matmul %318, %320, %cst_190 {dimension_numbers = #tpu.dot_dimension_numbers<[1], [0], [0], [1], [0, 0, 1, 1], [], []>} : vector<8x80xf32>, vector<80x32xf32>, vector<8x32xf32> -> vector<8x32xf32>
    %c1_191 = arith.constant 1 : index
    %c0_192 = arith.constant 0 : index
    %c0_193 = arith.constant 0 : index
    %322 = vector.load %arg24[%c1_191, %c0_192, %c0_193] : memref<2x1x32xf32, #tpu.memory_space<vmem>>, vector<1x1x32xf32>
    %323 = vector.shape_cast %322 : vector<1x1x32xf32> to vector<1x32xf32>
    %324 = vector.broadcast %323 : vector<1x32xf32> to vector<8x32xf32>
    %325 = arith.addf %321, %324 : vector<8x32xf32>
    %326 = arith.negf %305 : vector<8x32xf32>
    %327 = math.exp %326 : vector<8x32xf32>
    %cst_194 = arith.constant 1.000000e+00 : f32
    %328 = vector.broadcast %cst_194 : f32 to vector<8x32xf32>
    %329 = arith.addf %328, %327 : vector<8x32xf32>
    %330 = arith.divf %328, %329 : vector<8x32xf32>
    %331 = arith.mulf %330, %325 : vector<8x32xf32>
    %332 = arith.addf %256, %331 : vector<8x32xf32>
    %c0_195 = arith.constant 0 : index
    %c0_196 = arith.constant 0 : index
    %333 = vector.load %arg25[%c0_195, %c0_196] : memref<1x32xf32, #tpu.memory_space<vmem>>, vector<1x32xf32>
    %c0_197 = arith.constant 0 : index
    %c0_198 = arith.constant 0 : index
    %334 = vector.load %arg26[%c0_197, %c0_198] : memref<1x32xf32, #tpu.memory_space<vmem>>, vector<1x32xf32>
    %cst_199 = arith.constant dense<0.000000e+00> : vector<8xf32>
    %335 = vector.multi_reduction <add>, %332, %cst_199 [1] : vector<8x32xf32> to vector<8xf32>
    %336 = vector.shape_cast %335 : vector<8xf32> to vector<8x1xf32>
    %cst_200 = arith.constant 3.200000e+01 : f32
    %337 = vector.broadcast %cst_200 : f32 to vector<8x1xf32>
    %338 = arith.divf %336, %337 : vector<8x1xf32>
    %339 = vector.broadcast %338 : vector<8x1xf32> to vector<8x32xf32>
    %340 = arith.subf %332, %339 : vector<8x32xf32>
    %341 = arith.mulf %340, %340 : vector<8x32xf32>
    %cst_201 = arith.constant dense<0.000000e+00> : vector<8xf32>
    %342 = vector.multi_reduction <add>, %341, %cst_201 [1] : vector<8x32xf32> to vector<8xf32>
    %343 = vector.shape_cast %342 : vector<8xf32> to vector<8x1xf32>
    %cst_202 = arith.constant 3.200000e+01 : f32
    %344 = vector.broadcast %cst_202 : f32 to vector<8x1xf32>
    %345 = arith.divf %343, %344 : vector<8x1xf32>
    %346 = vector.broadcast %338 : vector<8x1xf32> to vector<8x32xf32>
    %347 = arith.subf %332, %346 : vector<8x32xf32>
    %cst_203 = arith.constant 9.99999974E-6 : f32
    %348 = vector.broadcast %cst_203 : f32 to vector<8x1xf32>
    %349 = arith.addf %345, %348 : vector<8x1xf32>
    %350 = math.rsqrt %349 : vector<8x1xf32>
    %351 = vector.broadcast %350 : vector<8x1xf32> to vector<8x32xf32>
    %352 = arith.mulf %347, %351 : vector<8x32xf32>
    %353 = vector.broadcast %333 : vector<1x32xf32> to vector<8x32xf32>
    %354 = arith.mulf %352, %353 : vector<8x32xf32>
    %355 = vector.broadcast %334 : vector<1x32xf32> to vector<8x32xf32>
    %356 = arith.addf %354, %355 : vector<8x32xf32>
    %c0_204 = arith.constant 0 : index
    %c0_205 = arith.constant 0 : index
    %357 = vector.load %arg28[%c0_204, %c0_205] : memref<32x256xf32, #tpu.memory_space<vmem>>, vector<32x256xf32>
    %cst_206 = arith.constant dense<0.000000e+00> : vector<8x256xf32>
    %358 = tpu.matmul %356, %357, %cst_206 {dimension_numbers = #tpu.dot_dimension_numbers<[1], [0], [0], [1], [0, 0, 1, 1], [], []>} : vector<8x32xf32>, vector<32x256xf32>, vector<8x256xf32> -> vector<8x256xf32>
    %c0_207 = arith.constant 0 : index
    %c0_208 = arith.constant 0 : index
    %359 = vector.load %arg29[%c0_207, %c0_208] : memref<1x256xf32, #tpu.memory_space<vmem>>, vector<1x256xf32>
    %360 = vector.broadcast %359 : vector<1x256xf32> to vector<8x256xf32>
    %361 = arith.addf %358, %360 : vector<8x256xf32>
    %c0_209 = arith.constant 0 : index
    %c0_210 = arith.constant 0 : index
    %362 = vector.load %arg30[%c0_209, %c0_210] : memref<32x256xf32, #tpu.memory_space<vmem>>, vector<32x256xf32>
    %cst_211 = arith.constant dense<0.000000e+00> : vector<8x256xf32>
    %363 = tpu.matmul %356, %362, %cst_211 {dimension_numbers = #tpu.dot_dimension_numbers<[1], [0], [0], [1], [0, 0, 1, 1], [], []>} : vector<8x32xf32>, vector<32x256xf32>, vector<8x256xf32> -> vector<8x256xf32>
    %c0_212 = arith.constant 0 : index
    %c0_213 = arith.constant 0 : index
    %364 = vector.load %arg31[%c0_212, %c0_213] : memref<1x256xf32, #tpu.memory_space<vmem>>, vector<1x256xf32>
    %365 = vector.broadcast %364 : vector<1x256xf32> to vector<8x256xf32>
    %366 = arith.addf %363, %365 : vector<8x256xf32>
    %cst_214 = arith.constant dense<0.000000e+00> : vector<8x8xf32>
    %367 = tpu.matmul %361, %366, %cst_214 {dimension_numbers = #tpu.dot_dimension_numbers<[1], [1], [0], [0], [0, 0, 1, 0], [], []>} : vector<8x256xf32>, vector<8x256xf32>, vector<8x8xf32> -> vector<8x8xf32>
    %cst_215 = arith.constant 0.000000e+00 : f32
    %368 = vector.broadcast %cst_215 : f32 to vector<8x8xf32>
    %369 = arith.select %2, %367, %368 : vector<8x8xi1>, vector<8x8xf32>
    %cst_216 = arith.constant 3.906250e-03 : f32
    %370 = vector.broadcast %cst_216 : f32 to vector<8x8xf32>
    %371 = arith.mulf %369, %370 : vector<8x8xf32>
    %cst_217 = arith.constant dense<0.000000e+00> : vector<8x128xf32>
    %372 = tpu.matmul %371, %14, %cst_217 {dimension_numbers = #tpu.dot_dimension_numbers<[1], [0], [0], [1], [0, 0, 1, 1], [], []>} : vector<8x8xf32>, vector<8x128xf32>, vector<8x128xf32> -> vector<8x128xf32>
    %c0_218 = arith.constant 0 : index
    %c0_219 = arith.constant 0 : index
    %373 = vector.load %arg27[%c0_218, %c0_219] : memref<8x1xf32, #tpu.memory_space<vmem>>, vector<8x1xf32>
    %374 = vector.broadcast %373 : vector<8x1xf32> to vector<8x32xf32>
    %375 = arith.mulf %356, %374 : vector<8x32xf32>
    %c0_220 = arith.constant 0 : index
    %c0_221 = arith.constant 0 : index
    %376 = vector.load %arg32[%c0_220, %c0_221] : memref<32x128xf32, #tpu.memory_space<vmem>>, vector<32x128xf32>
    %cst_222 = arith.constant dense<0.000000e+00> : vector<8x128xf32>
    %377 = tpu.matmul %375, %376, %cst_222 {dimension_numbers = #tpu.dot_dimension_numbers<[1], [0], [0], [1], [0, 0, 1, 1], [], []>} : vector<8x32xf32>, vector<32x128xf32>, vector<8x128xf32> -> vector<8x128xf32>
    %378 = arith.addf %377, %372 : vector<8x128xf32>
    %c0_223 = arith.constant 0 : index
    %c0_224 = arith.constant 0 : index
    %c0_225 = arith.constant 0 : index
    %379 = vector.load %arg33[%c0_223, %c0_224, %c0_225] : memref<1x8x128xf32, #tpu.memory_space<vmem>>, vector<1x8x128xf32>
    %380 = vector.shape_cast %379 : vector<1x8x128xf32> to vector<8x128xf32>
    %381 = vector.shape_cast %378 : vector<8x128xf32> to vector<1x8x128xf32>
    tpu.vector_store %arg33[%c0_223, %c0_224, %c0_225], %381 {strides = array<i32>} : memref<1x8x128xf32, #tpu.memory_space<vmem>>, vector<1x8x128xf32>,
    return
  }
  func.func @transform_0(%arg0: i32) -> (i32, i32, i32) {
    %c0_i32 = arith.constant 0 : i32
    %c0_i32_0 = arith.constant 0 : i32
    %c0_i32_1 = arith.constant 0 : i32
    return %arg0, %c0_i32, %c0_i32_0 : i32, i32, i32
  }
  func.func @transform_1(%arg0: i32) -> (i32, i32) {
    %c0_i32 = arith.constant 0 : i32
    %c0_i32_0 = arith.constant 0 : i32
    %c0_i32_1 = arith.constant 0 : i32
    return %c0_i32, %c0_i32_0 : i32, i32
  }
  func.func @transform_2(%arg0: i32) -> (i32, i32, i32) {
    %c0_i32 = arith.constant 0 : i32
    %c0_i32_0 = arith.constant 0 : i32
    %c0_i32_1 = arith.constant 0 : i32
    %c0_i32_2 = arith.constant 0 : i32
    return %c0_i32, %c0_i32_0, %c0_i32_1 : i32, i32, i32
  }
  func.func @transform_3(%arg0: i32) -> (i32, i32, i32) {
    %c0_i32 = arith.constant 0 : i32
    %c0_i32_0 = arith.constant 0 : i32
    %c0_i32_1 = arith.constant 0 : i32
    %c0_i32_2 = arith.constant 0 : i32
    return %c0_i32, %c0_i32_0, %c0_i32_1 : i32, i32, i32
  }
  func.func @transform_4(%arg0: i32) -> (i32, i32, i32) {
    %c0_i32 = arith.constant 0 : i32
    %c0_i32_0 = arith.constant 0 : i32
    %c0_i32_1 = arith.constant 0 : i32
    %c0_i32_2 = arith.constant 0 : i32
    return %c0_i32, %c0_i32_0, %c0_i32_1 : i32, i32, i32
  }
  func.func @transform_5(%arg0: i32) -> (i32, i32, i32) {
    %c0_i32 = arith.constant 0 : i32
    %c0_i32_0 = arith.constant 0 : i32
    %c0_i32_1 = arith.constant 0 : i32
    %c0_i32_2 = arith.constant 0 : i32
    return %c0_i32, %c0_i32_0, %c0_i32_1 : i32, i32, i32
  }
  func.func @transform_6(%arg0: i32) -> (i32, i32, i32, i32) {
    %c0_i32 = arith.constant 0 : i32
    %c0_i32_0 = arith.constant 0 : i32
    %c0_i32_1 = arith.constant 0 : i32
    %c0_i32_2 = arith.constant 0 : i32
    %c0_i32_3 = arith.constant 0 : i32
    return %c0_i32, %c0_i32_0, %c0_i32_1, %c0_i32_2 : i32, i32, i32, i32
  }
  func.func @transform_7(%arg0: i32) -> (i32, i32, i32) {
    %c0_i32 = arith.constant 0 : i32
    %c0_i32_0 = arith.constant 0 : i32
    %c0_i32_1 = arith.constant 0 : i32
    %c0_i32_2 = arith.constant 0 : i32
    return %c0_i32, %c0_i32_0, %c0_i32_1 : i32, i32, i32
  }
  func.func @transform_8(%arg0: i32) -> (i32, i32, i32) {
    %c0_i32 = arith.constant 0 : i32
    %c0_i32_0 = arith.constant 0 : i32
    %c0_i32_1 = arith.constant 0 : i32
    %c0_i32_2 = arith.constant 0 : i32
    return %c0_i32, %c0_i32_0, %c0_i32_1 : i32, i32, i32
  }
  func.func @transform_9(%arg0: i32) -> (i32, i32, i32) {
    %c0_i32 = arith.constant 0 : i32
    %c0_i32_0 = arith.constant 0 : i32
    %c0_i32_1 = arith.constant 0 : i32
    %c0_i32_2 = arith.constant 0 : i32
    return %c0_i32, %c0_i32_0, %c0_i32_1 : i32, i32, i32
  }
  func.func @transform_10(%arg0: i32) -> (i32, i32, i32) {
    %c0_i32 = arith.constant 0 : i32
    %c0_i32_0 = arith.constant 0 : i32
    %c0_i32_1 = arith.constant 0 : i32
    %c0_i32_2 = arith.constant 0 : i32
    return %c0_i32, %c0_i32_0, %c0_i32_1 : i32, i32, i32
  }
  func.func @transform_11(%arg0: i32) -> (i32, i32, i32) {
    %c0_i32 = arith.constant 0 : i32
    %c0_i32_0 = arith.constant 0 : i32
    %c0_i32_1 = arith.constant 0 : i32
    %c0_i32_2 = arith.constant 0 : i32
    return %c0_i32, %c0_i32_0, %c0_i32_1 : i32, i32, i32
  }
  func.func @transform_12(%arg0: i32) -> (i32, i32, i32) {
    %c0_i32 = arith.constant 0 : i32
    %c0_i32_0 = arith.constant 0 : i32
    %c0_i32_1 = arith.constant 0 : i32
    %c0_i32_2 = arith.constant 0 : i32
    return %c0_i32, %c0_i32_0, %c0_i32_1 : i32, i32, i32
  }
  func.func @transform_13(%arg0: i32) -> (i32, i32, i32) {
    %c0_i32 = arith.constant 0 : i32
    %c0_i32_0 = arith.constant 0 : i32
    %c0_i32_1 = arith.constant 0 : i32
    %c0_i32_2 = arith.constant 0 : i32
    return %c0_i32, %c0_i32_0, %c0_i32_1 : i32, i32, i32
  }
  func.func @transform_14(%arg0: i32) -> (i32, i32, i32) {
    %c0_i32 = arith.constant 0 : i32
    %c0_i32_0 = arith.constant 0 : i32
    %c0_i32_1 = arith.constant 0 : i32
    %c0_i32_2 = arith.constant 0 : i32
    return %c0_i32, %c0_i32_0, %c0_i32_1 : i32, i32, i32
  }
  func.func @transform_15(%arg0: i32) -> (i32, i32, i32) {
    %c0_i32 = arith.constant 0 : i32
    %c0_i32_0 = arith.constant 0 : i32
    %c0_i32_1 = arith.constant 0 : i32
    %c0_i32_2 = arith.constant 0 : i32
    return %c0_i32, %c0_i32_0, %c0_i32_1 : i32, i32, i32
  }
  func.func @transform_16(%arg0: i32) -> (i32, i32, i32) {
    %c0_i32 = arith.constant 0 : i32
    %c0_i32_0 = arith.constant 0 : i32
    %c0_i32_1 = arith.constant 0 : i32
    %c0_i32_2 = arith.constant 0 : i32
    return %c0_i32, %c0_i32_0, %c0_i32_1 : i32, i32, i32
  }
  func.func @transform_17(%arg0: i32) -> (i32, i32, i32) {
    %c0_i32 = arith.constant 0 : i32
    %c0_i32_0 = arith.constant 0 : i32
    %c0_i32_1 = arith.constant 0 : i32
    %c0_i32_2 = arith.constant 0 : i32
    return %c0_i32, %c0_i32_0, %c0_i32_1 : i32, i32, i32
  }
  func.func @transform_18(%arg0: i32) -> (i32, i32, i32) {
    %c0_i32 = arith.constant 0 : i32
    %c0_i32_0 = arith.constant 0 : i32
    %c0_i32_1 = arith.constant 0 : i32
    %c0_i32_2 = arith.constant 0 : i32
    return %c0_i32, %c0_i32_0, %c0_i32_1 : i32, i32, i32
  }
  func.func @transform_19(%arg0: i32) -> (i32, i32, i32) {
    %c0_i32 = arith.constant 0 : i32
    %c0_i32_0 = arith.constant 0 : i32
    %c0_i32_1 = arith.constant 0 : i32
    %c0_i32_2 = arith.constant 0 : i32
    return %c0_i32, %c0_i32_0, %c0_i32_1 : i32, i32, i32
  }
  func.func @transform_20(%arg0: i32) -> (i32, i32, i32) {
    %c0_i32 = arith.constant 0 : i32
    %c0_i32_0 = arith.constant 0 : i32
    %c0_i32_1 = arith.constant 0 : i32
    %c0_i32_2 = arith.constant 0 : i32
    return %c0_i32, %c0_i32_0, %c0_i32_1 : i32, i32, i32
  }
  func.func @transform_21(%arg0: i32) -> (i32, i32, i32) {
    %c0_i32 = arith.constant 0 : i32
    %c0_i32_0 = arith.constant 0 : i32
    %c0_i32_1 = arith.constant 0 : i32
    %c0_i32_2 = arith.constant 0 : i32
    return %c0_i32, %c0_i32_0, %c0_i32_1 : i32, i32, i32
  }
  func.func @transform_22(%arg0: i32) -> (i32, i32, i32) {
    %c0_i32 = arith.constant 0 : i32
    %c0_i32_0 = arith.constant 0 : i32
    %c0_i32_1 = arith.constant 0 : i32
    %c0_i32_2 = arith.constant 0 : i32
    return %c0_i32, %c0_i32_0, %c0_i32_1 : i32, i32, i32
  }
  func.func @transform_23(%arg0: i32) -> (i32, i32, i32) {
    %c0_i32 = arith.constant 0 : i32
    %c0_i32_0 = arith.constant 0 : i32
    %c0_i32_1 = arith.constant 0 : i32
    %c0_i32_2 = arith.constant 0 : i32
    return %c0_i32, %c0_i32_0, %c0_i32_1 : i32, i32, i32
  }
  func.func @transform_24(%arg0: i32) -> (i32, i32) {
    %c0_i32 = arith.constant 0 : i32
    %c0_i32_0 = arith.constant 0 : i32
    %c0_i32_1 = arith.constant 0 : i32
    return %c0_i32, %c0_i32_0 : i32, i32
  }
  func.func @transform_25(%arg0: i32) -> (i32, i32) {
    %c0_i32 = arith.constant 0 : i32
    %c0_i32_0 = arith.constant 0 : i32
    %c0_i32_1 = arith.constant 0 : i32
    return %c0_i32, %c0_i32_0 : i32, i32
  }
  func.func @transform_26(%arg0: i32) -> (i32, i32) {
    %c0_i32 = arith.constant 0 : i32
    %c0_i32_0 = arith.constant 0 : i32
    %c0_i32_1 = arith.constant 0 : i32
    return %c0_i32, %c0_i32_0 : i32, i32
  }
  func.func @transform_27(%arg0: i32) -> (i32, i32) {
    %c0_i32 = arith.constant 0 : i32
    %c0_i32_0 = arith.constant 0 : i32
    %c0_i32_1 = arith.constant 0 : i32
    return %c0_i32, %c0_i32_0 : i32, i32
  }
  func.func @transform_28(%arg0: i32) -> (i32, i32) {
    %c0_i32 = arith.constant 0 : i32
    %c0_i32_0 = arith.constant 0 : i32
    %c0_i32_1 = arith.constant 0 : i32
    return %c0_i32, %c0_i32_0 : i32, i32
  }
  func.func @transform_29(%arg0: i32) -> (i32, i32) {
    %c0_i32 = arith.constant 0 : i32
    %c0_i32_0 = arith.constant 0 : i32
    %c0_i32_1 = arith.constant 0 : i32
    return %c0_i32, %c0_i32_0 : i32, i32
  }
  func.func @transform_30(%arg0: i32) -> (i32, i32) {
    %c0_i32 = arith.constant 0 : i32
    %c0_i32_0 = arith.constant 0 : i32
    %c0_i32_1 = arith.constant 0 : i32
    return %c0_i32, %c0_i32_0 : i32, i32
  }
  func.func @transform_31(%arg0: i32) -> (i32, i32) {
    %c0_i32 = arith.constant 0 : i32
    %c0_i32_0 = arith.constant 0 : i32
    %c0_i32_1 = arith.constant 0 : i32
    return %c0_i32, %c0_i32_0 : i32, i32
  }
  func.func @transform_32(%arg0: i32) -> (i32, i32, i32) {
    %c0_i32 = arith.constant 0 : i32
    %c0_i32_0 = arith.constant 0 : i32
    %c0_i32_1 = arith.constant 0 : i32
    return %arg0, %c0_i32, %c0_i32_0 : i32, i32, i32
  }
}

</mosaic_0001>

<llo_original>
// kernel: fwd.1
$region0: #{fwd.1}
  #allocation0 [shape = 'u32[]', space=smem, size = 0x4, offset = 0x4, fixed_abs, tag = 'smem constant byte address 0x4 - core index']
  #allocation1 [shape = 'u32[144,128]{1,0:T(1,128)}', space=vmem, size = 0x12000, scoped, tag = 'internal scratch']
  %s0 = inlined_call_operand.smem [shape: u32[33], index: -1, kind: input, shape index: {}]
  %s1 = sld [smem:[%s0]]
  %s2 = scalar_lea.smem %s0, 1
  %s3 = sld [smem:[%s2]]
  %s4 = scalar_lea.smem %s0, 2
  %s5 = sld [smem:[%s4]]
  %s6 = scalar_lea.smem %s0, 3
  %s7 = sld [smem:[%s6]]
  %s8 = scalar_lea.smem %s0, 4
  %s9 = sld [smem:[%s8]]
  %s10 = scalar_lea.smem %s0, 5
  %s11 = sld [smem:[%s10]]
  %s12 = scalar_lea.smem %s0, 6
  %s13 = sld [smem:[%s12]]
  %s14 = scalar_lea.smem %s0, 7
  %s15 = sld [smem:[%s14]]
  %s16 = scalar_lea.smem %s0, 8
  %s17 = sld [smem:[%s16]]
  %s18 = scalar_lea.smem %s0, 9
  %s19 = sld [smem:[%s18]]
  %s20 = scalar_lea.smem %s0, 10
  %s21 = sld [smem:[%s20]]
  %s22 = scalar_lea.smem %s0, 11
  %s23 = sld [smem:[%s22]]
  %s24 = scalar_lea.smem %s0, 12
  %s25 = sld [smem:[%s24]]
  %s26 = scalar_lea.smem %s0, 13
  %s27 = sld [smem:[%s26]]
  %s28 = scalar_lea.smem %s0, 14
  %s29 = sld [smem:[%s28]]
  %s30 = scalar_lea.smem %s0, 15
  %s31 = sld [smem:[%s30]]
  %s32 = scalar_lea.smem %s0, 16
  %s33 = sld [smem:[%s32]]
  %s34 = scalar_lea.smem %s0, 17
  %s35 = sld [smem:[%s34]]
  %s36 = scalar_lea.smem %s0, 18
  %s37 = sld [smem:[%s36]]
  %s38 = scalar_lea.smem %s0, 19
  %s39 = sld [smem:[%s38]]
  %s40 = scalar_lea.smem %s0, 20
  %s41 = sld [smem:[%s40]]
  %s42 = scalar_lea.smem %s0, 21
  %s43 = sld [smem:[%s42]]
  %s44 = scalar_lea.smem %s0, 22
  %s45 = sld [smem:[%s44]]
  %s46 = scalar_lea.smem %s0, 23
  %s47 = sld [smem:[%s46]]
  %s48 = scalar_lea.smem %s0, 24
  %s49 = sld [smem:[%s48]]
  %s50 = scalar_lea.smem %s0, 25
  %s51 = sld [smem:[%s50]]
  %s52 = scalar_lea.smem %s0, 26
  %s53 = sld [smem:[%s52]]
  %s54 = scalar_lea.smem %s0, 27
  %s55 = sld [smem:[%s54]]
  %s56 = scalar_lea.smem %s0, 28
  %s57 = sld [smem:[%s56]]
  %s58 = scalar_lea.smem %s0, 29
  %s59 = sld [smem:[%s58]]
  %s60 = scalar_lea.smem %s0, 30
  %s61 = sld [smem:[%s60]]
  %s62 = scalar_lea.smem %s0, 31
  %s63 = sld [smem:[%s62]]
  %s64 = scalar_lea.smem %s0, 32
  %s65 = sld [smem:[%s64]]
  %s66 = sld [smem:[#allocation0]]
  $region205: #{fwd.1} parent=0
    _
  %s68 = ssub.s32 1, %s66
  %s69 = scalar_select 0, %s68, %s66
  $region1: #{fwd.1} parent=0
    #allocation2 [shape = 'u8[32768]{0}', space=vmem, size = 0x8000, scoped, tag = 'input window, operand 16, single buffered']
    #allocation3 [shape = 's32[2]{0}', space=sflag, size = 0x8, scoped, tag = 'scoped memory for fwd.1']
    #allocation4 [shape = 's32[2]{0}', space=sflag, size = 0x8, scoped, tag = 'scoped memory for fwd.1']
    #allocation5 [shape = 'u8[1024]{0}', space=vmem, size = 0x400, scoped, tag = 'input window, operand 17, single buffered']
    #allocation6 [shape = 's32[1]{0}', space=sflag, size = 0x4, scoped, tag = 'scoped memory for fwd.1']
    #allocation7 [shape = 'u8[32768]{0}', space=vmem, size = 0x8000, scoped, tag = 'input window, operand 18, single buffered']
    #allocation8 [shape = 'u8[1024]{0}', space=vmem, size = 0x400, scoped, tag = 'input window, operand 19, single buffered']
    #allocation9 [shape = 's32[1]{0}', space=sflag, size = 0x4, scoped, tag = 'scoped memory for fwd.1']
    #allocation10 [shape = 'u8[32768]{0}', space=vmem, size = 0x8000, scoped, tag = 'input window, operand 20, single buffered']
    #allocation11 [shape = 'u8[1024]{0}', space=vmem, size = 0x400, scoped, tag = 'input window, operand 21, single buffered']
    #allocation12 [shape = 's32[1]{0}', space=sflag, size = 0x4, scoped, tag = 'scoped memory for fwd.1']
    #allocation13 [shape = 'u8[1024]{0}', space=vmem, size = 0x400, scoped, tag = 'input window, operand 23, single buffered']
    #allocation14 [shape = 'u8[32768]{0}', space=vmem, size = 0x8000, scoped, tag = 'input window, operand 27, single buffered']
    #allocation15 [shape = 's32[1]{0}', space=sflag, size = 0x4, scoped, tag = 'scoped memory for fwd.1']
    #allocation16 [shape = 'u8[32768]{0}', space=vmem, size = 0x8000, scoped, tag = 'input window, operand 29, single buffered']
    #allocation17 [shape = 'u8[1024]{0}', space=vmem, size = 0x400, scoped, tag = 'input window, operand 30, single buffered']
    #allocation18 [shape = 's32[1]{0}', space=sflag, size = 0x4, scoped, tag = 'scoped memory for fwd.1']
    #allocation19 [shape = 'u8[16384]{0}', space=vmem, size = 0x4000, scoped, tag = 'input window, operand 31, single buffered']
    #allocation20 [shape = 'u8[8192]{0}', space=vmem, size = 0x2000, scoped, tag = 'output window, operand 0']
    %70 = vsyncpa [#allocation3], 0
    %71 = vsyncpa [#allocation6], 0
    %72 = vsyncpa [#allocation9], 0
    %73 = vsyncpa [#allocation12], 0
    %74 = vsyncpa [#allocation15], 0
    %75 = vsyncpa [#allocation18], 0
    %76 = vsyncpa [#allocation4], 0
    %s77 = scalar_lea.sflag [#allocation4], 1
    %78 = vsyncpa %s77, 0
    loop: start=0, step=1, limit=4
    $region2: #{fwd.1} parent=1 // loop_pre_header
      _
    $region3: #{fwd.1} parent=1 // loop_header
      %s80 = sphi 0, %s84
      %p81 = scmp.ge.s32.totalorder %s80, 4
      %s90 = sphi 0, %s92
      %s93 = sphi 0, %s90
      %s94 = sphi 0, %s93
      %s110 = sphi 0, %s94
      %s114 = sphi 0, %s114
      %s116 = sphi 0, %s114
      %s117 = sphi 0, %s116
      %s131 = sphi 0, %s117
      %s135 = sphi 0, %s135
      %s137 = sphi 0, %s135
      %s138 = sphi 0, %s137
      %s152 = sphi 0, %s138
      %s156 = sphi 0, %s156
      %s158 = sphi 0, %s156
      %s159 = sphi 0, %s158
      %s173 = sphi 0, %s159
      %s177 = sphi 0, %s177
      %s179 = sphi 0, %s177
      %s180 = sphi 0, %s179
      %s194 = sphi 0, %s180
      %s198 = sphi 0, %s198
      %s200 = sphi 0, %s198
      %s201 = sphi 0, %s200
      %s215 = sphi 0, %s201
      %s219 = sphi 0, %s219
      %s221 = sphi 0, %s219
      %s222 = sphi 0, %s221
      %s236 = sphi 0, %s222
      %s240 = sphi 0, %s240
      %s242 = sphi 0, %s240
      %s243 = sphi 0, %s242
      %s257 = sphi 0, %s243
      %s261 = sphi 0, %s261
      %s263 = sphi 0, %s261
      %s264 = sphi 0, %s263
      %s278 = sphi 0, %s264
      %s282 = sphi 0, %s282
      %s284 = sphi 0, %s282
      %s285 = sphi 0, %s284
      %s299 = sphi 0, %s285
      %s303 = sphi 0, %s303
      %s305 = sphi 0, %s303
      %s306 = sphi 0, %s305
      %s320 = sphi 0, %s306
      %s324 = sphi 0, %s324
      %s326 = sphi 0, %s324
      %s327 = sphi 0, %s326
      %s341 = sphi 0, %s327
      %s345 = sphi 0, %s345
      %s347 = sphi 0, %s345
      %s348 = sphi 0, %s347
      %s362 = sphi 0, %s348
      %s366 = sphi 0, %s366
      %s368 = sphi 0, %s366
      %s369 = sphi 0, %s368
      %s383 = sphi 0, %s369
      %s387 = sphi 0, %s387
      %s389 = sphi 0, %s387
      %s390 = sphi 0, %s389
      %s404 = sphi 0, %s390
      %s408 = sphi 0, %s408
      %s410 = sphi 0, %s408
      %s411 = sphi 0, %s410
      %s425 = sphi 0, %s411
      %s429 = sphi 0, %s429
      %s431 = sphi 0, %s429
      %s432 = sphi 0, %s431
      %s446 = sphi 0, %s432
      %s450 = sphi 0, %s450
      %s452 = sphi 0, %s450
      %s453 = sphi 0, %s452
      %s467 = sphi 0, %s453
      %s471 = sphi 0, %s471
      %s473 = sphi 0, %s471
      %s474 = sphi 0, %s473
      %s488 = sphi 0, %s474
      %s492 = sphi 0, %s492
      %s494 = sphi 0, %s492
      %s495 = sphi 0, %s494
      %s509 = sphi 0, %s495
      %s513 = sphi 0, %s513
      %s515 = sphi 0, %s513
      %s516 = sphi 0, %s515
      %s530 = sphi 0, %s516
      %s534 = sphi 0, %s534
      %s536 = sphi 0, %s534
      %s537 = sphi 0, %s536
      %s551 = sphi 0, %s537
      %s555 = sphi 0, %s555
      %s557 = sphi 0, %s555
      %s558 = sphi 0, %s557
      %s572 = sphi 0, %s558
      %s576 = sphi 0, %s576
      %s578 = sphi 0, %s576
      %s579 = sphi 0, %s578
      %s593 = sphi 0, %s579
      %s597 = sphi 0, %s597
      %s599 = sphi 0, %s597
      %s600 = sphi 0, %s599
      %s614 = sphi 0, %s600
      %s618 = sphi 0, %s618
      %s620 = sphi 0, %s618
      %s621 = sphi 0, %s620
      %s635 = sphi 0, %s621
      %s639 = sphi 0, %s639
      %s641 = sphi 0, %s639
      %s642 = sphi 0, %s641
      %s656 = sphi 0, %s642
      %s660 = sphi 0, %s660
      %s662 = sphi 0, %s660
      %s663 = sphi 0, %s662
      %s677 = sphi 0, %s663
      %s681 = sphi 0, %s681
      %s683 = sphi 0, %s681
      %s684 = sphi 0, %s683
      %s698 = sphi 0, %s684
      %s702 = sphi 0, %s702
      %s704 = sphi 0, %s702
      %s705 = sphi 0, %s704
      %s719 = sphi 0, %s705
      %s723 = sphi 0, %s723
      %s725 = sphi 0, %s723
      %s726 = sphi 0, %s725
      %s740 = sphi 0, %s726
      %s744 = sphi 0, %s744
      %s746 = sphi 0, %s744
      %s747 = sphi 0, %s746
      %s761 = sphi 0, %s747
      %s767 = sphi 0, %s769
      %s770 = sphi 0, %s767
      %s771 = sphi 0, %s770
      %s787 = sphi 0, %s771
    $region4: #{fwd.1} parent=1 // loop_header_branch
      %83 = sbr.rel (%p81) target = $region8
    $region5: #{fwd.1} parent=1 // loop_body
      %s85 = ssub.s32 %s80, 1
      %s86 = ssub.s32 %s80, 2
      %s87 = sadd.s32 %s80, 1
      %s88 = ssub.s32 %s80, %s87
      %p89 = scmp.eq.s32.totalorder %s88, 0
      %s91 = sadd.s32 %s90, 1
      %s92 = scalar_select %p89, %s90, %s91
      %p95 = pneg %p89
      %p96 = scmp.eq.s32.totalorder %s80, 1
      %p97 = por %p95, %p96
      %p98 = scmp.ne.s32.totalorder %s90, %s93
      %p99 = scmp.eq.s32.totalorder %s80, 0
      %p100 = por %p98, %p99
      %p101 = scmp.ne.s32.totalorder %s90, %s93
      %p102 = scmp.eq.s32.totalorder %s85, 1
      %p103 = por %p101, %p102
      %p104 = scmp.ne.s32.totalorder %s93, %s94
      %p105 = scmp.eq.s32.totalorder %s85, 0
      %p106 = por %p104, %p105
      %p107 = scmp.ne.s32.totalorder %s93, %s94
      %p108 = scmp.eq.s32.totalorder %s86, 1
      %p109 = por %p107, %p108
      %p111 = scmp.ne.s32.totalorder %s94, %s110
      %p112 = scmp.eq.s32.totalorder %s86, 0
      %p113 = por %p111, %p112
      %s115 = sadd.s32 %s114, 1
      %p118 = scmp.eq.s32.totalorder %s80, 1
      %p119 = scmp.ne.s32.totalorder %s114, %s116
      %p120 = scmp.eq.s32.totalorder %s80, 0
      %p121 = por %p119, %p120
      %p122 = scmp.ne.s32.totalorder %s114, %s116
      %p123 = scmp.eq.s32.totalorder %s85, 1
      %p124 = por %p122, %p123
      %p125 = scmp.ne.s32.totalorder %s116, %s117
      %p126 = scmp.eq.s32.totalorder %s85, 0
      %p127 = por %p125, %p126
      %p128 = scmp.ne.s32.totalorder %s116, %s117
      %p129 = scmp.eq.s32.totalorder %s86, 1
      %p130 = por %p128, %p129
      %p132 = scmp.ne.s32.totalorder %s117, %s131
      %p133 = scmp.eq.s32.totalorder %s86, 0
      %p134 = por %p132, %p133
      %s136 = sadd.s32 %s135, 1
      %p139 = scmp.eq.s32.totalorder %s80, 1
      %p140 = scmp.ne.s32.totalorder %s135, %s137
      %p141 = scmp.eq.s32.totalorder %s80, 0
      %p142 = por %p140, %p141
      %p143 = scmp.ne.s32.totalorder %s135, %s137
      %p144 = scmp.eq.s32.totalorder %s85, 1
      %p145 = por %p143, %p144
      %p146 = scmp.ne.s32.totalorder %s137, %s138
      %p147 = scmp.eq.s32.totalorder %s85, 0
      %p148 = por %p146, %p147
      %p149 = scmp.ne.s32.totalorder %s137, %s138
      %p150 = scmp.eq.s32.totalorder %s86, 1
      %p151 = por %p149, %p150
      %p153 = scmp.ne.s32.totalorder %s138, %s152
      %p154 = scmp.eq.s32.totalorder %s86, 0
      %p155 = por %p153, %p154
      %s157 = sadd.s32 %s156, 1
      %p160 = scmp.eq.s32.totalorder %s80, 1
      %p161 = scmp.ne.s32.totalorder %s156, %s158
      %p162 = scmp.eq.s32.totalorder %s80, 0
      %p163 = por %p161, %p162
      %p164 = scmp.ne.s32.totalorder %s156, %s158
      %p165 = scmp.eq.s32.totalorder %s85, 1
      %p166 = por %p164, %p165
      %p167 = scmp.ne.s32.totalorder %s158, %s159
      %p168 = scmp.eq.s32.totalorder %s85, 0
      %p169 = por %p167, %p168
      %p170 = scmp.ne.s32.totalorder %s158, %s159
      %p171 = scmp.eq.s32.totalorder %s86, 1
      %p172 = por %p170, %p171
      %p174 = scmp.ne.s32.totalorder %s159, %s173
      %p175 = scmp.eq.s32.totalorder %s86, 0
      %p176 = por %p174, %p175
      %s178 = sadd.s32 %s177, 1
      %p181 = scmp.eq.s32.totalorder %s80, 1
      %p182 = scmp.ne.s32.totalorder %s177, %s179
      %p183 = scmp.eq.s32.totalorder %s80, 0
      %p184 = por %p182, %p183
      %p185 = scmp.ne.s32.totalorder %s177, %s179
      %p186 = scmp.eq.s32.totalorder %s85, 1
      %p187 = por %p185, %p186
      %p188 = scmp.ne.s32.totalorder %s179, %s180
      %p189 = scmp.eq.s32.totalorder %s85, 0
      %p190 = por %p188, %p189
      %p191 = scmp.ne.s32.totalorder %s179, %s180
      %p192 = scmp.eq.s32.totalorder %s86, 1
      %p193 = por %p191, %p192
      %p195 = scmp.ne.s32.totalorder %s180, %s194
      %p196 = scmp.eq.s32.totalorder %s86, 0
      %p197 = por %p195, %p196
      %s199 = sadd.s32 %s198, 1
      %p202 = scmp.eq.s32.totalorder %s80, 1
      %p203 = scmp.ne.s32.totalorder %s198, %s200
      %p204 = scmp.eq.s32.totalorder %s80, 0
      %p205 = por %p203, %p204
      %p206 = scmp.ne.s32.totalorder %s198, %s200
      %p207 = scmp.eq.s32.totalorder %s85, 1
      %p208 = por %p206, %p207
      %p209 = scmp.ne.s32.totalorder %s200, %s201
      %p210 = scmp.eq.s32.totalorder %s85, 0
      %p211 = por %p209, %p210
      %p212 = scmp.ne.s32.totalorder %s200, %s201
      %p213 = scmp.eq.s32.totalorder %s86, 1
      %p214 = por %p212, %p213
      %p216 = scmp.ne.s32.totalorder %s201, %s215
      %p217 = scmp.eq.s32.totalorder %s86, 0
      %p218 = por %p216, %p217
      %s220 = sadd.s32 %s219, 1
      %p223 = scmp.eq.s32.totalorder %s80, 1
      %p224 = scmp.ne.s32.totalorder %s219, %s221
      %p225 = scmp.eq.s32.totalorder %s80, 0
      %p226 = por %p224, %p225
      %p227 = scmp.ne.s32.totalorder %s219, %s221
      %p228 = scmp.eq.s32.totalorder %s85, 1
      %p229 = por %p227, %p228
      %p230 = scmp.ne.s32.totalorder %s221, %s222
      %p231 = scmp.eq.s32.totalorder %s85, 0
      %p232 = por %p230, %p231
      %p233 = scmp.ne.s32.totalorder %s221, %s222
      %p234 = scmp.eq.s32.totalorder %s86, 1
      %p235 = por %p233, %p234
      %p237 = scmp.ne.s32.totalorder %s222, %s236
      %p238 = scmp.eq.s32.totalorder %s86, 0
      %p239 = por %p237, %p238
      %s241 = sadd.s32 %s240, 1
      %p244 = scmp.eq.s32.totalorder %s80, 1
      %p245 = scmp.ne.s32.totalorder %s240, %s242
      %p246 = scmp.eq.s32.totalorder %s80, 0
      %p247 = por %p245, %p246
      %p248 = scmp.ne.s32.totalorder %s240, %s242
      %p249 = scmp.eq.s32.totalorder %s85, 1
      %p250 = por %p248, %p249
      %p251 = scmp.ne.s32.totalorder %s242, %s243
      %p252 = scmp.eq.s32.totalorder %s85, 0
      %p253 = por %p251, %p252
      %p254 = scmp.ne.s32.totalorder %s242, %s243
      %p255 = scmp.eq.s32.totalorder %s86, 1
      %p256 = por %p254, %p255
      %p258 = scmp.ne.s32.totalorder %s243, %s257
      %p259 = scmp.eq.s32.totalorder %s86, 0
      %p260 = por %p258, %p259
      %s262 = sadd.s32 %s261, 1
      %p265 = scmp.eq.s32.totalorder %s80, 1
      %p266 = scmp.ne.s32.totalorder %s261, %s263
      %p267 = scmp.eq.s32.totalorder %s80, 0
      %p268 = por %p266, %p267
      %p269 = scmp.ne.s32.totalorder %s261, %s263
      %p270 = scmp.eq.s32.totalorder %s85, 1
      %p271 = por %p269, %p270
      %p272 = scmp.ne.s32.totalorder %s263, %s264
      %p273 = scmp.eq.s32.totalorder %s85, 0
      %p274 = por %p272, %p273
      %p275 = scmp.ne.s32.totalorder %s263, %s264
      %p276 = scmp.eq.s32.totalorder %s86, 1
      %p277 = por %p275, %p276
      %p279 = scmp.ne.s32.totalorder %s264, %s278
      %p280 = scmp.eq.s32.totalorder %s86, 0
      %p281 = por %p279, %p280
      %s283 = sadd.s32 %s282, 1
      %p286 = scmp.eq.s32.totalorder %s80, 1
      %p287 = scmp.ne.s32.totalorder %s282, %s284
      %p288 = scmp.eq.s32.totalorder %s80, 0
      %p289 = por %p287, %p288
      %p290 = scmp.ne.s32.totalorder %s282, %s284
      %p291 = scmp.eq.s32.totalorder %s85, 1
      %p292 = por %p290, %p291
      %p293 = scmp.ne.s32.totalorder %s284, %s285
      %p294 = scmp.eq.s32.totalorder %s85, 0
      %p295 = por %p293, %p294
      %p296 = scmp.ne.s32.totalorder %s284, %s285
      %p297 = scmp.eq.s32.totalorder %s86, 1
      %p298 = por %p296, %p297
      %p300 = scmp.ne.s32.totalorder %s285, %s299
      %p301 = scmp.eq.s32.totalorder %s86, 0
      %p302 = por %p300, %p301
      %s304 = sadd.s32 %s303, 1
      %p307 = scmp.eq.s32.totalorder %s80, 1
      %p308 = scmp.ne.s32.totalorder %s303, %s305
      %p309 = scmp.eq.s32.totalorder %s80, 0
      %p310 = por %p308, %p309
      %p311 = scmp.ne.s32.totalorder %s303, %s305
      %p312 = scmp.eq.s32.totalorder %s85, 1
      %p313 = por %p311, %p312
      %p314 = scmp.ne.s32.totalorder %s305, %s306
      %p315 = scmp.eq.s32.totalorder %s85, 0
      %p316 = por %p314, %p315
      %p317 = scmp.ne.s32.totalorder %s305, %s306
      %p318 = scmp.eq.s32.totalorder %s86, 1
      %p319 = por %p317, %p318
      %p321 = scmp.ne.s32.totalorder %s306, %s320
      %p322 = scmp.eq.s32.totalorder %s86, 0
      %p323 = por %p321, %p322
      %s325 = sadd.s32 %s324, 1
      %p328 = scmp.eq.s32.totalorder %s80, 1
      %p329 = scmp.ne.s32.totalorder %s324, %s326
      %p330 = scmp.eq.s32.totalorder %s80, 0
      %p331 = por %p329, %p330
      %p332 = scmp.ne.s32.totalorder %s324, %s326
      %p333 = scmp.eq.s32.totalorder %s85, 1
      %p334 = por %p332, %p333
      %p335 = scmp.ne.s32.totalorder %s326, %s327
      %p336 = scmp.eq.s32.totalorder %s85, 0
      %p337 = por %p335, %p336
      %p338 = scmp.ne.s32.totalorder %s326, %s327
      %p339 = scmp.eq.s32.totalorder %s86, 1
      %p340 = por %p338, %p339
      %p342 = scmp.ne.s32.totalorder %s327, %s341
      %p343 = scmp.eq.s32.totalorder %s86, 0
      %p344 = por %p342, %p343
      %s346 = sadd.s32 %s345, 1
      %p349 = scmp.eq.s32.totalorder %s80, 1
      %p350 = scmp.ne.s32.totalorder %s345, %s347
      %p351 = scmp.eq.s32.totalorder %s80, 0
      %p352 = por %p350, %p351
      %p353 = scmp.ne.s32.totalorder %s345, %s347
      %p354 = scmp.eq.s32.totalorder %s85, 1
      %p355 = por %p353, %p354
      %p356 = scmp.ne.s32.totalorder %s347, %s348
      %p357 = scmp.eq.s32.totalorder %s85, 0
      %p358 = por %p356, %p357
      %p359 = scmp.ne.s32.totalorder %s347, %s348
      %p360 = scmp.eq.s32.totalorder %s86, 1
      %p361 = por %p359, %p360
      %p363 = scmp.ne.s32.totalorder %s348, %s362
      %p364 = scmp.eq.s32.totalorder %s86, 0
      %p365 = por %p363, %p364
      %s367 = sadd.s32 %s366, 1
      %p370 = scmp.eq.s32.totalorder %s80, 1
      %p371 = scmp.ne.s32.totalorder %s366, %s368
      %p372 = scmp.eq.s32.totalorder %s80, 0
      %p373 = por %p371, %p372
      %p374 = scmp.ne.s32.totalorder %s366, %s368
      %p375 = scmp.eq.s32.totalorder %s85, 1
      %p376 = por %p374, %p375
      %p377 = scmp.ne.s32.totalorder %s368, %s369
      %p378 = scmp.eq.s32.totalorder %s85, 0
      %p379 = por %p377, %p378
      %p380 = scmp.ne.s32.totalorder %s368, %s369
      %p381 = scmp.eq.s32.totalorder %s86, 1
      %p382 = por %p380, %p381
      %p384 = scmp.ne.s32.totalorder %s369, %s383
      %p385 = scmp.eq.s32.totalorder %s86, 0
      %p386 = por %p384, %p385
      %s388 = sadd.s32 %s387, 1
      %p391 = scmp.eq.s32.totalorder %s80, 1
      %p392 = scmp.ne.s32.totalorder %s387, %s389
      %p393 = scmp.eq.s32.totalorder %s80, 0
      %p394 = por %p392, %p393
      %p395 = scmp.ne.s32.totalorder %s387, %s389
      %p396 = scmp.eq.s32.totalorder %s85, 1
      %p397 = por %p395, %p396
      %p398 = scmp.ne.s32.totalorder %s389, %s390
      %p399 = scmp.eq.s32.totalorder %s85, 0
      %p400 = por %p398, %p399
      %p401 = scmp.ne.s32.totalorder %s389, %s390
      %p402 = scmp.eq.s32.totalorder %s86, 1
      %p403 = por %p401, %p402
      %p405 = scmp.ne.s32.totalorder %s390, %s404
      %p406 = scmp.eq.s32.totalorder %s86, 0
      %p407 = por %p405, %p406
      %s409 = sadd.s32 %s408, 1
      %p412 = scmp.eq.s32.totalorder %s80, 1
      %p413 = scmp.ne.s32.totalorder %s408, %s410
      %p414 = scmp.eq.s32.totalorder %s80, 0
      %p415 = por %p413, %p414
      %p416 = scmp.ne.s32.totalorder %s408, %s410
      %p417 = scmp.eq.s32.totalorder %s85, 1
      %p418 = por %p416, %p417
      %p419 = scmp.ne.s32.totalorder %s410, %s411
      %p420 = scmp.eq.s32.totalorder %s85, 0
      %p421 = por %p419, %p420
      %p422 = scmp.ne.s32.totalorder %s410, %s411
      %p423 = scmp.eq.s32.totalorder %s86, 1
      %p424 = por %p422, %p423
      %p426 = scmp.ne.s32.totalorder %s411, %s425
      %p427 = scmp.eq.s32.totalorder %s86, 0
      %p428 = por %p426, %p427
      %s430 = sadd.s32 %s429, 1
      %p433 = scmp.eq.s32.totalorder %s80, 1
      %p434 = scmp.ne.s32.totalorder %s429, %s431
      %p435 = scmp.eq.s32.totalorder %s80, 0
      %p436 = por %p434, %p435
      %p437 = scmp.ne.s32.totalorder %s429, %s431
      %p438 = scmp.eq.s32.totalorder %s85, 1
      %p439 = por %p437, %p438
      %p440 = scmp.ne.s32.totalorder %s431, %s432
      %p441 = scmp.eq.s32.totalorder %s85, 0
      %p442 = por %p440, %p441
      %p443 = scmp.ne.s32.totalorder %s431, %s432
      %p444 = scmp.eq.s32.totalorder %s86, 1
      %p445 = por %p443, %p444
      %p447 = scmp.ne.s32.totalorder %s432, %s446
      %p448 = scmp.eq.s32.totalorder %s86, 0
      %p449 = por %p447, %p448
      %s451 = sadd.s32 %s450, 1
      %p454 = scmp.eq.s32.totalorder %s80, 1
      %p455 = scmp.ne.s32.totalorder %s450, %s452
      %p456 = scmp.eq.s32.totalorder %s80, 0
      %p457 = por %p455, %p456
      %p458 = scmp.ne.s32.totalorder %s450, %s452
      %p459 = scmp.eq.s32.totalorder %s85, 1
      %p460 = por %p458, %p459
      %p461 = scmp.ne.s32.totalorder %s452, %s453
      %p462 = scmp.eq.s32.totalorder %s85, 0
      %p463 = por %p461, %p462
      %p464 = scmp.ne.s32.totalorder %s452, %s453
      %p465 = scmp.eq.s32.totalorder %s86, 1
      %p466 = por %p464, %p465
      %p468 = scmp.ne.s32.totalorder %s453, %s467
      %p469 = scmp.eq.s32.totalorder %s86, 0
      %p470 = por %p468, %p469
      %s472 = sadd.s32 %s471, 1
      %p475 = scmp.eq.s32.totalorder %s80, 1
      %p476 = scmp.ne.s32.totalorder %s471, %s473
      %p477 = scmp.eq.s32.totalorder %s80, 0
      %p478 = por %p476, %p477
      %p479 = scmp.ne.s32.totalorder %s471, %s473
      %p480 = scmp.eq.s32.totalorder %s85, 1
      %p481 = por %p479, %p480
      %p482 = scmp.ne.s32.totalorder %s473, %s474
      %p483 = scmp.eq.s32.totalorder %s85, 0
      %p484 = por %p482, %p483
      %p485 = scmp.ne.s32.totalorder %s473, %s474
      %p486 = scmp.eq.s32.totalorder %s86, 1
      %p487 = por %p485, %p486
      %p489 = scmp.ne.s32.totalorder %s474, %s488
      %p490 = scmp.eq.s32.totalorder %s86, 0
      %p491 = por %p489, %p490
      %s493 = sadd.s32 %s492, 1
      %p496 = scmp.eq.s32.totalorder %s80, 1
      %p497 = scmp.ne.s32.totalorder %s492, %s494
      %p498 = scmp.eq.s32.totalorder %s80, 0
      %p499 = por %p497, %p498
      %p500 = scmp.ne.s32.totalorder %s492, %s494
      %p501 = scmp.eq.s32.totalorder %s85, 1
      %p502 = por %p500, %p501
      %p503 = scmp.ne.s32.totalorder %s494, %s495
      %p504 = scmp.eq.s32.totalorder %s85, 0
      %p505 = por %p503, %p504
      %p506 = scmp.ne.s32.totalorder %s494, %s495
      %p507 = scmp.eq.s32.totalorder %s86, 1
      %p508 = por %p506, %p507
      %p510 = scmp.ne.s32.totalorder %s495, %s509
      %p511 = scmp.eq.s32.totalorder %s86, 0
      %p512 = por %p510, %p511
      %s514 = sadd.s32 %s513, 1
      %p517 = scmp.eq.s32.totalorder %s80, 1
      %p518 = scmp.ne.s32.totalorder %s513, %s515
      %p519 = scmp.eq.s32.totalorder %s80, 0
      %p520 = por %p518, %p519
      %p521 = scmp.ne.s32.totalorder %s513, %s515
      %p522 = scmp.eq.s32.totalorder %s85, 1
      %p523 = por %p521, %p522
      %p524 = scmp.ne.s32.totalorder %s515, %s516
      %p525 = scmp.eq.s32.totalorder %s85, 0
      %p526 = por %p524, %p525
      %p527 = scmp.ne.s32.totalorder %s515, %s516
      %p528 = scmp.eq.s32.totalorder %s86, 1
      %p529 = por %p527, %p528
      %p531 = scmp.ne.s32.totalorder %s516, %s530
      %p532 = scmp.eq.s32.totalorder %s86, 0
      %p533 = por %p531, %p532
      %s535 = sadd.s32 %s534, 1
      %p538 = scmp.eq.s32.totalorder %s80, 1
      %p539 = scmp.ne.s32.totalorder %s534, %s536
      %p540 = scmp.eq.s32.totalorder %s80, 0
      %p541 = por %p539, %p540
      %p542 = scmp.ne.s32.totalorder %s534, %s536
      %p543 = scmp.eq.s32.totalorder %s85, 1
      %p544 = por %p542, %p543
      %p545 = scmp.ne.s32.totalorder %s536, %s537
      %p546 = scmp.eq.s32.totalorder %s85, 0
      %p547 = por %p545, %p546
      %p548 = scmp.ne.s32.totalorder %s536, %s537
      %p549 = scmp.eq.s32.totalorder %s86, 1
      %p550 = por %p548, %p549
      %p552 = scmp.ne.s32.totalorder %s537, %s551
      %p553 = scmp.eq.s32.totalorder %s86, 0
      %p554 = por %p552, %p553
      %s556 = sadd.s32 %s555, 1
      %p559 = scmp.eq.s32.totalorder %s80, 1
      %p560 = scmp.ne.s32.totalorder %s555, %s557
      %p561 = scmp.eq.s32.totalorder %s80, 0
      %p562 = por %p560, %p561
      %p563 = scmp.ne.s32.totalorder %s555, %s557
      %p564 = scmp.eq.s32.totalorder %s85, 1
      %p565 = por %p563, %p564
      %p566 = scmp.ne.s32.totalorder %s557, %s558
      %p567 = scmp.eq.s32.totalorder %s85, 0
      %p568 = por %p566, %p567
      %p569 = scmp.ne.s32.totalorder %s557, %s558
      %p570 = scmp.eq.s32.totalorder %s86, 1
      %p571 = por %p569, %p570
      %p573 = scmp.ne.s32.totalorder %s558, %s572
      %p574 = scmp.eq.s32.totalorder %s86, 0
      %p575 = por %p573, %p574
      %s577 = sadd.s32 %s576, 1
      %p580 = scmp.eq.s32.totalorder %s80, 1
      %p581 = scmp.ne.s32.totalorder %s576, %s578
      %p582 = scmp.eq.s32.totalorder %s80, 0
      %p583 = por %p581, %p582
      %p584 = scmp.ne.s32.totalorder %s576, %s578
      %p585 = scmp.eq.s32.totalorder %s85, 1
      %p586 = por %p584, %p585
      %p587 = scmp.ne.s32.totalorder %s578, %s579
      %p588 = scmp.eq.s32.totalorder %s85, 0
      %p589 = por %p587, %p588
      %p590 = scmp.ne.s32.totalorder %s578, %s579
      %p591 = scmp.eq.s32.totalorder %s86, 1
      %p592 = por %p590, %p591
      %p594 = scmp.ne.s32.totalorder %s579, %s593
      %p595 = scmp.eq.s32.totalorder %s86, 0
      %p596 = por %p594, %p595
      %s598 = sadd.s32 %s597, 1
      %p601 = scmp.eq.s32.totalorder %s80, 1
      %p602 = scmp.ne.s32.totalorder %s597, %s599
      %p603 = scmp.eq.s32.totalorder %s80, 0
      %p604 = por %p602, %p603
      %p605 = scmp.ne.s32.totalorder %s597, %s599
      %p606 = scmp.eq.s32.totalorder %s85, 1
      %p607 = por %p605, %p606
      %p608 = scmp.ne.s32.totalorder %s599, %s600
      %p609 = scmp.eq.s32.totalorder %s85, 0
      %p610 = por %p608, %p609
      %p611 = scmp.ne.s32.totalorder %s599, %s600
      %p612 = scmp.eq.s32.totalorder %s86, 1
      %p613 = por %p611, %p612
      %p615 = scmp.ne.s32.totalorder %s600, %s614
      %p616 = scmp.eq.s32.totalorder %s86, 0
      %p617 = por %p615, %p616
      %s619 = sadd.s32 %s618, 1
      %p622 = scmp.eq.s32.totalorder %s80, 1
      %p623 = scmp.ne.s32.totalorder %s618, %s620
      %p624 = scmp.eq.s32.totalorder %s80, 0
      %p625 = por %p623, %p624
      %p626 = scmp.ne.s32.totalorder %s618, %s620
      %p627 = scmp.eq.s32.totalorder %s85, 1
      %p628 = por %p626, %p627
      %p629 = scmp.ne.s32.totalorder %s620, %s621
      %p630 = scmp.eq.s32.totalorder %s85, 0
      %p631 = por %p629, %p630
      %p632 = scmp.ne.s32.totalorder %s620, %s621
      %p633 = scmp.eq.s32.totalorder %s86, 1
      %p634 = por %p632, %p633
      %p636 = scmp.ne.s32.totalorder %s621, %s635
      %p637 = scmp.eq.s32.totalorder %s86, 0
      %p638 = por %p636, %p637
      %s640 = sadd.s32 %s639, 1
      %p643 = scmp.eq.s32.totalorder %s80, 1
      %p644 = scmp.ne.s32.totalorder %s639, %s641
      %p645 = scmp.eq.s32.totalorder %s80, 0
      %p646 = por %p644, %p645
      %p647 = scmp.ne.s32.totalorder %s639, %s641
      %p648 = scmp.eq.s32.totalorder %s85, 1
      %p649 = por %p647, %p648
      %p650 = scmp.ne.s32.totalorder %s641, %s642
      %p651 = scmp.eq.s32.totalorder %s85, 0
      %p652 = por %p650, %p651
      %p653 = scmp.ne.s32.totalorder %s641, %s642
      %p654 = scmp.eq.s32.totalorder %s86, 1
      %p655 = por %p653, %p654
      %p657 = scmp.ne.s32.totalorder %s642, %s656
      %p658 = scmp.eq.s32.totalorder %s86, 0
      %p659 = por %p657, %p658
      %s661 = sadd.s32 %s660, 1
      %p664 = scmp.eq.s32.totalorder %s80, 1
      %p665 = scmp.ne.s32.totalorder %s660, %s662
      %p666 = scmp.eq.s32.totalorder %s80, 0
      %p667 = por %p665, %p666
      %p668 = scmp.ne.s32.totalorder %s660, %s662
      %p669 = scmp.eq.s32.totalorder %s85, 1
      %p670 = por %p668, %p669
      %p671 = scmp.ne.s32.totalorder %s662, %s663
      %p672 = scmp.eq.s32.totalorder %s85, 0
      %p673 = por %p671, %p672
      %p674 = scmp.ne.s32.totalorder %s662, %s663
      %p675 = scmp.eq.s32.totalorder %s86, 1
      %p676 = por %p674, %p675
      %p678 = scmp.ne.s32.totalorder %s663, %s677
      %p679 = scmp.eq.s32.totalorder %s86, 0
      %p680 = por %p678, %p679
      %s682 = sadd.s32 %s681, 1
      %p685 = scmp.eq.s32.totalorder %s80, 1
      %p686 = scmp.ne.s32.totalorder %s681, %s683
      %p687 = scmp.eq.s32.totalorder %s80, 0
      %p688 = por %p686, %p687
      %p689 = scmp.ne.s32.totalorder %s681, %s683
      %p690 = scmp.eq.s32.totalorder %s85, 1
      %p691 = por %p689, %p690
      %p692 = scmp.ne.s32.totalorder %s683, %s684
      %p693 = scmp.eq.s32.totalorder %s85, 0
      %p694 = por %p692, %p693
      %p695 = scmp.ne.s32.totalorder %s683, %s684
      %p696 = scmp.eq.s32.totalorder %s86, 1
      %p697 = por %p695, %p696
      %p699 = scmp.ne.s32.totalorder %s684, %s698
      %p700 = scmp.eq.s32.totalorder %s86, 0
      %p701 = por %p699, %p700
      %s703 = sadd.s32 %s702, 1
      %p706 = scmp.eq.s32.totalorder %s80, 1
      %p707 = scmp.ne.s32.totalorder %s702, %s704
      %p708 = scmp.eq.s32.totalorder %s80, 0
      %p709 = por %p707, %p708
      %p710 = scmp.ne.s32.totalorder %s702, %s704
      %p711 = scmp.eq.s32.totalorder %s85, 1
      %p712 = por %p710, %p711
      %p713 = scmp.ne.s32.totalorder %s704, %s705
      %p714 = scmp.eq.s32.totalorder %s85, 0
      %p715 = por %p713, %p714
      %p716 = scmp.ne.s32.totalorder %s704, %s705
      %p717 = scmp.eq.s32.totalorder %s86, 1
      %p718 = por %p716, %p717
      %p720 = scmp.ne.s32.totalorder %s705, %s719
      %p721 = scmp.eq.s32.totalorder %s86, 0
      %p722 = por %p720, %p721
      %s724 = sadd.s32 %s723, 1
      %p727 = scmp.eq.s32.totalorder %s80, 1
      %p728 = scmp.ne.s32.totalorder %s723, %s725
      %p729 = scmp.eq.s32.totalorder %s80, 0
      %p730 = por %p728, %p729
      %p731 = scmp.ne.s32.totalorder %s723, %s725
      %p732 = scmp.eq.s32.totalorder %s85, 1
      %p733 = por %p731, %p732
      %p734 = scmp.ne.s32.totalorder %s725, %s726
      %p735 = scmp.eq.s32.totalorder %s85, 0
      %p736 = por %p734, %p735
      %p737 = scmp.ne.s32.totalorder %s725, %s726
      %p738 = scmp.eq.s32.totalorder %s86, 1
      %p739 = por %p737, %p738
      %p741 = scmp.ne.s32.totalorder %s726, %s740
      %p742 = scmp.eq.s32.totalorder %s86, 0
      %p743 = por %p741, %p742
      %s745 = sadd.s32 %s744, 1
      %p748 = scmp.eq.s32.totalorder %s80, 1
      %p749 = scmp.ne.s32.totalorder %s744, %s746
      %p750 = scmp.eq.s32.totalorder %s80, 0
      %p751 = por %p749, %p750
      %p752 = scmp.ne.s32.totalorder %s744, %s746
      %p753 = scmp.eq.s32.totalorder %s85, 1
      %p754 = por %p752, %p753
      %p755 = scmp.ne.s32.totalorder %s746, %s747
      %p756 = scmp.eq.s32.totalorder %s85, 0
      %p757 = por %p755, %p756
      %p758 = scmp.ne.s32.totalorder %s746, %s747
      %p759 = scmp.eq.s32.totalorder %s86, 1
      %p760 = por %p758, %p759
      %p762 = scmp.ne.s32.totalorder %s747, %s761
      %p763 = scmp.eq.s32.totalorder %s86, 0
      %p764 = por %p762, %p763
      %s765 = ssub.s32 %s80, %s87
      %p766 = scmp.eq.s32.totalorder %s765, 0
      %s768 = sadd.s32 %s767, 1
      %s769 = scalar_select %p766, %s767, %s768
      %p772 = pneg %p766
      %p773 = scmp.eq.s32.totalorder %s80, 1
      %p774 = por %p772, %p773
      %p775 = scmp.ne.s32.totalorder %s767, %s770
      %p776 = scmp.eq.s32.totalorder %s80, 0
      %p777 = por %p775, %p776
      %p778 = scmp.ne.s32.totalorder %s767, %s770
      %p779 = scmp.eq.s32.totalorder %s85, 1
      %p780 = por %p778, %p779
      %p781 = scmp.ne.s32.totalorder %s770, %s771
      %p782 = scmp.eq.s32.totalorder %s85, 0
      %p783 = por %p781, %p782
      %p784 = scmp.ne.s32.totalorder %s770, %s771
      %p785 = scmp.eq.s32.totalorder %s86, 1
      %p786 = por %p784, %p785
      %p788 = scmp.ne.s32.totalorder %s771, %s787
      %p789 = scmp.eq.s32.totalorder %s86, 0
      %p790 = por %p788, %p789
      %p791 = scmp.le.s32.totalorder 1, %s80
      %p792 = scmp.lt.s32.totalorder %s80, 3
      %p793 = pnand %p791, %p792
      %p794 = pneg %p793
      // Predicated region
      $region9: #{fwd.1} parent=5 // pred_check
        _
      $region10: #{fwd.1} parent=5 // pred_check_branch
        %796 = sbr.rel (%p793) target = $region12
      $region11: #{fwd.1} parent=5 // pred_region
        %s797 = ssub.s32 %s80, 1
        // Predicated region
        $region13: #{fwd.1} parent=11 // pred_check
          %p798 = pneg %p127
        $region14: #{fwd.1} parent=11 // pred_check_branch
          %800 = sbr.rel (%p798) target = $region16
        $region15: #{fwd.1} parent=11 // pred_region
          _
        $region16: #{fwd.1} parent=11 // pred_fallthru
          _
        // Predicated region
        $region17: #{fwd.1} parent=11 // pred_check
          %p801 = pneg %p148
        $region18: #{fwd.1} parent=11 // pred_check_branch
          %803 = sbr.rel (%p801) target = $region20
        $region19: #{fwd.1} parent=11 // pred_region
          _
        $region20: #{fwd.1} parent=11 // pred_fallthru
          _
        // Predicated region
        $region21: #{fwd.1} parent=11 // pred_check
          %p804 = pneg %p169
        $region22: #{fwd.1} parent=11 // pred_check_branch
          %806 = sbr.rel (%p804) target = $region24
        $region23: #{fwd.1} parent=11 // pred_region
          _
        $region24: #{fwd.1} parent=11 // pred_fallthru
          _
        // Predicated region
        $region25: #{fwd.1} parent=11 // pred_check
          %p807 = pneg %p190
        $region26: #{fwd.1} parent=11 // pred_check_branch
          %809 = sbr.rel (%p807) target = $region28
        $region27: #{fwd.1} parent=11 // pred_region
          _
        $region28: #{fwd.1} parent=11 // pred_fallthru
          _
        // Predicated region
        $region29: #{fwd.1} parent=11 // pred_check
          %p810 = pneg %p211
        $region30: #{fwd.1} parent=11 // pred_check_branch
          %812 = sbr.rel (%p810) target = $region32
        $region31: #{fwd.1} parent=11 // pred_region
          _
        $region32: #{fwd.1} parent=11 // pred_fallthru
          _
        // Predicated region
        $region33: #{fwd.1} parent=11 // pred_check
          %p813 = pneg %p232
        $region34: #{fwd.1} parent=11 // pred_check_branch
          %815 = sbr.rel (%p813) target = $region36
        $region35: #{fwd.1} parent=11 // pred_region
          _
        $region36: #{fwd.1} parent=11 // pred_fallthru
          _
        // Predicated region
        $region37: #{fwd.1} parent=11 // pred_check
          %p816 = pneg %p253
        $region38: #{fwd.1} parent=11 // pred_check_branch
          %818 = sbr.rel (%p816) target = $region40
        $region39: #{fwd.1} parent=11 // pred_region
          _
        $region40: #{fwd.1} parent=11 // pred_fallthru
          _
        // Predicated region
        $region41: #{fwd.1} parent=11 // pred_check
          %p819 = pneg %p274
        $region42: #{fwd.1} parent=11 // pred_check_branch
          %821 = sbr.rel (%p819) target = $region44
        $region43: #{fwd.1} parent=11 // pred_region
          _
        $region44: #{fwd.1} parent=11 // pred_fallthru
          _
        // Predicated region
        $region45: #{fwd.1} parent=11 // pred_check
          %p822 = pneg %p295
        $region46: #{fwd.1} parent=11 // pred_check_branch
          %824 = sbr.rel (%p822) target = $region48
        $region47: #{fwd.1} parent=11 // pred_region
          _
        $region48: #{fwd.1} parent=11 // pred_fallthru
          _
        // Predicated region
        $region49: #{fwd.1} parent=11 // pred_check
          %p825 = pneg %p316
        $region50: #{fwd.1} parent=11 // pred_check_branch
          %827 = sbr.rel (%p825) target = $region52
        $region51: #{fwd.1} parent=11 // pred_region
          _
        $region52: #{fwd.1} parent=11 // pred_fallthru
          _
        // Predicated region
        $region53: #{fwd.1} parent=11 // pred_check
          %p828 = pneg %p337
        $region54: #{fwd.1} parent=11 // pred_check_branch
          %830 = sbr.rel (%p828) target = $region56
        $region55: #{fwd.1} parent=11 // pred_region
          _
        $region56: #{fwd.1} parent=11 // pred_fallthru
          _
        // Predicated region
        $region57: #{fwd.1} parent=11 // pred_check
          %p831 = pneg %p358
        $region58: #{fwd.1} parent=11 // pred_check_branch
          %833 = sbr.rel (%p831) target = $region60
        $region59: #{fwd.1} parent=11 // pred_region
          _
        $region60: #{fwd.1} parent=11 // pred_fallthru
          _
        // Predicated region
        $region61: #{fwd.1} parent=11 // pred_check
          %p834 = pneg %p379
        $region62: #{fwd.1} parent=11 // pred_check_branch
          %836 = sbr.rel (%p834) target = $region64
        $region63: #{fwd.1} parent=11 // pred_region
          _
        $region64: #{fwd.1} parent=11 // pred_fallthru
          _
        // Predicated region
        $region65: #{fwd.1} parent=11 // pred_check
          %p837 = pneg %p400
        $region66: #{fwd.1} parent=11 // pred_check_branch
          %839 = sbr.rel (%p837) target = $region68
        $region67: #{fwd.1} parent=11 // pred_region
          _
        $region68: #{fwd.1} parent=11 // pred_fallthru
          _
        // Predicated region
        $region69: #{fwd.1} parent=11 // pred_check
          %p840 = pneg %p421
        $region70: #{fwd.1} parent=11 // pred_check_branch
          %842 = sbr.rel (%p840) target = $region72
        $region71: #{fwd.1} parent=11 // pred_region
          _
        $region72: #{fwd.1} parent=11 // pred_fallthru
          _
        // Predicated region
        $region73: #{fwd.1} parent=11 // pred_check
          %p843 = pneg %p442
        $region74: #{fwd.1} parent=11 // pred_check_branch
          %845 = sbr.rel (%p843) target = $region76
        $region75: #{fwd.1} parent=11 // pred_region
          %s847 = ssub.s32 1024, 1024
          %848 = vsyncadd [#allocation3], %s847
          %s849 = sshll.u32 [#allocation2], 4
          %s850 = int_to_ptr.vmem [resolvable:$true] %s849
          %855 = dma.hbm_to_vmem [thread:$0]  %s33, 1024, %s850, [#allocation3], 128, 128, 8
        $region76: #{fwd.1} parent=11 // pred_fallthru
          _
        // Predicated region
        $region77: #{fwd.1} parent=11 // pred_check
          %p856 = pneg %p463
        $region78: #{fwd.1} parent=11 // pred_check_branch
          %858 = sbr.rel (%p856) target = $region80
        $region79: #{fwd.1} parent=11 // pred_region
          %s860 = ssub.s32 32, 32
          %861 = vsyncadd [#allocation6], %s860
          %s862 = sshll.u32 [#allocation5], 4
          %s863 = int_to_ptr.vmem [resolvable:$true] %s862
          %868 = dma.hbm_to_vmem [thread:$0]  %s35, 32, %s863, [#allocation6], 16, 16, 1
        $region80: #{fwd.1} parent=11 // pred_fallthru
          _
        // Predicated region
        $region81: #{fwd.1} parent=11 // pred_check
          %p869 = pneg %p484
        $region82: #{fwd.1} parent=11 // pred_check_branch
          %871 = sbr.rel (%p869) target = $region84
        $region83: #{fwd.1} parent=11 // pred_region
          %s873 = ssub.s32 1024, 1024
          %874 = vsyncadd [#allocation6], %s873
          %s875 = sshll.u32 [#allocation7], 4
          %s876 = int_to_ptr.vmem [resolvable:$true] %s875
          %881 = dma.hbm_to_vmem [thread:$0]  %s37, 1024, %s876, [#allocation6], 128, 128, 8
        $region84: #{fwd.1} parent=11 // pred_fallthru
          _
        // Predicated region
        $region85: #{fwd.1} parent=11 // pred_check
          %p882 = pneg %p505
        $region86: #{fwd.1} parent=11 // pred_check_branch
          %884 = sbr.rel (%p882) target = $region88
        $region87: #{fwd.1} parent=11 // pred_region
          %s886 = ssub.s32 32, 32
          %887 = vsyncadd [#allocation9], %s886
          %s888 = sshll.u32 [#allocation8], 4
          %s889 = int_to_ptr.vmem [resolvable:$true] %s888
          %894 = dma.hbm_to_vmem [thread:$0]  %s39, 32, %s889, [#allocation9], 16, 16, 1
        $region88: #{fwd.1} parent=11 // pred_fallthru
          _
        // Predicated region
        $region89: #{fwd.1} parent=11 // pred_check
          %p895 = pneg %p526
        $region90: #{fwd.1} parent=11 // pred_check_branch
          %897 = sbr.rel (%p895) target = $region92
        $region91: #{fwd.1} parent=11 // pred_region
          %s899 = ssub.s32 1024, 1024
          %900 = vsyncadd [#allocation9], %s899
          %s901 = sshll.u32 [#allocation10], 4
          %s902 = int_to_ptr.vmem [resolvable:$true] %s901
          %907 = dma.hbm_to_vmem [thread:$0]  %s41, 1024, %s902, [#allocation9], 128, 128, 8
        $region92: #{fwd.1} parent=11 // pred_fallthru
          _
        // Predicated region
        $region93: #{fwd.1} parent=11 // pred_check
          %p908 = pneg %p547
        $region94: #{fwd.1} parent=11 // pred_check_branch
          %910 = sbr.rel (%p908) target = $region96
        $region95: #{fwd.1} parent=11 // pred_region
          %s912 = ssub.s32 32, 32
          %913 = vsyncadd [#allocation12], %s912
          %s914 = sshll.u32 [#allocation11], 4
          %s915 = int_to_ptr.vmem [resolvable:$true] %s914
          %920 = dma.hbm_to_vmem [thread:$0]  %s43, 32, %s915, [#allocation12], 16, 16, 1
        $region96: #{fwd.1} parent=11 // pred_fallthru
          _
        // Predicated region
        $region97: #{fwd.1} parent=11 // pred_check
          %p921 = pneg %p568
        $region98: #{fwd.1} parent=11 // pred_check_branch
          %923 = sbr.rel (%p921) target = $region100
        $region99: #{fwd.1} parent=11 // pred_region
          _
        $region100: #{fwd.1} parent=11 // pred_fallthru
          _
        // Predicated region
        $region101: #{fwd.1} parent=11 // pred_check
          %p924 = pneg %p589
        $region102: #{fwd.1} parent=11 // pred_check_branch
          %926 = sbr.rel (%p924) target = $region104
        $region103: #{fwd.1} parent=11 // pred_region
          %s928 = ssub.s32 32, 32
          %929 = vsyncadd [#allocation12], %s928
          %s930 = sshll.u32 [#allocation13], 4
          %s931 = int_to_ptr.vmem [resolvable:$true] %s930
          %936 = dma.hbm_to_vmem [thread:$0]  %s47, 32, %s931, [#allocation12], 16, 16, 1
        $region104: #{fwd.1} parent=11 // pred_fallthru
          _
        // Predicated region
        $region105: #{fwd.1} parent=11 // pred_check
          %p937 = pneg %p610
        $region106: #{fwd.1} parent=11 // pred_check_branch
          %939 = sbr.rel (%p937) target = $region108
        $region107: #{fwd.1} parent=11 // pred_region
          _
        $region108: #{fwd.1} parent=11 // pred_fallthru
          _
        // Predicated region
        $region109: #{fwd.1} parent=11 // pred_check
          %p940 = pneg %p631
        $region110: #{fwd.1} parent=11 // pred_check_branch
          %942 = sbr.rel (%p940) target = $region112
        $region111: #{fwd.1} parent=11 // pred_region
          _
        $region112: #{fwd.1} parent=11 // pred_fallthru
          _
        // Predicated region
        $region113: #{fwd.1} parent=11 // pred_check
          %p943 = pneg %p652
        $region114: #{fwd.1} parent=11 // pred_check_branch
          %945 = sbr.rel (%p943) target = $region116
        $region115: #{fwd.1} parent=11 // pred_region
          _
        $region116: #{fwd.1} parent=11 // pred_fallthru
          _
        // Predicated region
        $region117: #{fwd.1} parent=11 // pred_check
          %p946 = pneg %p673
        $region118: #{fwd.1} parent=11 // pred_check_branch
          %948 = sbr.rel (%p946) target = $region120
        $region119: #{fwd.1} parent=11 // pred_region
          %s950 = ssub.s32 1024, 1024
          %951 = vsyncadd [#allocation15], %s950
          %s952 = sshll.u32 [#allocation14], 4
          %s953 = int_to_ptr.vmem [resolvable:$true] %s952
          %958 = dma.hbm_to_vmem [thread:$0]  %s55, 1024, %s953, [#allocation15], 256, 256, 16
        $region120: #{fwd.1} parent=11 // pred_fallthru
          _
        // Predicated region
        $region121: #{fwd.1} parent=11 // pred_check
          %p959 = pneg %p694
        $region122: #{fwd.1} parent=11 // pred_check_branch
          %961 = sbr.rel (%p959) target = $region124
        $region123: #{fwd.1} parent=11 // pred_region
          _
        $region124: #{fwd.1} parent=11 // pred_fallthru
          _
        // Predicated region
        $region125: #{fwd.1} parent=11 // pred_check
          %p962 = pneg %p715
        $region126: #{fwd.1} parent=11 // pred_check_branch
          %964 = sbr.rel (%p962) target = $region128
        $region127: #{fwd.1} parent=11 // pred_region
          %s966 = ssub.s32 1024, 1024
          %967 = vsyncadd [#allocation15], %s966
          %s968 = sshll.u32 [#allocation16], 4
          %s969 = int_to_ptr.vmem [resolvable:$true] %s968
          %974 = dma.hbm_to_vmem [thread:$0]  %s59, 1024, %s969, [#allocation15], 256, 256, 16
        $region128: #{fwd.1} parent=11 // pred_fallthru
          _
        // Predicated region
        $region129: #{fwd.1} parent=11 // pred_check
          %p975 = pneg %p736
        $region130: #{fwd.1} parent=11 // pred_check_branch
          %977 = sbr.rel (%p975) target = $region132
        $region131: #{fwd.1} parent=11 // pred_region
          %s979 = ssub.s32 32, 32
          %980 = vsyncadd [#allocation18], %s979
          %s982 = sshll.u32 [#allocation17], 4
          %s983 = int_to_ptr.vmem [resolvable:$true] %s982
          %985 = dma.hbm_to_vmem [thread:$0]  %s61, 32, %s983, [#allocation18]
        $region132: #{fwd.1} parent=11 // pred_fallthru
          _
        // Predicated region
        $region133: #{fwd.1} parent=11 // pred_check
          %p986 = pneg %p757
        $region134: #{fwd.1} parent=11 // pred_check_branch
          %988 = sbr.rel (%p986) target = $region136
        $region135: #{fwd.1} parent=11 // pred_region
          %s990 = ssub.s32 512, 512
          %991 = vsyncadd [#allocation18], %s990
          %s992 = sshll.u32 [#allocation19], 4
          %s993 = int_to_ptr.vmem [resolvable:$true] %s992
          %998 = dma.hbm_to_vmem [thread:$0]  %s63, 512, %s993, [#allocation18], 128, 128, 8
        $region136: #{fwd.1} parent=11 // pred_fallthru
          _
      $region12: #{fwd.1} parent=5 // pred_fallthru
        _
      %p999 = scmp.lt.s32.totalorder %s80, 2
      // Predicated region
      $region137: #{fwd.1} parent=5 // pred_check
        %p1000 = pneg %p999
      $region138: #{fwd.1} parent=5 // pred_check_branch
        %1002 = sbr.rel (%p1000) target = $region140
      $region139: #{fwd.1} parent=5 // pred_region
        // Predicated region
        $region141: #{fwd.1} parent=139 // pred_check
          %p1003 = pneg %p100
        $region142: #{fwd.1} parent=139 // pred_check_branch
          %1005 = sbr.rel (%p1003) target = $region144
        $region143: #{fwd.1} parent=139 // pred_region
          %p1006 = scmp.lt.s32.totalorder %s80, 1
          %s1007 = scalar_select %p1006, %s80, 1
          %s1008 = smul.addr %s1007, 8
          %s1009 = scalar_lea.vmem %s1, %s1008
        $region144: #{fwd.1} parent=139 // pred_fallthru
          _
      $region140: #{fwd.1} parent=5 // pred_fallthru
        _
      %p1010 = scmp.le.s32.totalorder 1, %s80
      %p1011 = scmp.lt.s32.totalorder %s80, 3
      %p1012 = pnand %p1010, %p1011
      %p1013 = pneg %p1012
      // Predicated region
      $region145: #{fwd.1} parent=5 // pred_check
        _
      $region146: #{fwd.1} parent=5 // pred_check_branch
        %1015 = sbr.rel (%p1012) target = $region148
      $region147: #{fwd.1} parent=5 // pred_region
        %s1016 = ssub.s32 %s80, 1
        // Predicated region
        $region149: #{fwd.1} parent=147 // pred_check
          %p1017 = pneg %p442
        $region150: #{fwd.1} parent=147 // pred_check_branch
          %1019 = sbr.rel (%p1017) target = $region152
        $region151: #{fwd.1} parent=147 // pred_region
          %1020 = dma.done [#allocation3], 1024
        $region152: #{fwd.1} parent=147 // pred_fallthru
          _
        // Predicated region
        $region153: #{fwd.1} parent=147 // pred_check
          %p1021 = pneg %p463
        $region154: #{fwd.1} parent=147 // pred_check_branch
          %1023 = sbr.rel (%p1021) target = $region156
        $region155: #{fwd.1} parent=147 // pred_region
          %1024 = dma.done [#allocation6], 32
        $region156: #{fwd.1} parent=147 // pred_fallthru
          _
        // Predicated region
        $region157: #{fwd.1} parent=147 // pred_check
          %p1025 = pneg %p484
        $region158: #{fwd.1} parent=147 // pred_check_branch
          %1027 = sbr.rel (%p1025) target = $region160
        $region159: #{fwd.1} parent=147 // pred_region
          %1028 = dma.done [#allocation6], 1024
        $region160: #{fwd.1} parent=147 // pred_fallthru
          _
        // Predicated region
        $region161: #{fwd.1} parent=147 // pred_check
          %p1029 = pneg %p505
        $region162: #{fwd.1} parent=147 // pred_check_branch
          %1031 = sbr.rel (%p1029) target = $region164
        $region163: #{fwd.1} parent=147 // pred_region
          %1032 = dma.done [#allocation9], 32
        $region164: #{fwd.1} parent=147 // pred_fallthru
          _
        // Predicated region
        $region165: #{fwd.1} parent=147 // pred_check
          %p1033 = pneg %p526
        $region166: #{fwd.1} parent=147 // pred_check_branch
          %1035 = sbr.rel (%p1033) target = $region168
        $region167: #{fwd.1} parent=147 // pred_region
          %1036 = dma.done [#allocation9], 1024
        $region168: #{fwd.1} parent=147 // pred_fallthru
          _
        // Predicated region
        $region169: #{fwd.1} parent=147 // pred_check
          %p1037 = pneg %p547
        $region170: #{fwd.1} parent=147 // pred_check_branch
          %1039 = sbr.rel (%p1037) target = $region172
        $region171: #{fwd.1} parent=147 // pred_region
          %1040 = dma.done [#allocation12], 32
        $region172: #{fwd.1} parent=147 // pred_fallthru
          _
        // Predicated region
        $region173: #{fwd.1} parent=147 // pred_check
          %p1041 = pneg %p589
        $region174: #{fwd.1} parent=147 // pred_check_branch
          %1043 = sbr.rel (%p1041) target = $region176
        $region175: #{fwd.1} parent=147 // pred_region
          %1044 = dma.done [#allocation12], 32
        $region176: #{fwd.1} parent=147 // pred_fallthru
          _
        // Predicated region
        $region177: #{fwd.1} parent=147 // pred_check
          %p1045 = pneg %p673
        $region178: #{fwd.1} parent=147 // pred_check_branch
          %1047 = sbr.rel (%p1045) target = $region180
        $region179: #{fwd.1} parent=147 // pred_region
          %1048 = dma.done [#allocation15], 1024
        $region180: #{fwd.1} parent=147 // pred_fallthru
          _
        // Predicated region
        $region181: #{fwd.1} parent=147 // pred_check
          %p1049 = pneg %p715
        $region182: #{fwd.1} parent=147 // pred_check_branch
          %1051 = sbr.rel (%p1049) target = $region184
        $region183: #{fwd.1} parent=147 // pred_region
          %1052 = dma.done [#allocation15], 1024
        $region184: #{fwd.1} parent=147 // pred_fallthru
          _
        // Predicated region
        $region185: #{fwd.1} parent=147 // pred_check
          %p1053 = pneg %p736
        $region186: #{fwd.1} parent=147 // pred_check_branch
          %1055 = sbr.rel (%p1053) target = $region188
        $region187: #{fwd.1} parent=147 // pred_region
          %1056 = dma.done [#allocation18], 32
        $region188: #{fwd.1} parent=147 // pred_fallthru
          _
        // Predicated region
        $region189: #{fwd.1} parent=147 // pred_check
          %p1057 = pneg %p757
        $region190: #{fwd.1} parent=147 // pred_check_branch
          %1059 = sbr.rel (%p1057) target = $region192
        $region191: #{fwd.1} parent=147 // pred_region
          %1060 = dma.done [#allocation18], 512
        $region192: #{fwd.1} parent=147 // pred_fallthru
          _
        %p1061 = scmp.lt.s32.totalorder %s85, 1
        %s1062 = scalar_select %p1061, %s85, 1
        %s1063 = smul.addr %s1062, 8
        %s1064 = scalar_lea.vmem %s1, %s1063
        %p1065 = pneg %p106
        %p1066 = pneg %p103
        %p1067 = pneg %p127
        %p1068 = pneg %p124
        %p1069 = pneg %p148
        %p1070 = pneg %p145
        %p1071 = pneg %p169
        %p1072 = pneg %p166
        %p1073 = pneg %p190
        %p1074 = pneg %p187
        %p1075 = pneg %p211
        %p1076 = pneg %p208
        %p1077 = pneg %p232
        %p1078 = pneg %p229
        %p1079 = pneg %p253
        %p1080 = pneg %p250
        %p1081 = pneg %p274
        %p1082 = pneg %p271
        %p1083 = pneg %p295
        %p1084 = pneg %p292
        %p1085 = pneg %p316
        %p1086 = pneg %p313
        %p1087 = pneg %p337
        %p1088 = pneg %p334
        %p1089 = pneg %p358
        %p1090 = pneg %p355
        %p1091 = pneg %p379
        %p1092 = pneg %p376
        %p1093 = pneg %p400
        %p1094 = pneg %p397
        %p1095 = pneg %p421
        %p1096 = pneg %p418
        %p1097 = pneg %p442
        %p1098 = pneg %p439
        %p1099 = pneg %p463
        %p1100 = pneg %p460
        %p1101 = pneg %p484
        %p1102 = pneg %p481
        %p1103 = pneg %p505
        %p1104 = pneg %p502
        %p1105 = pneg %p526
        %p1106 = pneg %p523
        %p1107 = pneg %p547
        %p1108 = pneg %p544
        %p1109 = pneg %p568
        %p1110 = pneg %p565
        %p1111 = pneg %p589
        %p1112 = pneg %p586
        %p1113 = pneg %p610
        %p1114 = pneg %p607
        %p1115 = pneg %p631
        %p1116 = pneg %p628
        %p1117 = pneg %p652
        %p1118 = pneg %p649
        %p1119 = pneg %p673
        %p1120 = pneg %p670
        %p1121 = pneg %p694
        %p1122 = pneg %p691
        %p1123 = pneg %p715
        %p1124 = pneg %p712
        %p1125 = pneg %p736
        %p1126 = pneg %p733
        %p1127 = pneg %p757
        %p1128 = pneg %p754
        %p1129 = pneg %p783
        %p1130 = pneg %p780
        %s1131 = sand.u32 %s770, 1
        %s1132 = scalar_lea.sflag [#allocation4], %s1131
        %s1133 = sand.u32 %s770, 1
        %s1134 = smul.addr %s1133, 8
        %s1135 = scalar_lea.vmem [#allocation20], %s1134
        %p1136 = scmp.lt.s32.totalorder %s85, 1
        %s1137 = scalar_select %p1136, %s85, 1
        %s1138 = smul.addr %s1137, 8
        %s1139 = scalar_lea.vmem %s1, %s1138
        %v1140 = vlaneseq
        %v1141 = vshrl.u32 %v1140, 7
        %v1142 = vlaneseq
        %v1143 = vand.u32 %v1142, 127
        %vm1144 = vcmp.le.s32.totalorder %v1143, %v1141
        %v1145 = vsel %vm1144, 1, 0
        %v1146 = vcvt.s32.f32 %v1145
        %v1147 = vadd.s32 %v1143, 1
        %vm1148 = vcmp.eq.s32.totalorder %v1147, %v1141
        %v1149 = vsel %vm1148, 1, 0
        %v1150 = vcvt.s32.f32 %v1149
        %vm1151 = vcmp.lt.s32.totalorder %v1143, 16
        %v1152 = vld [vmem:[%s1139] sm:$0xff]
        %v1153 = vld [vmem:[%s3] sm:$0xff]
        %v1154 = vld [vmem:[%s3 + $0x8] sm:$0xff]
        %v1155 = vld [vmem:[%s3 + $0x10] sm:$0xff]
        %v1156 = vld [vmem:[%s3 + $0x18] sm:$0xff]
        %v1157 = vld [vmem:[%s3 + $0x20] sm:$0xff]
        %v1158 = vld [vmem:[%s3 + $0x28] sm:$0xff]
        %v1159 = vld [vmem:[%s3 + $0x30] sm:$0xff]
        %v1160 = vld [vmem:[%s3 + $0x38] sm:$0xff]
        %v1161 = vld [vmem:[%s3 + $0x40] sm:$0xff]
        %v1162 = vld [vmem:[%s3 + $0x48] sm:$0xff]
        %v1163 = vld [vmem:[%s3 + $0x50] sm:$0xff]
        %v1164 = vld [vmem:[%s3 + $0x58] sm:$0xff]
        %v1165 = vld [vmem:[%s3 + $0x60] sm:$0xff]
        %v1166 = vld [vmem:[%s3 + $0x68] sm:$0xff]
        %v1167 = vld [vmem:[%s3 + $0x70] sm:$0xff]
        %v1168 = vld [vmem:[%s3 + $0x78] sm:$0xff]
        %1169 = vmatprep.subr.mxu0 0.0
        %1170 = vmatpush1.msra.mxu0 %v1153
        %1171 = vmatprep.subr.mxu0 0.0
        %1172 = vmatpush1.msra.mxu0 %v1154
        %1173 = vmatprep.subr.mxu0 0.0
        %1174 = vmatpush1.msra.mxu0 %v1155
        %1175 = vmatprep.subr.mxu0 0.0
        %1176 = vmatpush1.msra.mxu0 %v1156
        %1177 = vmatprep.subr.mxu0 0.0
        %1178 = vmatpush1.msra.mxu0 %v1157
        %1179 = vmatprep.subr.mxu0 0.0
        %1180 = vmatpush1.msra.mxu0 %v1158
        %1181 = vmatprep.subr.mxu0 0.0
        %1182 = vmatpush1.msra.mxu0 %v1159
        %1183 = vmatprep.subr.mxu0 0.0
        %1184 = vmatpush1.msra.mxu0 %v1160
        %1185 = vmatprep.subr.mxu0 0.0
        %1186 = vmatpush1.msra.mxu0 %v1161
        %1187 = vmatprep.subr.mxu0 0.0
        %1188 = vmatpush1.msra.mxu0 %v1162
        %1189 = vmatprep.subr.mxu0 0.0
        %1190 = vmatpush1.msra.mxu0 %v1163
        %1191 = vmatprep.subr.mxu0 0.0
        %1192 = vmatpush1.msra.mxu0 %v1164
        %1193 = vmatprep.subr.mxu0 0.0
        %1194 = vmatpush1.msra.mxu0 %v1165
        %1195 = vmatprep.subr.mxu0 0.0
        %1196 = vmatpush1.msra.mxu0 %v1166
        %1197 = vmatprep.subr.mxu0 0.0
        %1198 = vmatpush1.msra.mxu0 %v1167
        %1199 = vmatprep.subr.mxu0 0.0
        %1200 = vmatpush1.msra.mxu0 %v1168
        %1201 = vmatprep.subr.mxu0 0.0
        %1202 = vmatpush1.msra.mxu0 0.0
        %1203 = vmatprep.subr.mxu0 0.0
        %1204 = vmatpush1.msra.mxu0 0.0
        %1205 = vmatprep.subr.mxu0 0.0
        %1206 = vmatpush1.msra.mxu0 0.0
        %1207 = vmatprep.subr.mxu0 0.0
        %1208 = vmatpush1.msra.mxu0 0.0
        %1209 = vmatprep.subr.mxu0 0.0
        %1210 = vmatpush1.msra.mxu0 0.0
        %1211 = vmatprep.subr.mxu0 0.0
        %1212 = vmatpush1.msra.mxu0 0.0
        %1213 = vmatprep.subr.mxu0 0.0
        %1214 = vmatpush1.msra.mxu0 0.0
        %1215 = vmatprep.subr.mxu0 0.0
        %1216 = vmatpush1.msra.mxu0 0.0
        %1217 = vmatprep.subr.mxu0 0.0
        %1218 = vmatpush1.msra.mxu0 0.0
        %1219 = vmatprep.subr.mxu0 0.0
        %1220 = vmatpush1.msra.mxu0 0.0
        %1221 = vmatprep.subr.mxu0 0.0
        %1222 = vmatpush1.msra.mxu0 0.0
        %1223 = vmatprep.subr.mxu0 0.0
        %1224 = vmatpush1.msra.mxu0 0.0
        %1225 = vmatprep.subr.mxu0 0.0
        %1226 = vmatpush1.msra.mxu0 0.0
        %1227 = vmatprep.subr.mxu0 0.0
        %1228 = vmatpush1.msra.mxu0 0.0
        %1229 = vmatprep.subr.mxu0 0.0
        %1230 = vmatpush1.msra.mxu0 0.0
        %1231 = vmatprep.subr.mxu0 0.0
        %1232 = vmatpush1.msra.mxu0 0.0
        %1233 = vmatprep.mubr.f32.mxu0 0.0
        %1234 = vmatmul.mubr.f32.gmra.mrb[0].mxu0 %v1152
        %v1235 = vpop.f32.mrb[0].mxu0
        %v1236 = vadd.f32 0.0, %v1235
        %v1237 = vpop.f32.mrb[0].mxu0
        %1238 = vdwg.mxu0
        %v1239 = vld [vmem:[%s5] sm:$0x1]
        %v1240 = vld [vmem:[%s7] sm:$0x1]
        %vm1241 = vcmask 261120
        %v1242 = vsel %vm1241, %v1236, 0.0
        %1243 = vadd.xlane.f32.xlu0 %v1242
        %v1244 = vpop.xlane.xlu0 %1243
        %v1245 = vrcp.pop 32.0
        %v1246 = vmul.f32 %v1244, %v1245
        %v1247 = vsub.f32 %v1236, %v1246
        %v1248 = vmul.f32 %v1247, %v1247
        %v1249 = vsel %vm1241, %v1248, 0.0
        %1250 = vadd.xlane.f32.xlu0 %v1249
        %v1251 = vpop.xlane.xlu0 %1250
        %v1252 = vmul.f32 %v1251, %v1245
        %v1253 = vadd.f32 %v1252, 1e-05
        %v1254 = vrsqrt.pop %v1253
        %v1255 = vmul.f32 %v1247, %v1254
        %v1257 = vlaneseq
        %v1258 = vshrl.u32 %v1257, 7
        %v1259 = vsub.s32 0, %v1258
        %v1260 = vrot.slane %v1239, %v1259
        %v1262 = vmul.f32 %v1255, %v1260
        %v1264 = vlaneseq
        %v1265 = vshrl.u32 %v1264, 7
        %v1266 = vsub.s32 0, %v1265
        %v1267 = vrot.slane %v1240, %v1266
        %v1269 = vadd.f32 %v1262, %v1267
        %vm1270 = vcmask 64512
        %v1272 = vsel %vm1270, %v1150, 0
        %1274 = vmatprep.subr.mxu0 0.0
        %1275 = vmatpush1.msra.mxu0 %v1269
        %1276 = vmatprep.subr.mxu0 0.0
        %1277 = vmatpush1.msra.mxu0 0.0
        %1278 = vmatprep.subr.mxu0 0.0
        %1279 = vmatpush1.msra.mxu0 0.0
        %1280 = vmatprep.subr.mxu0 0.0
        %1281 = vmatpush1.msra.mxu0 0.0
        %1282 = vmatprep.subr.mxu0 0.0
        %1283 = vmatpush1.msra.mxu0 0.0
        %1284 = vmatprep.subr.mxu0 0.0
        %1285 = vmatpush1.msra.mxu0 0.0
        %1286 = vmatprep.subr.mxu0 0.0
        %1287 = vmatpush1.msra.mxu0 0.0
        %1288 = vmatprep.subr.mxu0 0.0
        %1289 = vmatpush1.msra.mxu0 0.0
        %1290 = vmatprep.subr.mxu0 0.0
        %1291 = vmatpush1.msra.mxu0 0.0
        %1292 = vmatprep.subr.mxu0 0.0
        %1293 = vmatpush1.msra.mxu0 0.0
        %1294 = vmatprep.subr.mxu0 0.0
        %1295 = vmatpush1.msra.mxu0 0.0
        %1296 = vmatprep.subr.mxu0 0.0
        %1297 = vmatpush1.msra.mxu0 0.0
        %1298 = vmatprep.subr.mxu0 0.0
        %1299 = vmatpush1.msra.mxu0 0.0
        %1300 = vmatprep.subr.mxu0 0.0
        %1301 = vmatpush1.msra.mxu0 0.0
        %1302 = vmatprep.subr.mxu0 0.0
        %1303 = vmatpush1.msra.mxu0 0.0
        %1304 = vmatprep.subr.mxu0 0.0
        %1305 = vmatpush1.msra.mxu0 0.0
        %1306 = vmatprep.subr.mxu0 0.0
        %1307 = vmatpush1.msra.mxu0 0.0
        %1308 = vmatprep.subr.mxu0 0.0
        %1309 = vmatpush1.msra.mxu0 0.0
        %1310 = vmatprep.subr.mxu0 0.0
        %1311 = vmatpush1.msra.mxu0 0.0
        %1312 = vmatprep.subr.mxu0 0.0
        %1313 = vmatpush1.msra.mxu0 0.0
        %1314 = vmatprep.subr.mxu0 0.0
        %1315 = vmatpush1.msra.mxu0 0.0
        %1316 = vmatprep.subr.mxu0 0.0
        %1317 = vmatpush1.msra.mxu0 0.0
        %1318 = vmatprep.subr.mxu0 0.0
        %1319 = vmatpush1.msra.mxu0 0.0
        %1320 = vmatprep.subr.mxu0 0.0
        %1321 = vmatpush1.msra.mxu0 0.0
        %1322 = vmatprep.subr.mxu0 0.0
        %1323 = vmatpush1.msra.mxu0 0.0
        %1324 = vmatprep.subr.mxu0 0.0
        %1325 = vmatpush1.msra.mxu0 0.0
        %1326 = vmatprep.subr.mxu0 0.0
        %1327 = vmatpush1.msra.mxu0 0.0
        %1328 = vmatprep.subr.mxu0 0.0
        %1329 = vmatpush1.msra.mxu0 0.0
        %1330 = vmatprep.subr.mxu0 0.0
        %1331 = vmatpush1.msra.mxu0 0.0
        %1332 = vmatprep.subr.mxu0 0.0
        %1333 = vmatpush1.msra.mxu0 0.0
        %1334 = vmatprep.subr.mxu0 0.0
        %1335 = vmatpush1.msra.mxu0 0.0
        %1336 = vmatprep.subr.mxu0 0.0
        %1337 = vmatpush1.msra.mxu0 0.0
        %1338 = vmatprep.mubr.f32.mxu0 0.0
        %1339 = vmatmul.mubr.f32.gmra.mrb[0].mxu0 %v1272
        %v1340 = vpop.f32.mrb[0].mxu0
        %v1341 = vadd.f32 0.0, %v1340
        %v1342 = vpop.f32.mrb[0].mxu0
        %1343 = vdwg.mxu0
        %v1344 = vsel %vm1151, %v1341, %v1269
        %v1345 = vld [vmem:[%s17] sm:$0xff]
        %v1346 = vld [vmem:[%s17 + $0x8] sm:$0xff]
        %v1347 = vld [vmem:[%s17 + $0x10] sm:$0xff]
        %v1348 = vld [vmem:[%s17 + $0x18] sm:$0xff]
        %v1349 = vld [vmem:[%s19] sm:$0x1]
        %v1351 = vlaneseq
        %v1352 = vshrl.u32 %v1351, 7
        %v1353 = vsub.s32 0, %v1352
        %v1354 = vrot.slane %v1349, %v1353
        %v1357 = vsel %vm1241, %v1344, 0
        %1359 = vmatprep.subr.mxu0 0.0
        %1360 = vmatpush1.msra.mxu0 %v1345
        %1361 = vmatprep.subr.mxu0 0.0
        %1362 = vmatpush1.msra.mxu0 %v1346
        %1363 = vmatprep.subr.mxu0 0.0
        %1364 = vmatpush1.msra.mxu0 %v1347
        %1365 = vmatprep.subr.mxu0 0.0
        %1366 = vmatpush1.msra.mxu0 %v1348
        %1367 = vmatprep.subr.mxu0 0.0
        %1368 = vmatpush1.msra.mxu0 0.0
        %1369 = vmatprep.subr.mxu0 0.0
        %1370 = vmatpush1.msra.mxu0 0.0
        %1371 = vmatprep.subr.mxu0 0.0
        %1372 = vmatpush1.msra.mxu0 0.0
        %1373 = vmatprep.subr.mxu0 0.0
        %1374 = vmatpush1.msra.mxu0 0.0
        %1375 = vmatprep.subr.mxu0 0.0
        %1376 = vmatpush1.msra.mxu0 0.0
        %1377 = vmatprep.subr.mxu0 0.0
        %1378 = vmatpush1.msra.mxu0 0.0
        %1379 = vmatprep.subr.mxu0 0.0
        %1380 = vmatpush1.msra.mxu0 0.0
        %1381 = vmatprep.subr.mxu0 0.0
        %1382 = vmatpush1.msra.mxu0 0.0
        %1383 = vmatprep.subr.mxu0 0.0
        %1384 = vmatpush1.msra.mxu0 0.0
        %1385 = vmatprep.subr.mxu0 0.0
        %1386 = vmatpush1.msra.mxu0 0.0
        %1387 = vmatprep.subr.mxu0 0.0
        %1388 = vmatpush1.msra.mxu0 0.0
        %1389 = vmatprep.subr.mxu0 0.0
        %1390 = vmatpush1.msra.mxu0 0.0
        %1391 = vmatprep.subr.mxu0 0.0
        %1392 = vmatpush1.msra.mxu0 0.0
        %1393 = vmatprep.subr.mxu0 0.0
        %1394 = vmatpush1.msra.mxu0 0.0
        %1395 = vmatprep.subr.mxu0 0.0
        %1396 = vmatpush1.msra.mxu0 0.0
        %1397 = vmatprep.subr.mxu0 0.0
        %1398 = vmatpush1.msra.mxu0 0.0
        %1399 = vmatprep.subr.mxu0 0.0
        %1400 = vmatpush1.msra.mxu0 0.0
        %1401 = vmatprep.subr.mxu0 0.0
        %1402 = vmatpush1.msra.mxu0 0.0
        %1403 = vmatprep.subr.mxu0 0.0
        %1404 = vmatpush1.msra.mxu0 0.0
        %1405 = vmatprep.subr.mxu0 0.0
        %1406 = vmatpush1.msra.mxu0 0.0
        %1407 = vmatprep.subr.mxu0 0.0
        %1408 = vmatpush1.msra.mxu0 0.0
        %1409 = vmatprep.subr.mxu0 0.0
        %1410 = vmatpush1.msra.mxu0 0.0
        %1411 = vmatprep.subr.mxu0 0.0
        %1412 = vmatpush1.msra.mxu0 0.0
        %1413 = vmatprep.subr.mxu0 0.0
        %1414 = vmatpush1.msra.mxu0 0.0
        %1415 = vmatprep.subr.mxu0 0.0
        %1416 = vmatpush1.msra.mxu0 0.0
        %1417 = vmatprep.subr.mxu0 0.0
        %1418 = vmatpush1.msra.mxu0 0.0
        %1419 = vmatprep.subr.mxu0 0.0
        %1420 = vmatpush1.msra.mxu0 0.0
        %1421 = vmatprep.subr.mxu0 0.0
        %1422 = vmatpush1.msra.mxu0 0.0
        %1423 = vmatprep.mubr.f32.mxu0 0.0
        %1424 = vmatmul.mubr.f32.gmra.mrb[0].mxu0 %v1357
        %v1425 = vpop.f32.mrb[0].mxu0
        %v1426 = vadd.f32 %v1354, %v1425
        %v1427 = vpop.f32.mrb[0].mxu0
        %1428 = vdwg.mxu0
        %v1429 = vld [vmem:[%s21] sm:$0xff]
        %v1430 = vld [vmem:[%s21 + $0x8] sm:$0xff]
        %v1431 = vld [vmem:[%s21 + $0x10] sm:$0xff]
        %v1432 = vld [vmem:[%s21 + $0x18] sm:$0xff]
        %v1433 = vld [vmem:[%s23] sm:$0x1]
        %v1435 = vlaneseq
        %v1436 = vshrl.u32 %v1435, 7
        %v1437 = vsub.s32 0, %v1436
        %v1438 = vrot.slane %v1433, %v1437
        %1440 = vmatprep.subr.mxu0 0.0
        %1441 = vmatpush1.msra.mxu0 %v1429
        %1442 = vmatprep.subr.mxu0 0.0
        %1443 = vmatpush1.msra.mxu0 %v1430
        %1444 = vmatprep.subr.mxu0 0.0
        %1445 = vmatpush1.msra.mxu0 %v1431
        %1446 = vmatprep.subr.mxu0 0.0
        %1447 = vmatpush1.msra.mxu0 %v1432
        %1448 = vmatprep.subr.mxu0 0.0
        %1449 = vmatpush1.msra.mxu0 0.0
        %1450 = vmatprep.subr.mxu0 0.0
        %1451 = vmatpush1.msra.mxu0 0.0
        %1452 = vmatprep.subr.mxu0 0.0
        %1453 = vmatpush1.msra.mxu0 0.0
        %1454 = vmatprep.subr.mxu0 0.0
        %1455 = vmatpush1.msra.mxu0 0.0
        %1456 = vmatprep.subr.mxu0 0.0
        %1457 = vmatpush1.msra.mxu0 0.0
        %1458 = vmatprep.subr.mxu0 0.0
        %1459 = vmatpush1.msra.mxu0 0.0
        %1460 = vmatprep.subr.mxu0 0.0
        %1461 = vmatpush1.msra.mxu0 0.0
        %1462 = vmatprep.subr.mxu0 0.0
        %1463 = vmatpush1.msra.mxu0 0.0
        %1464 = vmatprep.subr.mxu0 0.0
        %1465 = vmatpush1.msra.mxu0 0.0
        %1466 = vmatprep.subr.mxu0 0.0
        %1467 = vmatpush1.msra.mxu0 0.0
        %1468 = vmatprep.subr.mxu0 0.0
        %1469 = vmatpush1.msra.mxu0 0.0
        %1470 = vmatprep.subr.mxu0 0.0
        %1471 = vmatpush1.msra.mxu0 0.0
        %1472 = vmatprep.subr.mxu0 0.0
        %1473 = vmatpush1.msra.mxu0 0.0
        %1474 = vmatprep.subr.mxu0 0.0
        %1475 = vmatpush1.msra.mxu0 0.0
        %1476 = vmatprep.subr.mxu0 0.0
        %1477 = vmatpush1.msra.mxu0 0.0
        %1478 = vmatprep.subr.mxu0 0.0
        %1479 = vmatpush1.msra.mxu0 0.0
        %1480 = vmatprep.subr.mxu0 0.0
        %1481 = vmatpush1.msra.mxu0 0.0
        %1482 = vmatprep.subr.mxu0 0.0
        %1483 = vmatpush1.msra.mxu0 0.0
        %1484 = vmatprep.subr.mxu0 0.0
        %1485 = vmatpush1.msra.mxu0 0.0
        %1486 = vmatprep.subr.mxu0 0.0
        %1487 = vmatpush1.msra.mxu0 0.0
        %1488 = vmatprep.subr.mxu0 0.0
        %1489 = vmatpush1.msra.mxu0 0.0
        %1490 = vmatprep.subr.mxu0 0.0
        %1491 = vmatpush1.msra.mxu0 0.0
        %1492 = vmatprep.subr.mxu0 0.0
        %1493 = vmatpush1.msra.mxu0 0.0
        %1494 = vmatprep.subr.mxu0 0.0
        %1495 = vmatpush1.msra.mxu0 0.0
        %1496 = vmatprep.subr.mxu0 0.0
        %1497 = vmatpush1.msra.mxu0 0.0
        %1498 = vmatprep.subr.mxu0 0.0
        %1499 = vmatpush1.msra.mxu0 0.0
        %1500 = vmatprep.subr.mxu0 0.0
        %1501 = vmatpush1.msra.mxu0 0.0
        %1502 = vmatprep.subr.mxu0 0.0
        %1503 = vmatpush1.msra.mxu0 0.0
        %1504 = vmatprep.mubr.f32.mxu0 0.0
        %1505 = vmatmul.mubr.f32.gmra.mrb[0].mxu0 %v1357
        %v1506 = vpop.f32.mrb[0].mxu0
        %v1507 = vadd.f32 %v1438, %v1506
        %v1508 = vpop.f32.mrb[0].mxu0
        %1509 = vdwg.mxu0
        %v1510 = vld [vmem:[%s25] sm:$0xff]
        %v1511 = vld [vmem:[%s25 + $0x8] sm:$0xff]
        %v1512 = vld [vmem:[%s25 + $0x10] sm:$0xff]
        %v1513 = vld [vmem:[%s25 + $0x18] sm:$0xff]
        %v1514 = vld [vmem:[%s27] sm:$0x1]
        %v1516 = vlaneseq
        %v1517 = vshrl.u32 %v1516, 7
        %v1518 = vsub.s32 0, %v1517
        %v1519 = vrot.slane %v1514, %v1518
        %1521 = vmatprep.subr.mxu0 0.0
        %1522 = vmatpush1.msra.mxu0 %v1510
        %1523 = vmatprep.subr.mxu0 0.0
        %1524 = vmatpush1.msra.mxu0 %v1511
        %1525 = vmatprep.subr.mxu0 0.0
        %1526 = vmatpush1.msra.mxu0 %v1512
        %1527 = vmatprep.subr.mxu0 0.0
        %1528 = vmatpush1.msra.mxu0 %v1513
        %1529 = vmatprep.subr.mxu0 0.0
        %1530 = vmatpush1.msra.mxu0 0.0
        %1531 = vmatprep.subr.mxu0 0.0
        %1532 = vmatpush1.msra.mxu0 0.0
        %1533 = vmatprep.subr.mxu0 0.0
        %1534 = vmatpush1.msra.mxu0 0.0
        %1535 = vmatprep.subr.mxu0 0.0
        %1536 = vmatpush1.msra.mxu0 0.0
        %1537 = vmatprep.subr.mxu0 0.0
        %1538 = vmatpush1.msra.mxu0 0.0
        %1539 = vmatprep.subr.mxu0 0.0
        %1540 = vmatpush1.msra.mxu0 0.0
        %1541 = vmatprep.subr.mxu0 0.0
        %1542 = vmatpush1.msra.mxu0 0.0
        %1543 = vmatprep.subr.mxu0 0.0
        %1544 = vmatpush1.msra.mxu0 0.0
        %1545 = vmatprep.subr.mxu0 0.0
        %1546 = vmatpush1.msra.mxu0 0.0
        %1547 = vmatprep.subr.mxu0 0.0
        %1548 = vmatpush1.msra.mxu0 0.0
        %1549 = vmatprep.subr.mxu0 0.0
        %1550 = vmatpush1.msra.mxu0 0.0
        %1551 = vmatprep.subr.mxu0 0.0
        %1552 = vmatpush1.msra.mxu0 0.0
        %1553 = vmatprep.subr.mxu0 0.0
        %1554 = vmatpush1.msra.mxu0 0.0
        %1555 = vmatprep.subr.mxu0 0.0
        %1556 = vmatpush1.msra.mxu0 0.0
        %1557 = vmatprep.subr.mxu0 0.0
        %1558 = vmatpush1.msra.mxu0 0.0
        %1559 = vmatprep.subr.mxu0 0.0
        %1560 = vmatpush1.msra.mxu0 0.0
        %1561 = vmatprep.subr.mxu0 0.0
        %1562 = vmatpush1.msra.mxu0 0.0
        %1563 = vmatprep.subr.mxu0 0.0
        %1564 = vmatpush1.msra.mxu0 0.0
        %1565 = vmatprep.subr.mxu0 0.0
        %1566 = vmatpush1.msra.mxu0 0.0
        %1567 = vmatprep.subr.mxu0 0.0
        %1568 = vmatpush1.msra.mxu0 0.0
        %1569 = vmatprep.subr.mxu0 0.0
        %1570 = vmatpush1.msra.mxu0 0.0
        %1571 = vmatprep.subr.mxu0 0.0
        %1572 = vmatpush1.msra.mxu0 0.0
        %1573 = vmatprep.subr.mxu0 0.0
        %1574 = vmatpush1.msra.mxu0 0.0
        %1575 = vmatprep.subr.mxu0 0.0
        %1576 = vmatpush1.msra.mxu0 0.0
        %1577 = vmatprep.subr.mxu0 0.0
        %1578 = vmatpush1.msra.mxu0 0.0
        %1579 = vmatprep.subr.mxu0 0.0
        %1580 = vmatpush1.msra.mxu0 0.0
        %1581 = vmatprep.subr.mxu0 0.0
        %1582 = vmatpush1.msra.mxu0 0.0
        %1583 = vmatprep.subr.mxu0 0.0
        %1584 = vmatpush1.msra.mxu0 0.0
        %1585 = vmatprep.mubr.f32.mxu0 0.0
        %1586 = vmatmul.mubr.f32.gmra.mrb[0].mxu0 %v1357
        %v1587 = vpop.f32.mrb[0].mxu0
        %v1588 = vadd.f32 %v1519, %v1587
        %v1589 = vpop.f32.mrb[0].mxu0
        %1590 = vdwg.mxu0
        %v1591 = vmax.f32 %v1426, -60.0
        %v1592 = vmin.f32 %v1591, 30.0
        %v1593 = vmul.f32 %v1592, 1.442695
        %v1594 = vpow.pop %v1593
        %v1596 = vsel %vm1270, %v1146, 0
        %1598 = vmatprep.subr.mxu0 0.0
        %1599 = vmatpush1.msra.mxu0 %v1594
        %1600 = vmatprep.subr.mxu0 0.0
        %1601 = vmatpush1.msra.mxu0 0.0
        %1602 = vmatprep.subr.mxu0 0.0
        %1603 = vmatpush1.msra.mxu0 0.0
        %1604 = vmatprep.subr.mxu0 0.0
        %1605 = vmatpush1.msra.mxu0 0.0
        %1606 = vmatprep.subr.mxu0 0.0
        %1607 = vmatpush1.msra.mxu0 0.0
        %1608 = vmatprep.subr.mxu0 0.0
        %1609 = vmatpush1.msra.mxu0 0.0
        %1610 = vmatprep.subr.mxu0 0.0
        %1611 = vmatpush1.msra.mxu0 0.0
        %1612 = vmatprep.subr.mxu0 0.0
        %1613 = vmatpush1.msra.mxu0 0.0
        %1614 = vmatprep.subr.mxu0 0.0
        %1615 = vmatpush1.msra.mxu0 0.0
        %1616 = vmatprep.subr.mxu0 0.0
        %1617 = vmatpush1.msra.mxu0 0.0
        %1618 = vmatprep.subr.mxu0 0.0
        %1619 = vmatpush1.msra.mxu0 0.0
        %1620 = vmatprep.subr.mxu0 0.0
        %1621 = vmatpush1.msra.mxu0 0.0
        %1622 = vmatprep.subr.mxu0 0.0
        %1623 = vmatpush1.msra.mxu0 0.0
        %1624 = vmatprep.subr.mxu0 0.0
        %1625 = vmatpush1.msra.mxu0 0.0
        %1626 = vmatprep.subr.mxu0 0.0
        %1627 = vmatpush1.msra.mxu0 0.0
        %1628 = vmatprep.subr.mxu0 0.0
        %1629 = vmatpush1.msra.mxu0 0.0
        %1630 = vmatprep.subr.mxu0 0.0
        %1631 = vmatpush1.msra.mxu0 0.0
        %1632 = vmatprep.subr.mxu0 0.0
        %1633 = vmatpush1.msra.mxu0 0.0
        %1634 = vmatprep.subr.mxu0 0.0
        %1635 = vmatpush1.msra.mxu0 0.0
        %1636 = vmatprep.subr.mxu0 0.0
        %1637 = vmatpush1.msra.mxu0 0.0
        %1638 = vmatprep.subr.mxu0 0.0
        %1639 = vmatpush1.msra.mxu0 0.0
        %1640 = vmatprep.subr.mxu0 0.0
        %1641 = vmatpush1.msra.mxu0 0.0
        %1642 = vmatprep.subr.mxu0 0.0
        %1643 = vmatpush1.msra.mxu0 0.0
        %1644 = vmatprep.subr.mxu0 0.0
        %1645 = vmatpush1.msra.mxu0 0.0
        %1646 = vmatprep.subr.mxu0 0.0
        %1647 = vmatpush1.msra.mxu0 0.0
        %1648 = vmatprep.subr.mxu0 0.0
        %1649 = vmatpush1.msra.mxu0 0.0
        %1650 = vmatprep.subr.mxu0 0.0
        %1651 = vmatpush1.msra.mxu0 0.0
        %1652 = vmatprep.subr.mxu0 0.0
        %1653 = vmatpush1.msra.mxu0 0.0
        %1654 = vmatprep.subr.mxu0 0.0
        %1655 = vmatpush1.msra.mxu0 0.0
        %1656 = vmatprep.subr.mxu0 0.0
        %1657 = vmatpush1.msra.mxu0 0.0
        %1658 = vmatprep.subr.mxu0 0.0
        %1659 = vmatpush1.msra.mxu0 0.0
        %1660 = vmatprep.subr.mxu0 0.0
        %1661 = vmatpush1.msra.mxu0 0.0
        %1662 = vmatprep.mubr.f32.mxu0 0.0
        %1663 = vmatmul.mubr.f32.gmra.mrb[0].mxu0 %v1596
        %v1664 = vpop.f32.mrb[0].mxu0
        %v1665 = vadd.f32 0.0, %v1664
        %v1666 = vpop.f32.mrb[0].mxu0
        %1667 = vdwg.mxu0
        %v1668 = vmul.f32 %v1594, %v1507
        %v1669 = vld [vmem:[%s13] sm:$0xff]
        %v1670 = vld [vmem:[%s13 + $0x8] sm:$0xff]
        %v1671 = vld [vmem:[%s13 + $0x10] sm:$0xff]
        %v1672 = vld [vmem:[%s13 + $0x18] sm:$0xff]
        %v1673 = vld [vmem:[%s13 + $0x20] sm:$0xff]
        %v1674 = vld [vmem:[%s13 + $0x28] sm:$0xff]
        %v1675 = vld [vmem:[%s13 + $0x30] sm:$0xff]
        %v1676 = vld [vmem:[%s13 + $0x38] sm:$0xff]
        %v1677 = vmul.f32 %v1669, %v1668
        %v1678 = vmul.f32 %v1670, %v1668
        %v1679 = vmul.f32 %v1671, %v1668
        %v1680 = vmul.f32 %v1672, %v1668
        %v1681 = vmul.f32 %v1673, %v1668
        %v1682 = vmul.f32 %v1674, %v1668
        %v1683 = vmul.f32 %v1675, %v1668
        %v1684 = vmul.f32 %v1676, %v1668
        %v1685 = vsel %vm1241, %v1677, 0.0
        %v1686 = vrot.slane %v1685, 4
        %v1687 = vadd.f32 %v1685, %v1686
        %v1688 = vrot.slane %v1687, 2
        %v1689 = vadd.f32 %v1687, %v1688
        %v1690 = vrot.slane %v1689, 1
        %v1691 = vadd.f32 %v1689, %v1690
        %v1692 = vsel %vm1241, %v1678, 0.0
        %v1693 = vrot.slane %v1692, 4
        %v1694 = vadd.f32 %v1692, %v1693
        %v1695 = vrot.slane %v1694, 2
        %v1696 = vadd.f32 %v1694, %v1695
        %v1697 = vrot.slane %v1696, 1
        %v1698 = vadd.f32 %v1696, %v1697
        %v1699 = vsel %vm1241, %v1679, 0.0
        %v1700 = vrot.slane %v1699, 4
        %v1701 = vadd.f32 %v1699, %v1700
        %v1702 = vrot.slane %v1701, 2
        %v1703 = vadd.f32 %v1701, %v1702
        %v1704 = vrot.slane %v1703, 1
        %v1705 = vadd.f32 %v1703, %v1704
        %v1706 = vsel %vm1241, %v1680, 0.0
        %v1707 = vrot.slane %v1706, 4
        %v1708 = vadd.f32 %v1706, %v1707
        %v1709 = vrot.slane %v1708, 2
        %v1710 = vadd.f32 %v1708, %v1709
        %v1711 = vrot.slane %v1710, 1
        %v1712 = vadd.f32 %v1710, %v1711
        %v1713 = vsel %vm1241, %v1681, 0.0
        %v1714 = vrot.slane %v1713, 4
        %v1715 = vadd.f32 %v1713, %v1714
        %v1716 = vrot.slane %v1715, 2
        %v1717 = vadd.f32 %v1715, %v1716
        %v1718 = vrot.slane %v1717, 1
        %v1719 = vadd.f32 %v1717, %v1718
        %v1720 = vsel %vm1241, %v1682, 0.0
        %v1721 = vrot.slane %v1720, 4
        %v1722 = vadd.f32 %v1720, %v1721
        %v1723 = vrot.slane %v1722, 2
        %v1724 = vadd.f32 %v1722, %v1723
        %v1725 = vrot.slane %v1724, 1
        %v1726 = vadd.f32 %v1724, %v1725
        %v1727 = vsel %vm1241, %v1683, 0.0
        %v1728 = vrot.slane %v1727, 4
        %v1729 = vadd.f32 %v1727, %v1728
        %v1730 = vrot.slane %v1729, 2
        %v1731 = vadd.f32 %v1729, %v1730
        %v1732 = vrot.slane %v1731, 1
        %v1733 = vadd.f32 %v1731, %v1732
        %v1734 = vsel %vm1241, %v1684, 0.0
        %v1735 = vrot.slane %v1734, 4
        %v1736 = vadd.f32 %v1734, %v1735
        %v1737 = vrot.slane %v1736, 2
        %v1738 = vadd.f32 %v1736, %v1737
        %v1739 = vrot.slane %v1738, 1
        %v1740 = vadd.f32 %v1738, %v1739
        %v1741 = vxor.u32 %v1588, 2147483648
        %v1742 = vmul.f32 %v1741, 1.442695
        %v1743 = vpow.pop %v1742
        %v1744 = vadd.f32 %v1743, 1.0
        %v1745 = vrcp.pop %v1744
        %v1746 = vmul.f32 1.0, %v1745
        %vm1755 = vcmask 1041409
        %v1756 = vsel %vm1755, %v1698, %v1691
        %vm1757 = vcmask 1042434
        %v1758 = vsel %vm1757, %v1705, %v1756
        %vm1759 = vcmask 1043459
        %v1760 = vsel %vm1759, %v1712, %v1758
        %vm1761 = vcmask 1044484
        %v1762 = vsel %vm1761, %v1719, %v1760
        %vm1763 = vcmask 1045509
        %v1764 = vsel %vm1763, %v1726, %v1762
        %vm1765 = vcmask 1046534
        %v1766 = vsel %vm1765, %v1733, %v1764
        %vm1767 = vcmask 1047559
        %v1768 = vsel %vm1767, %v1740, %v1766
        %v1770 = vmul.f32 %v1746, %v1768
        %v1771 = vrcp.pop %v1665
        %v1772 = vmul.f32 %v1770, %v1771
        %v1773 = vld [vmem:[%s29] sm:$0xff]
        %v1774 = vld [vmem:[%s29 + $0x8] sm:$0xff]
        %v1775 = vld [vmem:[%s29 + $0x10] sm:$0xff]
        %v1776 = vld [vmem:[%s29 + $0x18] sm:$0xff]
        %v1777 = vld [vmem:[%s31] sm:$0x1]
        %v1779 = vlaneseq
        %v1780 = vshrl.u32 %v1779, 7
        %v1781 = vsub.s32 0, %v1780
        %v1782 = vrot.slane %v1777, %v1781
        %v1785 = vsel %vm1241, %v1772, 0
        %1787 = vmatprep.subr.mxu0 0.0
        %1788 = vmatpush1.msra.mxu0 %v1773
        %1789 = vmatprep.subr.mxu0 0.0
        %1790 = vmatpush1.msra.mxu0 %v1774
        %1791 = vmatprep.subr.mxu0 0.0
        %1792 = vmatpush1.msra.mxu0 %v1775
        %1793 = vmatprep.subr.mxu0 0.0
        %1794 = vmatpush1.msra.mxu0 %v1776
        %1795 = vmatprep.subr.mxu0 0.0
        %1796 = vmatpush1.msra.mxu0 0.0
        %1797 = vmatprep.subr.mxu0 0.0
        %1798 = vmatpush1.msra.mxu0 0.0
        %1799 = vmatprep.subr.mxu0 0.0
        %1800 = vmatpush1.msra.mxu0 0.0
        %1801 = vmatprep.subr.mxu0 0.0
        %1802 = vmatpush1.msra.mxu0 0.0
        %1803 = vmatprep.subr.mxu0 0.0
        %1804 = vmatpush1.msra.mxu0 0.0
        %1805 = vmatprep.subr.mxu0 0.0
        %1806 = vmatpush1.msra.mxu0 0.0
        %1807 = vmatprep.subr.mxu0 0.0
        %1808 = vmatpush1.msra.mxu0 0.0
        %1809 = vmatprep.subr.mxu0 0.0
        %1810 = vmatpush1.msra.mxu0 0.0
        %1811 = vmatprep.subr.mxu0 0.0
        %1812 = vmatpush1.msra.mxu0 0.0
        %1813 = vmatprep.subr.mxu0 0.0
        %1814 = vmatpush1.msra.mxu0 0.0
        %1815 = vmatprep.subr.mxu0 0.0
        %1816 = vmatpush1.msra.mxu0 0.0
        %1817 = vmatprep.subr.mxu0 0.0
        %1818 = vmatpush1.msra.mxu0 0.0
        %1819 = vmatprep.subr.mxu0 0.0
        %1820 = vmatpush1.msra.mxu0 0.0
        %1821 = vmatprep.subr.mxu0 0.0
        %1822 = vmatpush1.msra.mxu0 0.0
        %1823 = vmatprep.subr.mxu0 0.0
        %1824 = vmatpush1.msra.mxu0 0.0
        %1825 = vmatprep.subr.mxu0 0.0
        %1826 = vmatpush1.msra.mxu0 0.0
        %1827 = vmatprep.subr.mxu0 0.0
        %1828 = vmatpush1.msra.mxu0 0.0
        %1829 = vmatprep.subr.mxu0 0.0
        %1830 = vmatpush1.msra.mxu0 0.0
        %1831 = vmatprep.subr.mxu0 0.0
        %1832 = vmatpush1.msra.mxu0 0.0
        %1833 = vmatprep.subr.mxu0 0.0
        %1834 = vmatpush1.msra.mxu0 0.0
        %1835 = vmatprep.subr.mxu0 0.0
        %1836 = vmatpush1.msra.mxu0 0.0
        %1837 = vmatprep.subr.mxu0 0.0
        %1838 = vmatpush1.msra.mxu0 0.0
        %1839 = vmatprep.subr.mxu0 0.0
        %1840 = vmatpush1.msra.mxu0 0.0
        %1841 = vmatprep.subr.mxu0 0.0
        %1842 = vmatpush1.msra.mxu0 0.0
        %1843 = vmatprep.subr.mxu0 0.0
        %1844 = vmatpush1.msra.mxu0 0.0
        %1845 = vmatprep.subr.mxu0 0.0
        %1846 = vmatpush1.msra.mxu0 0.0
        %1847 = vmatprep.subr.mxu0 0.0
        %1848 = vmatpush1.msra.mxu0 0.0
        %1849 = vmatprep.subr.mxu0 0.0
        %1850 = vmatpush1.msra.mxu0 0.0
        %1851 = vmatprep.mubr.f32.mxu0 0.0
        %1852 = vmatmul.mubr.f32.gmra.mrb[0].mxu0 %v1785
        %v1853 = vpop.f32.mrb[0].mxu0
        %v1854 = vadd.f32 %v1782, %v1853
        %v1855 = vpop.f32.mrb[0].mxu0
        %1856 = vdwg.mxu0
        %v1857 = vld [vmem:[%s15] sm:$0xff]
        %1859 = vset.pattern.permute.xlu0 0
        %1860 = vperm.xlu0 %1859, %v1857
        %v1861 = vpop.permute.xlu0 %1860
        %v1863 = vmul.f32 %v1854, %v1861
        %v1864 = vadd.f32 %v1236, %v1863
        %v1865 = vld [vmem:[%s9] sm:$0x1]
        %v1866 = vld [vmem:[%s11] sm:$0x1]
        %v1867 = vsel %vm1241, %v1864, 0.0
        %1868 = vadd.xlane.f32.xlu0 %v1867
        %v1869 = vpop.xlane.xlu0 %1868
        %v1870 = vmul.f32 %v1869, %v1245
        %v1871 = vsub.f32 %v1864, %v1870
        %v1872 = vmul.f32 %v1871, %v1871
        %v1873 = vsel %vm1241, %v1872, 0.0
        %1874 = vadd.xlane.f32.xlu0 %v1873
        %v1875 = vpop.xlane.xlu0 %1874
        %v1876 = vmul.f32 %v1875, %v1245
        %v1877 = vadd.f32 %v1876, 1e-05
        %v1878 = vrsqrt.pop %v1877
        %v1879 = vmul.f32 %v1871, %v1878
        %v1881 = vlaneseq
        %v1882 = vshrl.u32 %v1881, 7
        %v1883 = vsub.s32 0, %v1882
        %v1884 = vrot.slane %v1865, %v1883
        %v1886 = vmul.f32 %v1879, %v1884
        %v1888 = vlaneseq
        %v1889 = vshrl.u32 %v1888, 7
        %v1890 = vsub.s32 0, %v1889
        %v1891 = vrot.slane %v1866, %v1890
        %v1893 = vadd.f32 %v1886, %v1891
        %1894 = vmatprep.subr.mxu0 0.0
        %1895 = vmatpush1.msra.mxu0 %v1893
        %1896 = vmatprep.subr.mxu0 0.0
        %1897 = vmatpush1.msra.mxu0 0.0
        %1898 = vmatprep.subr.mxu0 0.0
        %1899 = vmatpush1.msra.mxu0 0.0
        %1900 = vmatprep.subr.mxu0 0.0
        %1901 = vmatpush1.msra.mxu0 0.0
        %1902 = vmatprep.subr.mxu0 0.0
        %1903 = vmatpush1.msra.mxu0 0.0
        %1904 = vmatprep.subr.mxu0 0.0
        %1905 = vmatpush1.msra.mxu0 0.0
        %1906 = vmatprep.subr.mxu0 0.0
        %1907 = vmatpush1.msra.mxu0 0.0
        %1908 = vmatprep.subr.mxu0 0.0
        %1909 = vmatpush1.msra.mxu0 0.0
        %1910 = vmatprep.subr.mxu0 0.0
        %1911 = vmatpush1.msra.mxu0 0.0
        %1912 = vmatprep.subr.mxu0 0.0
        %1913 = vmatpush1.msra.mxu0 0.0
        %1914 = vmatprep.subr.mxu0 0.0
        %1915 = vmatpush1.msra.mxu0 0.0
        %1916 = vmatprep.subr.mxu0 0.0
        %1917 = vmatpush1.msra.mxu0 0.0
        %1918 = vmatprep.subr.mxu0 0.0
        %1919 = vmatpush1.msra.mxu0 0.0
        %1920 = vmatprep.subr.mxu0 0.0
        %1921 = vmatpush1.msra.mxu0 0.0
        %1922 = vmatprep.subr.mxu0 0.0
        %1923 = vmatpush1.msra.mxu0 0.0
        %1924 = vmatprep.subr.mxu0 0.0
        %1925 = vmatpush1.msra.mxu0 0.0
        %1926 = vmatprep.subr.mxu0 0.0
        %1927 = vmatpush1.msra.mxu0 0.0
        %1928 = vmatprep.subr.mxu0 0.0
        %1929 = vmatpush1.msra.mxu0 0.0
        %1930 = vmatprep.subr.mxu0 0.0
        %1931 = vmatpush1.msra.mxu0 0.0
        %1932 = vmatprep.subr.mxu0 0.0
        %1933 = vmatpush1.msra.mxu0 0.0
        %1934 = vmatprep.subr.mxu0 0.0
        %1935 = vmatpush1.msra.mxu0 0.0
        %1936 = vmatprep.subr.mxu0 0.0
        %1937 = vmatpush1.msra.mxu0 0.0
        %1938 = vmatprep.subr.mxu0 0.0
        %1939 = vmatpush1.msra.mxu0 0.0
        %1940 = vmatprep.subr.mxu0 0.0
        %1941 = vmatpush1.msra.mxu0 0.0
        %1942 = vmatprep.subr.mxu0 0.0
        %1943 = vmatpush1.msra.mxu0 0.0
        %1944 = vmatprep.subr.mxu0 0.0
        %1945 = vmatpush1.msra.mxu0 0.0
        %1946 = vmatprep.subr.mxu0 0.0
        %1947 = vmatpush1.msra.mxu0 0.0
        %1948 = vmatprep.subr.mxu0 0.0
        %1949 = vmatpush1.msra.mxu0 0.0
        %1950 = vmatprep.subr.mxu0 0.0
        %1951 = vmatpush1.msra.mxu0 0.0
        %1952 = vmatprep.subr.mxu0 0.0
        %1953 = vmatpush1.msra.mxu0 0.0
        %1954 = vmatprep.subr.mxu0 0.0
        %1955 = vmatpush1.msra.mxu0 0.0
        %1956 = vmatprep.subr.mxu0 0.0
        %1957 = vmatpush1.msra.mxu0 0.0
        %1958 = vmatprep.mubr.f32.mxu0 0.0
        %1959 = vmatmul.mubr.f32.gmra.mrb[0].mxu0 %v1272
        %v1960 = vpop.f32.mrb[0].mxu0
        %v1961 = vadd.f32 0.0, %v1960
        %v1962 = vpop.f32.mrb[0].mxu0
        %1963 = vdwg.mxu0
        %v1964 = vsel %vm1151, %v1961, %v1893
        %v1965 = vld [vmem:[#allocation2] sm:$0xff]
        %v1966 = vld [vmem:[#allocation2 + $0x8] sm:$0xff]
        %v1967 = vld [vmem:[#allocation2 + $0x10] sm:$0xff]
        %v1968 = vld [vmem:[#allocation2 + $0x18] sm:$0xff]
        %v1969 = vld [vmem:[#allocation5] sm:$0x1]
        %v1971 = vlaneseq
        %v1972 = vshrl.u32 %v1971, 7
        %v1973 = vsub.s32 0, %v1972
        %v1974 = vrot.slane %v1969, %v1973
        %v1977 = vsel %vm1241, %v1964, 0
        %1979 = vmatprep.subr.mxu0 0.0
        %1980 = vmatpush1.msra.mxu0 %v1965
        %1981 = vmatprep.subr.mxu0 0.0
        %1982 = vmatpush1.msra.mxu0 %v1966
        %1983 = vmatprep.subr.mxu0 0.0
        %1984 = vmatpush1.msra.mxu0 %v1967
        %1985 = vmatprep.subr.mxu0 0.0
        %1986 = vmatpush1.msra.mxu0 %v1968
        %1987 = vmatprep.subr.mxu0 0.0
        %1988 = vmatpush1.msra.mxu0 0.0
        %1989 = vmatprep.subr.mxu0 0.0
        %1990 = vmatpush1.msra.mxu0 0.0
        %1991 = vmatprep.subr.mxu0 0.0
        %1992 = vmatpush1.msra.mxu0 0.0
        %1993 = vmatprep.subr.mxu0 0.0
        %1994 = vmatpush1.msra.mxu0 0.0
        %1995 = vmatprep.subr.mxu0 0.0
        %1996 = vmatpush1.msra.mxu0 0.0
        %1997 = vmatprep.subr.mxu0 0.0
        %1998 = vmatpush1.msra.mxu0 0.0
        %1999 = vmatprep.subr.mxu0 0.0
        %2000 = vmatpush1.msra.mxu0 0.0
        %2001 = vmatprep.subr.mxu0 0.0
        %2002 = vmatpush1.msra.mxu0 0.0
        %2003 = vmatprep.subr.mxu0 0.0
        %2004 = vmatpush1.msra.mxu0 0.0
        %2005 = vmatprep.subr.mxu0 0.0
        %2006 = vmatpush1.msra.mxu0 0.0
        %2007 = vmatprep.subr.mxu0 0.0
        %2008 = vmatpush1.msra.mxu0 0.0
        %2009 = vmatprep.subr.mxu0 0.0
        %2010 = vmatpush1.msra.mxu0 0.0
        %2011 = vmatprep.subr.mxu0 0.0
        %2012 = vmatpush1.msra.mxu0 0.0
        %2013 = vmatprep.subr.mxu0 0.0
        %2014 = vmatpush1.msra.mxu0 0.0
        %2015 = vmatprep.subr.mxu0 0.0
        %2016 = vmatpush1.msra.mxu0 0.0
        %2017 = vmatprep.subr.mxu0 0.0
        %2018 = vmatpush1.msra.mxu0 0.0
        %2019 = vmatprep.subr.mxu0 0.0
        %2020 = vmatpush1.msra.mxu0 0.0
        %2021 = vmatprep.subr.mxu0 0.0
        %2022 = vmatpush1.msra.mxu0 0.0
        %2023 = vmatprep.subr.mxu0 0.0
        %2024 = vmatpush1.msra.mxu0 0.0
        %2025 = vmatprep.subr.mxu0 0.0
        %2026 = vmatpush1.msra.mxu0 0.0
        %2027 = vmatprep.subr.mxu0 0.0
        %2028 = vmatpush1.msra.mxu0 0.0
        %2029 = vmatprep.subr.mxu0 0.0
        %2030 = vmatpush1.msra.mxu0 0.0
        %2031 = vmatprep.subr.mxu0 0.0
        %2032 = vmatpush1.msra.mxu0 0.0
        %2033 = vmatprep.subr.mxu0 0.0
        %2034 = vmatpush1.msra.mxu0 0.0
        %2035 = vmatprep.subr.mxu0 0.0
        %2036 = vmatpush1.msra.mxu0 0.0
        %2037 = vmatprep.subr.mxu0 0.0
        %2038 = vmatpush1.msra.mxu0 0.0
        %2039 = vmatprep.subr.mxu0 0.0
        %2040 = vmatpush1.msra.mxu0 0.0
        %2041 = vmatprep.subr.mxu0 0.0
        %2042 = vmatpush1.msra.mxu0 0.0
        %2043 = vmatprep.mubr.f32.mxu0 0.0
        %2044 = vmatmul.mubr.f32.gmra.mrb[0].mxu0 %v1977
        %v2045 = vpop.f32.mrb[0].mxu0
        %v2046 = vadd.f32 %v1974, %v2045
        %v2047 = vpop.f32.mrb[0].mxu0
        %2048 = vdwg.mxu0
        %v2049 = vld [vmem:[#allocation7] sm:$0xff]
        %v2050 = vld [vmem:[#allocation7 + $0x8] sm:$0xff]
        %v2051 = vld [vmem:[#allocation7 + $0x10] sm:$0xff]
        %v2052 = vld [vmem:[#allocation7 + $0x18] sm:$0xff]
        %v2053 = vld [vmem:[#allocation8] sm:$0x1]
        %v2055 = vlaneseq
        %v2056 = vshrl.u32 %v2055, 7
        %v2057 = vsub.s32 0, %v2056
        %v2058 = vrot.slane %v2053, %v2057
        %2060 = vmatprep.subr.mxu0 0.0
        %2061 = vmatpush1.msra.mxu0 %v2049
        %2062 = vmatprep.subr.mxu0 0.0
        %2063 = vmatpush1.msra.mxu0 %v2050
        %2064 = vmatprep.subr.mxu0 0.0
        %2065 = vmatpush1.msra.mxu0 %v2051
        %2066 = vmatprep.subr.mxu0 0.0
        %2067 = vmatpush1.msra.mxu0 %v2052
        %2068 = vmatprep.subr.mxu0 0.0
        %2069 = vmatpush1.msra.mxu0 0.0
        %2070 = vmatprep.subr.mxu0 0.0
        %2071 = vmatpush1.msra.mxu0 0.0
        %2072 = vmatprep.subr.mxu0 0.0
        %2073 = vmatpush1.msra.mxu0 0.0
        %2074 = vmatprep.subr.mxu0 0.0
        %2075 = vmatpush1.msra.mxu0 0.0
        %2076 = vmatprep.subr.mxu0 0.0
        %2077 = vmatpush1.msra.mxu0 0.0
        %2078 = vmatprep.subr.mxu0 0.0
        %2079 = vmatpush1.msra.mxu0 0.0
        %2080 = vmatprep.subr.mxu0 0.0
        %2081 = vmatpush1.msra.mxu0 0.0
        %2082 = vmatprep.subr.mxu0 0.0
        %2083 = vmatpush1.msra.mxu0 0.0
        %2084 = vmatprep.subr.mxu0 0.0
        %2085 = vmatpush1.msra.mxu0 0.0
        %2086 = vmatprep.subr.mxu0 0.0
        %2087 = vmatpush1.msra.mxu0 0.0
        %2088 = vmatprep.subr.mxu0 0.0
        %2089 = vmatpush1.msra.mxu0 0.0
        %2090 = vmatprep.subr.mxu0 0.0
        %2091 = vmatpush1.msra.mxu0 0.0
        %2092 = vmatprep.subr.mxu0 0.0
        %2093 = vmatpush1.msra.mxu0 0.0
        %2094 = vmatprep.subr.mxu0 0.0
        %2095 = vmatpush1.msra.mxu0 0.0
        %2096 = vmatprep.subr.mxu0 0.0
        %2097 = vmatpush1.msra.mxu0 0.0
        %2098 = vmatprep.subr.mxu0 0.0
        %2099 = vmatpush1.msra.mxu0 0.0
        %2100 = vmatprep.subr.mxu0 0.0
        %2101 = vmatpush1.msra.mxu0 0.0
        %2102 = vmatprep.subr.mxu0 0.0
        %2103 = vmatpush1.msra.mxu0 0.0
        %2104 = vmatprep.subr.mxu0 0.0
        %2105 = vmatpush1.msra.mxu0 0.0
        %2106 = vmatprep.subr.mxu0 0.0
        %2107 = vmatpush1.msra.mxu0 0.0
        %2108 = vmatprep.subr.mxu0 0.0
        %2109 = vmatpush1.msra.mxu0 0.0
        %2110 = vmatprep.subr.mxu0 0.0
        %2111 = vmatpush1.msra.mxu0 0.0
        %2112 = vmatprep.subr.mxu0 0.0
        %2113 = vmatpush1.msra.mxu0 0.0
        %2114 = vmatprep.subr.mxu0 0.0
        %2115 = vmatpush1.msra.mxu0 0.0
        %2116 = vmatprep.subr.mxu0 0.0
        %2117 = vmatpush1.msra.mxu0 0.0
        %2118 = vmatprep.subr.mxu0 0.0
        %2119 = vmatpush1.msra.mxu0 0.0
        %2120 = vmatprep.subr.mxu0 0.0
        %2121 = vmatpush1.msra.mxu0 0.0
        %2122 = vmatprep.subr.mxu0 0.0
        %2123 = vmatpush1.msra.mxu0 0.0
        %2124 = vmatprep.mubr.f32.mxu0 0.0
        %2125 = vmatmul.mubr.f32.gmra.mrb[0].mxu0 %v1977
        %v2126 = vpop.f32.mrb[0].mxu0
        %v2127 = vadd.f32 %v2058, %v2126
        %v2128 = vpop.f32.mrb[0].mxu0
        %2129 = vdwg.mxu0
        %v2130 = vld [vmem:[#allocation10] sm:$0xff]
        %v2131 = vld [vmem:[#allocation10 + $0x8] sm:$0xff]
        %v2132 = vld [vmem:[#allocation10 + $0x10] sm:$0xff]
        %v2133 = vld [vmem:[#allocation10 + $0x18] sm:$0xff]
        %v2134 = vld [vmem:[#allocation11] sm:$0x1]
        %v2136 = vlaneseq
        %v2137 = vshrl.u32 %v2136, 7
        %v2138 = vsub.s32 0, %v2137
        %v2139 = vrot.slane %v2134, %v2138
        %2141 = vmatprep.subr.mxu0 0.0
        %2142 = vmatpush1.msra.mxu0 %v2130
        %2143 = vmatprep.subr.mxu0 0.0
        %2144 = vmatpush1.msra.mxu0 %v2131
        %2145 = vmatprep.subr.mxu0 0.0
        %2146 = vmatpush1.msra.mxu0 %v2132
        %2147 = vmatprep.subr.mxu0 0.0
        %2148 = vmatpush1.msra.mxu0 %v2133
        %2149 = vmatprep.subr.mxu0 0.0
        %2150 = vmatpush1.msra.mxu0 0.0
        %2151 = vmatprep.subr.mxu0 0.0
        %2152 = vmatpush1.msra.mxu0 0.0
        %2153 = vmatprep.subr.mxu0 0.0
        %2154 = vmatpush1.msra.mxu0 0.0
        %2155 = vmatprep.subr.mxu0 0.0
        %2156 = vmatpush1.msra.mxu0 0.0
        %2157 = vmatprep.subr.mxu0 0.0
        %2158 = vmatpush1.msra.mxu0 0.0
        %2159 = vmatprep.subr.mxu0 0.0
        %2160 = vmatpush1.msra.mxu0 0.0
        %2161 = vmatprep.subr.mxu0 0.0
        %2162 = vmatpush1.msra.mxu0 0.0
        %2163 = vmatprep.subr.mxu0 0.0
        %2164 = vmatpush1.msra.mxu0 0.0
        %2165 = vmatprep.subr.mxu0 0.0
        %2166 = vmatpush1.msra.mxu0 0.0
        %2167 = vmatprep.subr.mxu0 0.0
        %2168 = vmatpush1.msra.mxu0 0.0
        %2169 = vmatprep.subr.mxu0 0.0
        %2170 = vmatpush1.msra.mxu0 0.0
        %2171 = vmatprep.subr.mxu0 0.0
        %2172 = vmatpush1.msra.mxu0 0.0
        %2173 = vmatprep.subr.mxu0 0.0
        %2174 = vmatpush1.msra.mxu0 0.0
        %2175 = vmatprep.subr.mxu0 0.0
        %2176 = vmatpush1.msra.mxu0 0.0
        %2177 = vmatprep.subr.mxu0 0.0
        %2178 = vmatpush1.msra.mxu0 0.0
        %2179 = vmatprep.subr.mxu0 0.0
        %2180 = vmatpush1.msra.mxu0 0.0
        %2181 = vmatprep.subr.mxu0 0.0
        %2182 = vmatpush1.msra.mxu0 0.0
        %2183 = vmatprep.subr.mxu0 0.0
        %2184 = vmatpush1.msra.mxu0 0.0
        %2185 = vmatprep.subr.mxu0 0.0
        %2186 = vmatpush1.msra.mxu0 0.0
        %2187 = vmatprep.subr.mxu0 0.0
        %2188 = vmatpush1.msra.mxu0 0.0
        %2189 = vmatprep.subr.mxu0 0.0
        %2190 = vmatpush1.msra.mxu0 0.0
        %2191 = vmatprep.subr.mxu0 0.0
        %2192 = vmatpush1.msra.mxu0 0.0
        %2193 = vmatprep.subr.mxu0 0.0
        %2194 = vmatpush1.msra.mxu0 0.0
        %2195 = vmatprep.subr.mxu0 0.0
        %2196 = vmatpush1.msra.mxu0 0.0
        %2197 = vmatprep.subr.mxu0 0.0
        %2198 = vmatpush1.msra.mxu0 0.0
        %2199 = vmatprep.subr.mxu0 0.0
        %2200 = vmatpush1.msra.mxu0 0.0
        %2201 = vmatprep.subr.mxu0 0.0
        %2202 = vmatpush1.msra.mxu0 0.0
        %2203 = vmatprep.subr.mxu0 0.0
        %2204 = vmatpush1.msra.mxu0 0.0
        %2205 = vmatprep.mubr.f32.mxu0 0.0
        %2206 = vmatmul.mubr.f32.gmra.mrb[0].mxu0 %v1977
        %v2207 = vpop.f32.mrb[0].mxu0
        %v2208 = vadd.f32 %v2139, %v2207
        %v2209 = vpop.f32.mrb[0].mxu0
        %2210 = vdwg.mxu0
        %v2211 = vmax.f32 %v2046, 0.0
        %v2212 = vand.u32 2147483647, %v2046
        %v2213 = vsub.f32 0.0, %v2212
        %v2214 = vmul.f32 %v2213, 1.442695
        %v2215 = vpow.pop %v2214
        %v2216 = vadd.f32 %v2215, 1.0
        %v2217 = vlog2.pop %v2216
        %v2218 = vmul.f32 %v2217, 0.6931472
        %v2219 = vadd.f32 %v2211, %v2218
        %v2220 = vtanh.pop %v2219
        %v2221 = vmul.f32 %v2046, %v2220
        %v2222 = vmul.f32 %v2221, %v2127
        %v2223 = vld [vmem:[%s45] sm:$0xff]
        %v2224 = vld [vmem:[%s45 + $0x8] sm:$0xff]
        %v2225 = vld [vmem:[%s45 + $0x10] sm:$0xff]
        %v2226 = vld [vmem:[%s45 + $0x18] sm:$0xff]
        %v2227 = vld [vmem:[%s45 + $0x20] sm:$0xff]
        %v2228 = vld [vmem:[%s45 + $0x28] sm:$0xff]
        %v2229 = vld [vmem:[%s45 + $0x30] sm:$0xff]
        %v2230 = vld [vmem:[%s45 + $0x38] sm:$0xff]
        %v2231 = vld [vmem:[%s45 + $0x40] sm:$0xff]
        %v2232 = vld [vmem:[%s45 + $0x48] sm:$0xff]
        %v2233 = vld [vmem:[#allocation13] sm:$0x1]
        %v2235 = vlaneseq
        %v2236 = vshrl.u32 %v2235, 7
        %v2237 = vsub.s32 0, %v2236
        %v2238 = vrot.slane %v2233, %v2237
        %vm2240 = vcmask 654336
        %v2242 = vsel %vm2240, %v2222, 0
        %2244 = vmatprep.subr.mxu0 0.0
        %2245 = vmatpush1.msra.mxu0 %v2223
        %2246 = vmatprep.subr.mxu0 0.0
        %2247 = vmatpush1.msra.mxu0 %v2224
        %2248 = vmatprep.subr.mxu0 0.0
        %2249 = vmatpush1.msra.mxu0 %v2225
        %2250 = vmatprep.subr.mxu0 0.0
        %2251 = vmatpush1.msra.mxu0 %v2226
        %2252 = vmatprep.subr.mxu0 0.0
        %2253 = vmatpush1.msra.mxu0 %v2227
        %2254 = vmatprep.subr.mxu0 0.0
        %2255 = vmatpush1.msra.mxu0 %v2228
        %2256 = vmatprep.subr.mxu0 0.0
        %2257 = vmatpush1.msra.mxu0 %v2229
        %2258 = vmatprep.subr.mxu0 0.0
        %2259 = vmatpush1.msra.mxu0 %v2230
        %2260 = vmatprep.subr.mxu0 0.0
        %2261 = vmatpush1.msra.mxu0 %v2231
        %2262 = vmatprep.subr.mxu0 0.0
        %2263 = vmatpush1.msra.mxu0 %v2232
        %2264 = vmatprep.subr.mxu0 0.0
        %2265 = vmatpush1.msra.mxu0 0.0
        %2266 = vmatprep.subr.mxu0 0.0
        %2267 = vmatpush1.msra.mxu0 0.0
        %2268 = vmatprep.subr.mxu0 0.0
        %2269 = vmatpush1.msra.mxu0 0.0
        %2270 = vmatprep.subr.mxu0 0.0
        %2271 = vmatpush1.msra.mxu0 0.0
        %2272 = vmatprep.subr.mxu0 0.0
        %2273 = vmatpush1.msra.mxu0 0.0
        %2274 = vmatprep.subr.mxu0 0.0
        %2275 = vmatpush1.msra.mxu0 0.0
        %2276 = vmatprep.subr.mxu0 0.0
        %2277 = vmatpush1.msra.mxu0 0.0
        %2278 = vmatprep.subr.mxu0 0.0
        %2279 = vmatpush1.msra.mxu0 0.0
        %2280 = vmatprep.subr.mxu0 0.0
        %2281 = vmatpush1.msra.mxu0 0.0
        %2282 = vmatprep.subr.mxu0 0.0
        %2283 = vmatpush1.msra.mxu0 0.0
        %2284 = vmatprep.subr.mxu0 0.0
        %2285 = vmatpush1.msra.mxu0 0.0
        %2286 = vmatprep.subr.mxu0 0.0
        %2287 = vmatpush1.msra.mxu0 0.0
        %2288 = vmatprep.subr.mxu0 0.0
        %2289 = vmatpush1.msra.mxu0 0.0
        %2290 = vmatprep.subr.mxu0 0.0
        %2291 = vmatpush1.msra.mxu0 0.0
        %2292 = vmatprep.subr.mxu0 0.0
        %2293 = vmatpush1.msra.mxu0 0.0
        %2294 = vmatprep.subr.mxu0 0.0
        %2295 = vmatpush1.msra.mxu0 0.0
        %2296 = vmatprep.subr.mxu0 0.0
        %2297 = vmatpush1.msra.mxu0 0.0
        %2298 = vmatprep.subr.mxu0 0.0
        %2299 = vmatpush1.msra.mxu0 0.0
        %2300 = vmatprep.subr.mxu0 0.0
        %2301 = vmatpush1.msra.mxu0 0.0
        %2302 = vmatprep.subr.mxu0 0.0
        %2303 = vmatpush1.msra.mxu0 0.0
        %2304 = vmatprep.subr.mxu0 0.0
        %2305 = vmatpush1.msra.mxu0 0.0
        %2306 = vmatprep.subr.mxu0 0.0
        %2307 = vmatpush1.msra.mxu0 0.0
        %2308 = vmatprep.mubr.f32.mxu0 0.0
        %2309 = vmatmul.mubr.f32.gmra.mrb[0].mxu0 %v2242
        %v2310 = vpop.f32.mrb[0].mxu0
        %v2311 = vadd.f32 %v2238, %v2310
        %v2312 = vpop.f32.mrb[0].mxu0
        %2313 = vdwg.mxu0
        %v2314 = vxor.u32 %v2208, 2147483648
        %v2315 = vmul.f32 %v2314, 1.442695
        %v2316 = vpow.pop %v2315
        %v2317 = vadd.f32 %v2316, 1.0
        %v2318 = vrcp.pop %v2317
        %v2319 = vmul.f32 1.0, %v2318
        %v2320 = vmul.f32 %v2319, %v2311
        %v2321 = vadd.f32 %v1864, %v2320
        %s2322 = scalar_lea.vmem %s5, 1
        %v2323 = vld [vmem:[%s2322] sm:$0x1]
        %s2324 = scalar_lea.vmem %s7, 1
        %v2325 = vld [vmem:[%s2324] sm:$0x1]
        %v2326 = vsel %vm1241, %v2321, 0.0
        %2327 = vadd.xlane.f32.xlu0 %v2326
        %v2328 = vpop.xlane.xlu0 %2327
        %v2329 = vmul.f32 %v2328, %v1245
        %v2330 = vsub.f32 %v2321, %v2329
        %v2331 = vmul.f32 %v2330, %v2330
        %v2332 = vsel %vm1241, %v2331, 0.0
        %2333 = vadd.xlane.f32.xlu0 %v2332
        %v2334 = vpop.xlane.xlu0 %2333
        %v2335 = vmul.f32 %v2334, %v1245
        %v2336 = vadd.f32 %v2335, 1e-05
        %v2337 = vrsqrt.pop %v2336
        %v2338 = vmul.f32 %v2330, %v2337
        %v2340 = vlaneseq
        %v2341 = vshrl.u32 %v2340, 7
        %v2342 = vsub.s32 0, %v2341
        %v2343 = vrot.slane %v2323, %v2342
        %v2345 = vmul.f32 %v2338, %v2343
        %v2347 = vlaneseq
        %v2348 = vshrl.u32 %v2347, 7
        %v2349 = vsub.s32 0, %v2348
        %v2350 = vrot.slane %v2325, %v2349
        %v2352 = vadd.f32 %v2345, %v2350
        %2353 = vmatprep.subr.mxu0 0.0
        %2354 = vmatpush1.msra.mxu0 %v2352
        %2355 = vmatprep.subr.mxu0 0.0
        %2356 = vmatpush1.msra.mxu0 0.0
        %2357 = vmatprep.subr.mxu0 0.0
        %2358 = vmatpush1.msra.mxu0 0.0
        %2359 = vmatprep.subr.mxu0 0.0
        %2360 = vmatpush1.msra.mxu0 0.0
        %2361 = vmatprep.subr.mxu0 0.0
        %2362 = vmatpush1.msra.mxu0 0.0
        %2363 = vmatprep.subr.mxu0 0.0
        %2364 = vmatpush1.msra.mxu0 0.0
        %2365 = vmatprep.subr.mxu0 0.0
        %2366 = vmatpush1.msra.mxu0 0.0
        %2367 = vmatprep.subr.mxu0 0.0
        %2368 = vmatpush1.msra.mxu0 0.0
        %2369 = vmatprep.subr.mxu0 0.0
        %2370 = vmatpush1.msra.mxu0 0.0
        %2371 = vmatprep.subr.mxu0 0.0
        %2372 = vmatpush1.msra.mxu0 0.0
        %2373 = vmatprep.subr.mxu0 0.0
        %2374 = vmatpush1.msra.mxu0 0.0
        %2375 = vmatprep.subr.mxu0 0.0
        %2376 = vmatpush1.msra.mxu0 0.0
        %2377 = vmatprep.subr.mxu0 0.0
        %2378 = vmatpush1.msra.mxu0 0.0
        %2379 = vmatprep.subr.mxu0 0.0
        %2380 = vmatpush1.msra.mxu0 0.0
        %2381 = vmatprep.subr.mxu0 0.0
        %2382 = vmatpush1.msra.mxu0 0.0
        %2383 = vmatprep.subr.mxu0 0.0
        %2384 = vmatpush1.msra.mxu0 0.0
        %2385 = vmatprep.subr.mxu0 0.0
        %2386 = vmatpush1.msra.mxu0 0.0
        %2387 = vmatprep.subr.mxu0 0.0
        %2388 = vmatpush1.msra.mxu0 0.0
        %2389 = vmatprep.subr.mxu0 0.0
        %2390 = vmatpush1.msra.mxu0 0.0
        %2391 = vmatprep.subr.mxu0 0.0
        %2392 = vmatpush1.msra.mxu0 0.0
        %2393 = vmatprep.subr.mxu0 0.0
        %2394 = vmatpush1.msra.mxu0 0.0
        %2395 = vmatprep.subr.mxu0 0.0
        %2396 = vmatpush1.msra.mxu0 0.0
        %2397 = vmatprep.subr.mxu0 0.0
        %2398 = vmatpush1.msra.mxu0 0.0
        %2399 = vmatprep.subr.mxu0 0.0
        %2400 = vmatpush1.msra.mxu0 0.0
        %2401 = vmatprep.subr.mxu0 0.0
        %2402 = vmatpush1.msra.mxu0 0.0
        %2403 = vmatprep.subr.mxu0 0.0
        %2404 = vmatpush1.msra.mxu0 0.0
        %2405 = vmatprep.subr.mxu0 0.0
        %2406 = vmatpush1.msra.mxu0 0.0
        %2407 = vmatprep.subr.mxu0 0.0
        %2408 = vmatpush1.msra.mxu0 0.0
        %2409 = vmatprep.subr.mxu0 0.0
        %2410 = vmatpush1.msra.mxu0 0.0
        %2411 = vmatprep.subr.mxu0 0.0
        %2412 = vmatpush1.msra.mxu0 0.0
        %2413 = vmatprep.subr.mxu0 0.0
        %2414 = vmatpush1.msra.mxu0 0.0
        %2415 = vmatprep.subr.mxu0 0.0
        %2416 = vmatpush1.msra.mxu0 0.0
        %2417 = vmatprep.mubr.f32.mxu0 0.0
        %2418 = vmatmul.mubr.f32.gmra.mrb[0].mxu0 %v1272
        %v2419 = vpop.f32.mrb[0].mxu0
        %v2420 = vadd.f32 0.0, %v2419
        %v2421 = vpop.f32.mrb[0].mxu0
        %2422 = vdwg.mxu0
        %v2423 = vsel %vm1151, %v2420, %v2352
        %s2424 = scalar_lea.vmem %s17, 32
        %v2425 = vld [vmem:[%s2424] sm:$0xff]
        %v2426 = vld [vmem:[%s2424 + $0x8] sm:$0xff]
        %v2427 = vld [vmem:[%s2424 + $0x10] sm:$0xff]
        %v2428 = vld [vmem:[%s2424 + $0x18] sm:$0xff]
        %s2429 = scalar_lea.vmem %s19, 1
        %v2430 = vld [vmem:[%s2429] sm:$0x1]
        %v2432 = vlaneseq
        %v2433 = vshrl.u32 %v2432, 7
        %v2434 = vsub.s32 0, %v2433
        %v2435 = vrot.slane %v2430, %v2434
        %v2438 = vsel %vm1241, %v2423, 0
        %2440 = vmatprep.subr.mxu0 0.0
        %2441 = vmatpush1.msra.mxu0 %v2425
        %2442 = vmatprep.subr.mxu0 0.0
        %2443 = vmatpush1.msra.mxu0 %v2426
        %2444 = vmatprep.subr.mxu0 0.0
        %2445 = vmatpush1.msra.mxu0 %v2427
        %2446 = vmatprep.subr.mxu0 0.0
        %2447 = vmatpush1.msra.mxu0 %v2428
        %2448 = vmatprep.subr.mxu0 0.0
        %2449 = vmatpush1.msra.mxu0 0.0
        %2450 = vmatprep.subr.mxu0 0.0
        %2451 = vmatpush1.msra.mxu0 0.0
        %2452 = vmatprep.subr.mxu0 0.0
        %2453 = vmatpush1.msra.mxu0 0.0
        %2454 = vmatprep.subr.mxu0 0.0
        %2455 = vmatpush1.msra.mxu0 0.0
        %2456 = vmatprep.subr.mxu0 0.0
        %2457 = vmatpush1.msra.mxu0 0.0
        %2458 = vmatprep.subr.mxu0 0.0
        %2459 = vmatpush1.msra.mxu0 0.0
        %2460 = vmatprep.subr.mxu0 0.0
        %2461 = vmatpush1.msra.mxu0 0.0
        %2462 = vmatprep.subr.mxu0 0.0
        %2463 = vmatpush1.msra.mxu0 0.0
        %2464 = vmatprep.subr.mxu0 0.0
        %2465 = vmatpush1.msra.mxu0 0.0
        %2466 = vmatprep.subr.mxu0 0.0
        %2467 = vmatpush1.msra.mxu0 0.0
        %2468 = vmatprep.subr.mxu0 0.0
        %2469 = vmatpush1.msra.mxu0 0.0
        %2470 = vmatprep.subr.mxu0 0.0
        %2471 = vmatpush1.msra.mxu0 0.0
        %2472 = vmatprep.subr.mxu0 0.0
        %2473 = vmatpush1.msra.mxu0 0.0
        %2474 = vmatprep.subr.mxu0 0.0
        %2475 = vmatpush1.msra.mxu0 0.0
        %2476 = vmatprep.subr.mxu0 0.0
        %2477 = vmatpush1.msra.mxu0 0.0
        %2478 = vmatprep.subr.mxu0 0.0
        %2479 = vmatpush1.msra.mxu0 0.0
        %2480 = vmatprep.subr.mxu0 0.0
        %2481 = vmatpush1.msra.mxu0 0.0
        %2482 = vmatprep.subr.mxu0 0.0
        %2483 = vmatpush1.msra.mxu0 0.0
        %2484 = vmatprep.subr.mxu0 0.0
        %2485 = vmatpush1.msra.mxu0 0.0
        %2486 = vmatprep.subr.mxu0 0.0
        %2487 = vmatpush1.msra.mxu0 0.0
        %2488 = vmatprep.subr.mxu0 0.0
        %2489 = vmatpush1.msra.mxu0 0.0
        %2490 = vmatprep.subr.mxu0 0.0
        %2491 = vmatpush1.msra.mxu0 0.0
        %2492 = vmatprep.subr.mxu0 0.0
        %2493 = vmatpush1.msra.mxu0 0.0
        %2494 = vmatprep.subr.mxu0 0.0
        %2495 = vmatpush1.msra.mxu0 0.0
        %2496 = vmatprep.subr.mxu0 0.0
        %2497 = vmatpush1.msra.mxu0 0.0
        %2498 = vmatprep.subr.mxu0 0.0
        %2499 = vmatpush1.msra.mxu0 0.0
        %2500 = vmatprep.subr.mxu0 0.0
        %2501 = vmatpush1.msra.mxu0 0.0
        %2502 = vmatprep.subr.mxu0 0.0
        %2503 = vmatpush1.msra.mxu0 0.0
        %2504 = vmatprep.mubr.f32.mxu0 0.0
        %2505 = vmatmul.mubr.f32.gmra.mrb[0].mxu0 %v2438
        %v2506 = vpop.f32.mrb[0].mxu0
        %v2507 = vadd.f32 %v2435, %v2506
        %v2508 = vpop.f32.mrb[0].mxu0
        %2509 = vdwg.mxu0
        %s2510 = scalar_lea.vmem %s21, 32
        %v2511 = vld [vmem:[%s2510] sm:$0xff]
        %v2512 = vld [vmem:[%s2510 + $0x8] sm:$0xff]
        %v2513 = vld [vmem:[%s2510 + $0x10] sm:$0xff]
        %v2514 = vld [vmem:[%s2510 + $0x18] sm:$0xff]
        %s2515 = scalar_lea.vmem %s23, 1
        %v2516 = vld [vmem:[%s2515] sm:$0x1]
        %v2518 = vlaneseq
        %v2519 = vshrl.u32 %v2518, 7
        %v2520 = vsub.s32 0, %v2519
        %v2521 = vrot.slane %v2516, %v2520
        %2523 = vmatprep.subr.mxu0 0.0
        %2524 = vmatpush1.msra.mxu0 %v2511
        %2525 = vmatprep.subr.mxu0 0.0
        %2526 = vmatpush1.msra.mxu0 %v2512
        %2527 = vmatprep.subr.mxu0 0.0
        %2528 = vmatpush1.msra.mxu0 %v2513
        %2529 = vmatprep.subr.mxu0 0.0
        %2530 = vmatpush1.msra.mxu0 %v2514
        %2531 = vmatprep.subr.mxu0 0.0
        %2532 = vmatpush1.msra.mxu0 0.0
        %2533 = vmatprep.subr.mxu0 0.0
        %2534 = vmatpush1.msra.mxu0 0.0
        %2535 = vmatprep.subr.mxu0 0.0
        %2536 = vmatpush1.msra.mxu0 0.0
        %2537 = vmatprep.subr.mxu0 0.0
        %2538 = vmatpush1.msra.mxu0 0.0
        %2539 = vmatprep.subr.mxu0 0.0
        %2540 = vmatpush1.msra.mxu0 0.0
        %2541 = vmatprep.subr.mxu0 0.0
        %2542 = vmatpush1.msra.mxu0 0.0
        %2543 = vmatprep.subr.mxu0 0.0
        %2544 = vmatpush1.msra.mxu0 0.0
        %2545 = vmatprep.subr.mxu0 0.0
        %2546 = vmatpush1.msra.mxu0 0.0
        %2547 = vmatprep.subr.mxu0 0.0
        %2548 = vmatpush1.msra.mxu0 0.0
        %2549 = vmatprep.subr.mxu0 0.0
        %2550 = vmatpush1.msra.mxu0 0.0
        %2551 = vmatprep.subr.mxu0 0.0
        %2552 = vmatpush1.msra.mxu0 0.0
        %2553 = vmatprep.subr.mxu0 0.0
        %2554 = vmatpush1.msra.mxu0 0.0
        %2555 = vmatprep.subr.mxu0 0.0
        %2556 = vmatpush1.msra.mxu0 0.0
        %2557 = vmatprep.subr.mxu0 0.0
        %2558 = vmatpush1.msra.mxu0 0.0
        %2559 = vmatprep.subr.mxu0 0.0
        %2560 = vmatpush1.msra.mxu0 0.0
        %2561 = vmatprep.subr.mxu0 0.0
        %2562 = vmatpush1.msra.mxu0 0.0
        %2563 = vmatprep.subr.mxu0 0.0
        %2564 = vmatpush1.msra.mxu0 0.0
        %2565 = vmatprep.subr.mxu0 0.0
        %2566 = vmatpush1.msra.mxu0 0.0
        %2567 = vmatprep.subr.mxu0 0.0
        %2568 = vmatpush1.msra.mxu0 0.0
        %2569 = vmatprep.subr.mxu0 0.0
        %2570 = vmatpush1.msra.mxu0 0.0
        %2571 = vmatprep.subr.mxu0 0.0
        %2572 = vmatpush1.msra.mxu0 0.0
        %2573 = vmatprep.subr.mxu0 0.0
        %2574 = vmatpush1.msra.mxu0 0.0
        %2575 = vmatprep.subr.mxu0 0.0
        %2576 = vmatpush1.msra.mxu0 0.0
        %2577 = vmatprep.subr.mxu0 0.0
        %2578 = vmatpush1.msra.mxu0 0.0
        %2579 = vmatprep.subr.mxu0 0.0
        %2580 = vmatpush1.msra.mxu0 0.0
        %2581 = vmatprep.subr.mxu0 0.0
        %2582 = vmatpush1.msra.mxu0 0.0
        %2583 = vmatprep.subr.mxu0 0.0
        %2584 = vmatpush1.msra.mxu0 0.0
        %2585 = vmatprep.subr.mxu0 0.0
        %2586 = vmatpush1.msra.mxu0 0.0
        %2587 = vmatprep.mubr.f32.mxu0 0.0
        %2588 = vmatmul.mubr.f32.gmra.mrb[0].mxu0 %v2438
        %v2589 = vpop.f32.mrb[0].mxu0
        %v2590 = vadd.f32 %v2521, %v2589
        %v2591 = vpop.f32.mrb[0].mxu0
        %2592 = vdwg.mxu0
        %s2593 = scalar_lea.vmem %s25, 32
        %v2594 = vld [vmem:[%s2593] sm:$0xff]
        %v2595 = vld [vmem:[%s2593 + $0x8] sm:$0xff]
        %v2596 = vld [vmem:[%s2593 + $0x10] sm:$0xff]
        %v2597 = vld [vmem:[%s2593 + $0x18] sm:$0xff]
        %s2598 = scalar_lea.vmem %s27, 1
        %v2599 = vld [vmem:[%s2598] sm:$0x1]
        %v2601 = vlaneseq
        %v2602 = vshrl.u32 %v2601, 7
        %v2603 = vsub.s32 0, %v2602
        %v2604 = vrot.slane %v2599, %v2603
        %2606 = vmatprep.subr.mxu0 0.0
        %2607 = vmatpush1.msra.mxu0 %v2594
        %2608 = vmatprep.subr.mxu0 0.0
        %2609 = vmatpush1.msra.mxu0 %v2595
        %2610 = vmatprep.subr.mxu0 0.0
        %2611 = vmatpush1.msra.mxu0 %v2596
        %2612 = vmatprep.subr.mxu0 0.0
        %2613 = vmatpush1.msra.mxu0 %v2597
        %2614 = vmatprep.subr.mxu0 0.0
        %2615 = vmatpush1.msra.mxu0 0.0
        %2616 = vmatprep.subr.mxu0 0.0
        %2617 = vmatpush1.msra.mxu0 0.0
        %2618 = vmatprep.subr.mxu0 0.0
        %2619 = vmatpush1.msra.mxu0 0.0
        %2620 = vmatprep.subr.mxu0 0.0
        %2621 = vmatpush1.msra.mxu0 0.0
        %2622 = vmatprep.subr.mxu0 0.0
        %2623 = vmatpush1.msra.mxu0 0.0
        %2624 = vmatprep.subr.mxu0 0.0
        %2625 = vmatpush1.msra.mxu0 0.0
        %2626 = vmatprep.subr.mxu0 0.0
        %2627 = vmatpush1.msra.mxu0 0.0
        %2628 = vmatprep.subr.mxu0 0.0
        %2629 = vmatpush1.msra.mxu0 0.0
        %2630 = vmatprep.subr.mxu0 0.0
        %2631 = vmatpush1.msra.mxu0 0.0
        %2632 = vmatprep.subr.mxu0 0.0
        %2633 = vmatpush1.msra.mxu0 0.0
        %2634 = vmatprep.subr.mxu0 0.0
        %2635 = vmatpush1.msra.mxu0 0.0
        %2636 = vmatprep.subr.mxu0 0.0
        %2637 = vmatpush1.msra.mxu0 0.0
        %2638 = vmatprep.subr.mxu0 0.0
        %2639 = vmatpush1.msra.mxu0 0.0
        %2640 = vmatprep.subr.mxu0 0.0
        %2641 = vmatpush1.msra.mxu0 0.0
        %2642 = vmatprep.subr.mxu0 0.0
        %2643 = vmatpush1.msra.mxu0 0.0
        %2644 = vmatprep.subr.mxu0 0.0
        %2645 = vmatpush1.msra.mxu0 0.0
        %2646 = vmatprep.subr.mxu0 0.0
        %2647 = vmatpush1.msra.mxu0 0.0
        %2648 = vmatprep.subr.mxu0 0.0
        %2649 = vmatpush1.msra.mxu0 0.0
        %2650 = vmatprep.subr.mxu0 0.0
        %2651 = vmatpush1.msra.mxu0 0.0
        %2652 = vmatprep.subr.mxu0 0.0
        %2653 = vmatpush1.msra.mxu0 0.0
        %2654 = vmatprep.subr.mxu0 0.0
        %2655 = vmatpush1.msra.mxu0 0.0
        %2656 = vmatprep.subr.mxu0 0.0
        %2657 = vmatpush1.msra.mxu0 0.0
        %2658 = vmatprep.subr.mxu0 0.0
        %2659 = vmatpush1.msra.mxu0 0.0
        %2660 = vmatprep.subr.mxu0 0.0
        %2661 = vmatpush1.msra.mxu0 0.0
        %2662 = vmatprep.subr.mxu0 0.0
        %2663 = vmatpush1.msra.mxu0 0.0
        %2664 = vmatprep.subr.mxu0 0.0
        %2665 = vmatpush1.msra.mxu0 0.0
        %2666 = vmatprep.subr.mxu0 0.0
        %2667 = vmatpush1.msra.mxu0 0.0
        %2668 = vmatprep.subr.mxu0 0.0
        %2669 = vmatpush1.msra.mxu0 0.0
        %2670 = vmatprep.mubr.f32.mxu0 0.0
        %2671 = vmatmul.mubr.f32.gmra.mrb[0].mxu0 %v2438
        %v2672 = vpop.f32.mrb[0].mxu0
        %v2673 = vadd.f32 %v2604, %v2672
        %v2674 = vpop.f32.mrb[0].mxu0
        %2675 = vdwg.mxu0
        %v2676 = vmax.f32 %v2507, -60.0
        %v2677 = vmin.f32 %v2676, 30.0
        %v2678 = vmul.f32 %v2677, 1.442695
        %v2679 = vpow.pop %v2678
        %2680 = vmatprep.subr.mxu0 0.0
        %2681 = vmatpush1.msra.mxu0 %v2679
        %2682 = vmatprep.subr.mxu0 0.0
        %2683 = vmatpush1.msra.mxu0 0.0
        %2684 = vmatprep.subr.mxu0 0.0
        %2685 = vmatpush1.msra.mxu0 0.0
        %2686 = vmatprep.subr.mxu0 0.0
        %2687 = vmatpush1.msra.mxu0 0.0
        %2688 = vmatprep.subr.mxu0 0.0
        %2689 = vmatpush1.msra.mxu0 0.0
        %2690 = vmatprep.subr.mxu0 0.0
        %2691 = vmatpush1.msra.mxu0 0.0
        %2692 = vmatprep.subr.mxu0 0.0
        %2693 = vmatpush1.msra.mxu0 0.0
        %2694 = vmatprep.subr.mxu0 0.0
        %2695 = vmatpush1.msra.mxu0 0.0
        %2696 = vmatprep.subr.mxu0 0.0
        %2697 = vmatpush1.msra.mxu0 0.0
        %2698 = vmatprep.subr.mxu0 0.0
        %2699 = vmatpush1.msra.mxu0 0.0
        %2700 = vmatprep.subr.mxu0 0.0
        %2701 = vmatpush1.msra.mxu0 0.0
        %2702 = vmatprep.subr.mxu0 0.0
        %2703 = vmatpush1.msra.mxu0 0.0
        %2704 = vmatprep.subr.mxu0 0.0
        %2705 = vmatpush1.msra.mxu0 0.0
        %2706 = vmatprep.subr.mxu0 0.0
        %2707 = vmatpush1.msra.mxu0 0.0
        %2708 = vmatprep.subr.mxu0 0.0
        %2709 = vmatpush1.msra.mxu0 0.0
        %2710 = vmatprep.subr.mxu0 0.0
        %2711 = vmatpush1.msra.mxu0 0.0
        %2712 = vmatprep.subr.mxu0 0.0
        %2713 = vmatpush1.msra.mxu0 0.0
        %2714 = vmatprep.subr.mxu0 0.0
        %2715 = vmatpush1.msra.mxu0 0.0
        %2716 = vmatprep.subr.mxu0 0.0
        %2717 = vmatpush1.msra.mxu0 0.0
        %2718 = vmatprep.subr.mxu0 0.0
        %2719 = vmatpush1.msra.mxu0 0.0
        %2720 = vmatprep.subr.mxu0 0.0
        %2721 = vmatpush1.msra.mxu0 0.0
        %2722 = vmatprep.subr.mxu0 0.0
        %2723 = vmatpush1.msra.mxu0 0.0
        %2724 = vmatprep.subr.mxu0 0.0
        %2725 = vmatpush1.msra.mxu0 0.0
        %2726 = vmatprep.subr.mxu0 0.0
        %2727 = vmatpush1.msra.mxu0 0.0
        %2728 = vmatprep.subr.mxu0 0.0
        %2729 = vmatpush1.msra.mxu0 0.0
        %2730 = vmatprep.subr.mxu0 0.0
        %2731 = vmatpush1.msra.mxu0 0.0
        %2732 = vmatprep.subr.mxu0 0.0
        %2733 = vmatpush1.msra.mxu0 0.0
        %2734 = vmatprep.subr.mxu0 0.0
        %2735 = vmatpush1.msra.mxu0 0.0
        %2736 = vmatprep.subr.mxu0 0.0
        %2737 = vmatpush1.msra.mxu0 0.0
        %2738 = vmatprep.subr.mxu0 0.0
        %2739 = vmatpush1.msra.mxu0 0.0
        %2740 = vmatprep.subr.mxu0 0.0
        %2741 = vmatpush1.msra.mxu0 0.0
        %2742 = vmatprep.subr.mxu0 0.0
        %2743 = vmatpush1.msra.mxu0 0.0
        %2744 = vmatprep.mubr.f32.mxu0 0.0
        %2745 = vmatmul.mubr.f32.gmra.mrb[0].mxu0 %v1596
        %v2746 = vpop.f32.mrb[0].mxu0
        %v2747 = vadd.f32 0.0, %v2746
        %v2748 = vpop.f32.mrb[0].mxu0
        %2749 = vdwg.mxu0
        %v2750 = vmul.f32 %v2679, %v2590
        %s2751 = scalar_lea.vmem %s13, 64
        %v2752 = vld [vmem:[%s2751] sm:$0xff]
        %v2753 = vld [vmem:[%s2751 + $0x8] sm:$0xff]
        %v2754 = vld [vmem:[%s2751 + $0x10] sm:$0xff]
        %v2755 = vld [vmem:[%s2751 + $0x18] sm:$0xff]
        %v2756 = vld [vmem:[%s2751 + $0x20] sm:$0xff]
        %v2757 = vld [vmem:[%s2751 + $0x28] sm:$0xff]
        %v2758 = vld [vmem:[%s2751 + $0x30] sm:$0xff]
        %v2759 = vld [vmem:[%s2751 + $0x38] sm:$0xff]
        %v2760 = vmul.f32 %v2752, %v2750
        %v2761 = vmul.f32 %v2753, %v2750
        %v2762 = vmul.f32 %v2754, %v2750
        %v2763 = vmul.f32 %v2755, %v2750
        %v2764 = vmul.f32 %v2756, %v2750
        %v2765 = vmul.f32 %v2757, %v2750
        %v2766 = vmul.f32 %v2758, %v2750
        %v2767 = vmul.f32 %v2759, %v2750
        %v2768 = vsel %vm1241, %v2760, 0.0
        %v2769 = vrot.slane %v2768, 4
        %v2770 = vadd.f32 %v2768, %v2769
        %v2771 = vrot.slane %v2770, 2
        %v2772 = vadd.f32 %v2770, %v2771
        %v2773 = vrot.slane %v2772, 1
        %v2774 = vadd.f32 %v2772, %v2773
        %v2775 = vsel %vm1241, %v2761, 0.0
        %v2776 = vrot.slane %v2775, 4
        %v2777 = vadd.f32 %v2775, %v2776
        %v2778 = vrot.slane %v2777, 2
        %v2779 = vadd.f32 %v2777, %v2778
        %v2780 = vrot.slane %v2779, 1
        %v2781 = vadd.f32 %v2779, %v2780
        %v2782 = vsel %vm1241, %v2762, 0.0
        %v2783 = vrot.slane %v2782, 4
        %v2784 = vadd.f32 %v2782, %v2783
        %v2785 = vrot.slane %v2784, 2
        %v2786 = vadd.f32 %v2784, %v2785
        %v2787 = vrot.slane %v2786, 1
        %v2788 = vadd.f32 %v2786, %v2787
        %v2789 = vsel %vm1241, %v2763, 0.0
        %v2790 = vrot.slane %v2789, 4
        %v2791 = vadd.f32 %v2789, %v2790
        %v2792 = vrot.slane %v2791, 2
        %v2793 = vadd.f32 %v2791, %v2792
        %v2794 = vrot.slane %v2793, 1
        %v2795 = vadd.f32 %v2793, %v2794
        %v2796 = vsel %vm1241, %v2764, 0.0
        %v2797 = vrot.slane %v2796, 4
        %v2798 = vadd.f32 %v2796, %v2797
        %v2799 = vrot.slane %v2798, 2
        %v2800 = vadd.f32 %v2798, %v2799
        %v2801 = vrot.slane %v2800, 1
        %v2802 = vadd.f32 %v2800, %v2801
        %v2803 = vsel %vm1241, %v2765, 0.0
        %v2804 = vrot.slane %v2803, 4
        %v2805 = vadd.f32 %v2803, %v2804
        %v2806 = vrot.slane %v2805, 2
        %v2807 = vadd.f32 %v2805, %v2806
        %v2808 = vrot.slane %v2807, 1
        %v2809 = vadd.f32 %v2807, %v2808
        %v2810 = vsel %vm1241, %v2766, 0.0
        %v2811 = vrot.slane %v2810, 4
        %v2812 = vadd.f32 %v2810, %v2811
        %v2813 = vrot.slane %v2812, 2
        %v2814 = vadd.f32 %v2812, %v2813
        %v2815 = vrot.slane %v2814, 1
        %v2816 = vadd.f32 %v2814, %v2815
        %v2817 = vsel %vm1241, %v2767, 0.0
        %v2818 = vrot.slane %v2817, 4
        %v2819 = vadd.f32 %v2817, %v2818
        %v2820 = vrot.slane %v2819, 2
        %v2821 = vadd.f32 %v2819, %v2820
        %v2822 = vrot.slane %v2821, 1
        %v2823 = vadd.f32 %v2821, %v2822
        %v2824 = vxor.u32 %v2673, 2147483648
        %v2825 = vmul.f32 %v2824, 1.442695
        %v2826 = vpow.pop %v2825
        %v2827 = vadd.f32 %v2826, 1.0
        %v2828 = vrcp.pop %v2827
        %v2829 = vmul.f32 1.0, %v2828
        %v2838 = vsel %vm1755, %v2781, %v2774
        %v2839 = vsel %vm1757, %v2788, %v2838
        %v2840 = vsel %vm1759, %v2795, %v2839
        %v2841 = vsel %vm1761, %v2802, %v2840
        %v2842 = vsel %vm1763, %v2809, %v2841
        %v2843 = vsel %vm1765, %v2816, %v2842
        %v2844 = vsel %vm1767, %v2823, %v2843
        %v2846 = vmul.f32 %v2829, %v2844
        %v2847 = vrcp.pop %v2747
        %v2848 = vmul.f32 %v2846, %v2847
        %s2849 = scalar_lea.vmem %s29, 32
        %v2850 = vld [vmem:[%s2849] sm:$0xff]
        %v2851 = vld [vmem:[%s2849 + $0x8] sm:$0xff]
        %v2852 = vld [vmem:[%s2849 + $0x10] sm:$0xff]
        %v2853 = vld [vmem:[%s2849 + $0x18] sm:$0xff]
        %s2854 = scalar_lea.vmem %s31, 1
        %v2855 = vld [vmem:[%s2854] sm:$0x1]
        %v2857 = vlaneseq
        %v2858 = vshrl.u32 %v2857, 7
        %v2859 = vsub.s32 0, %v2858
        %v2860 = vrot.slane %v2855, %v2859
        %v2863 = vsel %vm1241, %v2848, 0
        %2865 = vmatprep.subr.mxu0 0.0
        %2866 = vmatpush1.msra.mxu0 %v2850
        %2867 = vmatprep.subr.mxu0 0.0
        %2868 = vmatpush1.msra.mxu0 %v2851
        %2869 = vmatprep.subr.mxu0 0.0
        %2870 = vmatpush1.msra.mxu0 %v2852
        %2871 = vmatprep.subr.mxu0 0.0
        %2872 = vmatpush1.msra.mxu0 %v2853
        %2873 = vmatprep.subr.mxu0 0.0
        %2874 = vmatpush1.msra.mxu0 0.0
        %2875 = vmatprep.subr.mxu0 0.0
        %2876 = vmatpush1.msra.mxu0 0.0
        %2877 = vmatprep.subr.mxu0 0.0
        %2878 = vmatpush1.msra.mxu0 0.0
        %2879 = vmatprep.subr.mxu0 0.0
        %2880 = vmatpush1.msra.mxu0 0.0
        %2881 = vmatprep.subr.mxu0 0.0
        %2882 = vmatpush1.msra.mxu0 0.0
        %2883 = vmatprep.subr.mxu0 0.0
        %2884 = vmatpush1.msra.mxu0 0.0
        %2885 = vmatprep.subr.mxu0 0.0
        %2886 = vmatpush1.msra.mxu0 0.0
        %2887 = vmatprep.subr.mxu0 0.0
        %2888 = vmatpush1.msra.mxu0 0.0
        %2889 = vmatprep.subr.mxu0 0.0
        %2890 = vmatpush1.msra.mxu0 0.0
        %2891 = vmatprep.subr.mxu0 0.0
        %2892 = vmatpush1.msra.mxu0 0.0
        %2893 = vmatprep.subr.mxu0 0.0
        %2894 = vmatpush1.msra.mxu0 0.0
        %2895 = vmatprep.subr.mxu0 0.0
        %2896 = vmatpush1.msra.mxu0 0.0
        %2897 = vmatprep.subr.mxu0 0.0
        %2898 = vmatpush1.msra.mxu0 0.0
        %2899 = vmatprep.subr.mxu0 0.0
        %2900 = vmatpush1.msra.mxu0 0.0
        %2901 = vmatprep.subr.mxu0 0.0
        %2902 = vmatpush1.msra.mxu0 0.0
        %2903 = vmatprep.subr.mxu0 0.0
        %2904 = vmatpush1.msra.mxu0 0.0
        %2905 = vmatprep.subr.mxu0 0.0
        %2906 = vmatpush1.msra.mxu0 0.0
        %2907 = vmatprep.subr.mxu0 0.0
        %2908 = vmatpush1.msra.mxu0 0.0
        %2909 = vmatprep.subr.mxu0 0.0
        %2910 = vmatpush1.msra.mxu0 0.0
        %2911 = vmatprep.subr.mxu0 0.0
        %2912 = vmatpush1.msra.mxu0 0.0
        %2913 = vmatprep.subr.mxu0 0.0
        %2914 = vmatpush1.msra.mxu0 0.0
        %2915 = vmatprep.subr.mxu0 0.0
        %2916 = vmatpush1.msra.mxu0 0.0
        %2917 = vmatprep.subr.mxu0 0.0
        %2918 = vmatpush1.msra.mxu0 0.0
        %2919 = vmatprep.subr.mxu0 0.0
        %2920 = vmatpush1.msra.mxu0 0.0
        %2921 = vmatprep.subr.mxu0 0.0
        %2922 = vmatpush1.msra.mxu0 0.0
        %2923 = vmatprep.subr.mxu0 0.0
        %2924 = vmatpush1.msra.mxu0 0.0
        %2925 = vmatprep.subr.mxu0 0.0
        %2926 = vmatpush1.msra.mxu0 0.0
        %2927 = vmatprep.subr.mxu0 0.0
        %2928 = vmatpush1.msra.mxu0 0.0
        %2929 = vmatprep.mubr.f32.mxu0 0.0
        %2930 = vmatmul.mubr.f32.gmra.mrb[0].mxu0 %v2863
        %v2931 = vpop.f32.mrb[0].mxu0
        %v2932 = vadd.f32 %v2860, %v2931
        %v2933 = vpop.f32.mrb[0].mxu0
        %2934 = vdwg.mxu0
        %s2935 = scalar_lea.vmem %s15, 8
        %v2936 = vld [vmem:[%s2935] sm:$0xff]
        %2938 = vset.pattern.permute.xlu0 0
        %2939 = vperm.xlu0 %2938, %v2936
        %v2940 = vpop.permute.xlu0 %2939
        %v2942 = vmul.f32 %v2932, %v2940
        %v2943 = vadd.f32 %v2321, %v2942
        %s2944 = scalar_lea.vmem %s9, 1
        %v2945 = vld [vmem:[%s2944] sm:$0x1]
        %s2946 = scalar_lea.vmem %s11, 1
        %v2947 = vld [vmem:[%s2946] sm:$0x1]
        %v2948 = vsel %vm1241, %v2943, 0.0
        %2949 = vadd.xlane.f32.xlu0 %v2948
        %v2950 = vpop.xlane.xlu0 %2949
        %v2951 = vmul.f32 %v2950, %v1245
        %v2952 = vsub.f32 %v2943, %v2951
        %v2953 = vmul.f32 %v2952, %v2952
        %v2954 = vsel %vm1241, %v2953, 0.0
        %2955 = vadd.xlane.f32.xlu0 %v2954
        %v2956 = vpop.xlane.xlu0 %2955
        %v2957 = vmul.f32 %v2956, %v1245
        %v2958 = vadd.f32 %v2957, 1e-05
        %v2959 = vrsqrt.pop %v2958
        %v2960 = vmul.f32 %v2952, %v2959
        %v2962 = vlaneseq
        %v2963 = vshrl.u32 %v2962, 7
        %v2964 = vsub.s32 0, %v2963
        %v2965 = vrot.slane %v2945, %v2964
        %v2967 = vmul.f32 %v2960, %v2965
        %v2969 = vlaneseq
        %v2970 = vshrl.u32 %v2969, 7
        %v2971 = vsub.s32 0, %v2970
        %v2972 = vrot.slane %v2947, %v2971
        %v2974 = vadd.f32 %v2967, %v2972
        %2975 = vmatprep.subr.mxu0 0.0
        %2976 = vmatpush1.msra.mxu0 %v2974
        %2977 = vmatprep.subr.mxu0 0.0
        %2978 = vmatpush1.msra.mxu0 0.0
        %2979 = vmatprep.subr.mxu0 0.0
        %2980 = vmatpush1.msra.mxu0 0.0
        %2981 = vmatprep.subr.mxu0 0.0
        %2982 = vmatpush1.msra.mxu0 0.0
        %2983 = vmatprep.subr.mxu0 0.0
        %2984 = vmatpush1.msra.mxu0 0.0
        %2985 = vmatprep.subr.mxu0 0.0
        %2986 = vmatpush1.msra.mxu0 0.0
        %2987 = vmatprep.subr.mxu0 0.0
        %2988 = vmatpush1.msra.mxu0 0.0
        %2989 = vmatprep.subr.mxu0 0.0
        %2990 = vmatpush1.msra.mxu0 0.0
        %2991 = vmatprep.subr.mxu0 0.0
        %2992 = vmatpush1.msra.mxu0 0.0
        %2993 = vmatprep.subr.mxu0 0.0
        %2994 = vmatpush1.msra.mxu0 0.0
        %2995 = vmatprep.subr.mxu0 0.0
        %2996 = vmatpush1.msra.mxu0 0.0
        %2997 = vmatprep.subr.mxu0 0.0
        %2998 = vmatpush1.msra.mxu0 0.0
        %2999 = vmatprep.subr.mxu0 0.0
        %3000 = vmatpush1.msra.mxu0 0.0
        %3001 = vmatprep.subr.mxu0 0.0
        %3002 = vmatpush1.msra.mxu0 0.0
        %3003 = vmatprep.subr.mxu0 0.0
        %3004 = vmatpush1.msra.mxu0 0.0
        %3005 = vmatprep.subr.mxu0 0.0
        %3006 = vmatpush1.msra.mxu0 0.0
        %3007 = vmatprep.subr.mxu0 0.0
        %3008 = vmatpush1.msra.mxu0 0.0
        %3009 = vmatprep.subr.mxu0 0.0
        %3010 = vmatpush1.msra.mxu0 0.0
        %3011 = vmatprep.subr.mxu0 0.0
        %3012 = vmatpush1.msra.mxu0 0.0
        %3013 = vmatprep.subr.mxu0 0.0
        %3014 = vmatpush1.msra.mxu0 0.0
        %3015 = vmatprep.subr.mxu0 0.0
        %3016 = vmatpush1.msra.mxu0 0.0
        %3017 = vmatprep.subr.mxu0 0.0
        %3018 = vmatpush1.msra.mxu0 0.0
        %3019 = vmatprep.subr.mxu0 0.0
        %3020 = vmatpush1.msra.mxu0 0.0
        %3021 = vmatprep.subr.mxu0 0.0
        %3022 = vmatpush1.msra.mxu0 0.0
        %3023 = vmatprep.subr.mxu0 0.0
        %3024 = vmatpush1.msra.mxu0 0.0
        %3025 = vmatprep.subr.mxu0 0.0
        %3026 = vmatpush1.msra.mxu0 0.0
        %3027 = vmatprep.subr.mxu0 0.0
        %3028 = vmatpush1.msra.mxu0 0.0
        %3029 = vmatprep.subr.mxu0 0.0
        %3030 = vmatpush1.msra.mxu0 0.0
        %3031 = vmatprep.subr.mxu0 0.0
        %3032 = vmatpush1.msra.mxu0 0.0
        %3033 = vmatprep.subr.mxu0 0.0
        %3034 = vmatpush1.msra.mxu0 0.0
        %3035 = vmatprep.subr.mxu0 0.0
        %3036 = vmatpush1.msra.mxu0 0.0
        %3037 = vmatprep.subr.mxu0 0.0
        %3038 = vmatpush1.msra.mxu0 0.0
        %3039 = vmatprep.mubr.f32.mxu0 0.0
        %3040 = vmatmul.mubr.f32.gmra.mrb[0].mxu0 %v1272
        %v3041 = vpop.f32.mrb[0].mxu0
        %v3042 = vadd.f32 0.0, %v3041
        %v3043 = vpop.f32.mrb[0].mxu0
        %3044 = vdwg.mxu0
        %v3045 = vsel %vm1151, %v3042, %v2974
        %s3046 = scalar_lea.vmem [#allocation2], 32
        %v3047 = vld [vmem:[%s3046] sm:$0xff]
        %v3048 = vld [vmem:[%s3046 + $0x8] sm:$0xff]
        %v3049 = vld [vmem:[%s3046 + $0x10] sm:$0xff]
        %v3050 = vld [vmem:[%s3046 + $0x18] sm:$0xff]
        %s3051 = scalar_lea.vmem [#allocation5], 1
        %v3052 = vld [vmem:[%s3051] sm:$0x1]
        %v3054 = vlaneseq
        %v3055 = vshrl.u32 %v3054, 7
        %v3056 = vsub.s32 0, %v3055
        %v3057 = vrot.slane %v3052, %v3056
        %v3060 = vsel %vm1241, %v3045, 0
        %3062 = vmatprep.subr.mxu0 0.0
        %3063 = vmatpush1.msra.mxu0 %v3047
        %3064 = vmatprep.subr.mxu0 0.0
        %3065 = vmatpush1.msra.mxu0 %v3048
        %3066 = vmatprep.subr.mxu0 0.0
        %3067 = vmatpush1.msra.mxu0 %v3049
        %3068 = vmatprep.subr.mxu0 0.0
        %3069 = vmatpush1.msra.mxu0 %v3050
        %3070 = vmatprep.subr.mxu0 0.0
        %3071 = vmatpush1.msra.mxu0 0.0
        %3072 = vmatprep.subr.mxu0 0.0
        %3073 = vmatpush1.msra.mxu0 0.0
        %3074 = vmatprep.subr.mxu0 0.0
        %3075 = vmatpush1.msra.mxu0 0.0
        %3076 = vmatprep.subr.mxu0 0.0
        %3077 = vmatpush1.msra.mxu0 0.0
        %3078 = vmatprep.subr.mxu0 0.0
        %3079 = vmatpush1.msra.mxu0 0.0
        %3080 = vmatprep.subr.mxu0 0.0
        %3081 = vmatpush1.msra.mxu0 0.0
        %3082 = vmatprep.subr.mxu0 0.0
        %3083 = vmatpush1.msra.mxu0 0.0
        %3084 = vmatprep.subr.mxu0 0.0
        %3085 = vmatpush1.msra.mxu0 0.0
        %3086 = vmatprep.subr.mxu0 0.0
        %3087 = vmatpush1.msra.mxu0 0.0
        %3088 = vmatprep.subr.mxu0 0.0
        %3089 = vmatpush1.msra.mxu0 0.0
        %3090 = vmatprep.subr.mxu0 0.0
        %3091 = vmatpush1.msra.mxu0 0.0
        %3092 = vmatprep.subr.mxu0 0.0
        %3093 = vmatpush1.msra.mxu0 0.0
        %3094 = vmatprep.subr.mxu0 0.0
        %3095 = vmatpush1.msra.mxu0 0.0
        %3096 = vmatprep.subr.mxu0 0.0
        %3097 = vmatpush1.msra.mxu0 0.0
        %3098 = vmatprep.subr.mxu0 0.0
        %3099 = vmatpush1.msra.mxu0 0.0
        %3100 = vmatprep.subr.mxu0 0.0
        %3101 = vmatpush1.msra.mxu0 0.0
        %3102 = vmatprep.subr.mxu0 0.0
        %3103 = vmatpush1.msra.mxu0 0.0
        %3104 = vmatprep.subr.mxu0 0.0
        %3105 = vmatpush1.msra.mxu0 0.0
        %3106 = vmatprep.subr.mxu0 0.0
        %3107 = vmatpush1.msra.mxu0 0.0
        %3108 = vmatprep.subr.mxu0 0.0
        %3109 = vmatpush1.msra.mxu0 0.0
        %3110 = vmatprep.subr.mxu0 0.0
        %3111 = vmatpush1.msra.mxu0 0.0
        %3112 = vmatprep.subr.mxu0 0.0
        %3113 = vmatpush1.msra.mxu0 0.0
        %3114 = vmatprep.subr.mxu0 0.0
        %3115 = vmatpush1.msra.mxu0 0.0
        %3116 = vmatprep.subr.mxu0 0.0
        %3117 = vmatpush1.msra.mxu0 0.0
        %3118 = vmatprep.subr.mxu0 0.0
        %3119 = vmatpush1.msra.mxu0 0.0
        %3120 = vmatprep.subr.mxu0 0.0
        %3121 = vmatpush1.msra.mxu0 0.0
        %3122 = vmatprep.subr.mxu0 0.0
        %3123 = vmatpush1.msra.mxu0 0.0
        %3124 = vmatprep.subr.mxu0 0.0
        %3125 = vmatpush1.msra.mxu0 0.0
        %3126 = vmatprep.mubr.f32.mxu0 0.0
        %3127 = vmatmul.mubr.f32.gmra.mrb[0].mxu0 %v3060
        %v3128 = vpop.f32.mrb[0].mxu0
        %v3129 = vadd.f32 %v3057, %v3128
        %v3130 = vpop.f32.mrb[0].mxu0
        %3131 = vdwg.mxu0
        %s3132 = scalar_lea.vmem [#allocation7], 32
        %v3133 = vld [vmem:[%s3132] sm:$0xff]
        %v3134 = vld [vmem:[%s3132 + $0x8] sm:$0xff]
        %v3135 = vld [vmem:[%s3132 + $0x10] sm:$0xff]
        %v3136 = vld [vmem:[%s3132 + $0x18] sm:$0xff]
        %s3137 = scalar_lea.vmem [#allocation8], 1
        %v3138 = vld [vmem:[%s3137] sm:$0x1]
        %v3140 = vlaneseq
        %v3141 = vshrl.u32 %v3140, 7
        %v3142 = vsub.s32 0, %v3141
        %v3143 = vrot.slane %v3138, %v3142
        %3145 = vmatprep.subr.mxu0 0.0
        %3146 = vmatpush1.msra.mxu0 %v3133
        %3147 = vmatprep.subr.mxu0 0.0
        %3148 = vmatpush1.msra.mxu0 %v3134
        %3149 = vmatprep.subr.mxu0 0.0
        %3150 = vmatpush1.msra.mxu0 %v3135
        %3151 = vmatprep.subr.mxu0 0.0
        %3152 = vmatpush1.msra.mxu0 %v3136
        %3153 = vmatprep.subr.mxu0 0.0
        %3154 = vmatpush1.msra.mxu0 0.0
        %3155 = vmatprep.subr.mxu0 0.0
        %3156 = vmatpush1.msra.mxu0 0.0
        %3157 = vmatprep.subr.mxu0 0.0
        %3158 = vmatpush1.msra.mxu0 0.0
        %3159 = vmatprep.subr.mxu0 0.0
        %3160 = vmatpush1.msra.mxu0 0.0
        %3161 = vmatprep.subr.mxu0 0.0
        %3162 = vmatpush1.msra.mxu0 0.0
        %3163 = vmatprep.subr.mxu0 0.0
        %3164 = vmatpush1.msra.mxu0 0.0
        %3165 = vmatprep.subr.mxu0 0.0
        %3166 = vmatpush1.msra.mxu0 0.0
        %3167 = vmatprep.subr.mxu0 0.0
        %3168 = vmatpush1.msra.mxu0 0.0
        %3169 = vmatprep.subr.mxu0 0.0
        %3170 = vmatpush1.msra.mxu0 0.0
        %3171 = vmatprep.subr.mxu0 0.0
        %3172 = vmatpush1.msra.mxu0 0.0
        %3173 = vmatprep.subr.mxu0 0.0
        %3174 = vmatpush1.msra.mxu0 0.0
        %3175 = vmatprep.subr.mxu0 0.0
        %3176 = vmatpush1.msra.mxu0 0.0
        %3177 = vmatprep.subr.mxu0 0.0
        %3178 = vmatpush1.msra.mxu0 0.0
        %3179 = vmatprep.subr.mxu0 0.0
        %3180 = vmatpush1.msra.mxu0 0.0
        %3181 = vmatprep.subr.mxu0 0.0
        %3182 = vmatpush1.msra.mxu0 0.0
        %3183 = vmatprep.subr.mxu0 0.0
        %3184 = vmatpush1.msra.mxu0 0.0
        %3185 = vmatprep.subr.mxu0 0.0
        %3186 = vmatpush1.msra.mxu0 0.0
        %3187 = vmatprep.subr.mxu0 0.0
        %3188 = vmatpush1.msra.mxu0 0.0
        %3189 = vmatprep.subr.mxu0 0.0
        %3190 = vmatpush1.msra.mxu0 0.0
        %3191 = vmatprep.subr.mxu0 0.0
        %3192 = vmatpush1.msra.mxu0 0.0
        %3193 = vmatprep.subr.mxu0 0.0
        %3194 = vmatpush1.msra.mxu0 0.0
        %3195 = vmatprep.subr.mxu0 0.0
        %3196 = vmatpush1.msra.mxu0 0.0
        %3197 = vmatprep.subr.mxu0 0.0
        %3198 = vmatpush1.msra.mxu0 0.0
        %3199 = vmatprep.subr.mxu0 0.0
        %3200 = vmatpush1.msra.mxu0 0.0
        %3201 = vmatprep.subr.mxu0 0.0
        %3202 = vmatpush1.msra.mxu0 0.0
        %3203 = vmatprep.subr.mxu0 0.0
        %3204 = vmatpush1.msra.mxu0 0.0
        %3205 = vmatprep.subr.mxu0 0.0
        %3206 = vmatpush1.msra.mxu0 0.0
        %3207 = vmatprep.subr.mxu0 0.0
        %3208 = vmatpush1.msra.mxu0 0.0
        %3209 = vmatprep.mubr.f32.mxu0 0.0
        %3210 = vmatmul.mubr.f32.gmra.mrb[0].mxu0 %v3060
        %v3211 = vpop.f32.mrb[0].mxu0
        %v3212 = vadd.f32 %v3143, %v3211
        %v3213 = vpop.f32.mrb[0].mxu0
        %3214 = vdwg.mxu0
        %s3215 = scalar_lea.vmem [#allocation10], 32
        %v3216 = vld [vmem:[%s3215] sm:$0xff]
        %v3217 = vld [vmem:[%s3215 + $0x8] sm:$0xff]
        %v3218 = vld [vmem:[%s3215 + $0x10] sm:$0xff]
        %v3219 = vld [vmem:[%s3215 + $0x18] sm:$0xff]
        %s3220 = scalar_lea.vmem [#allocation11], 1
        %v3221 = vld [vmem:[%s3220] sm:$0x1]
        %v3223 = vlaneseq
        %v3224 = vshrl.u32 %v3223, 7
        %v3225 = vsub.s32 0, %v3224
        %v3226 = vrot.slane %v3221, %v3225
        %3228 = vmatprep.subr.mxu0 0.0
        %3229 = vmatpush1.msra.mxu0 %v3216
        %3230 = vmatprep.subr.mxu0 0.0
        %3231 = vmatpush1.msra.mxu0 %v3217
        %3232 = vmatprep.subr.mxu0 0.0
        %3233 = vmatpush1.msra.mxu0 %v3218
        %3234 = vmatprep.subr.mxu0 0.0
        %3235 = vmatpush1.msra.mxu0 %v3219
        %3236 = vmatprep.subr.mxu0 0.0
        %3237 = vmatpush1.msra.mxu0 0.0
        %3238 = vmatprep.subr.mxu0 0.0
        %3239 = vmatpush1.msra.mxu0 0.0
        %3240 = vmatprep.subr.mxu0 0.0
        %3241 = vmatpush1.msra.mxu0 0.0
        %3242 = vmatprep.subr.mxu0 0.0
        %3243 = vmatpush1.msra.mxu0 0.0
        %3244 = vmatprep.subr.mxu0 0.0
        %3245 = vmatpush1.msra.mxu0 0.0
        %3246 = vmatprep.subr.mxu0 0.0
        %3247 = vmatpush1.msra.mxu0 0.0
        %3248 = vmatprep.subr.mxu0 0.0
        %3249 = vmatpush1.msra.mxu0 0.0
        %3250 = vmatprep.subr.mxu0 0.0
        %3251 = vmatpush1.msra.mxu0 0.0
        %3252 = vmatprep.subr.mxu0 0.0
        %3253 = vmatpush1.msra.mxu0 0.0
        %3254 = vmatprep.subr.mxu0 0.0
        %3255 = vmatpush1.msra.mxu0 0.0
        %3256 = vmatprep.subr.mxu0 0.0
        %3257 = vmatpush1.msra.mxu0 0.0
        %3258 = vmatprep.subr.mxu0 0.0
        %3259 = vmatpush1.msra.mxu0 0.0
        %3260 = vmatprep.subr.mxu0 0.0
        %3261 = vmatpush1.msra.mxu0 0.0
        %3262 = vmatprep.subr.mxu0 0.0
        %3263 = vmatpush1.msra.mxu0 0.0
        %3264 = vmatprep.subr.mxu0 0.0
        %3265 = vmatpush1.msra.mxu0 0.0
        %3266 = vmatprep.subr.mxu0 0.0
        %3267 = vmatpush1.msra.mxu0 0.0
        %3268 = vmatprep.subr.mxu0 0.0
        %3269 = vmatpush1.msra.mxu0 0.0
        %3270 = vmatprep.subr.mxu0 0.0
        %3271 = vmatpush1.msra.mxu0 0.0
        %3272 = vmatprep.subr.mxu0 0.0
        %3273 = vmatpush1.msra.mxu0 0.0
        %3274 = vmatprep.subr.mxu0 0.0
        %3275 = vmatpush1.msra.mxu0 0.0
        %3276 = vmatprep.subr.mxu0 0.0
        %3277 = vmatpush1.msra.mxu0 0.0
        %3278 = vmatprep.subr.mxu0 0.0
        %3279 = vmatpush1.msra.mxu0 0.0
        %3280 = vmatprep.subr.mxu0 0.0
        %3281 = vmatpush1.msra.mxu0 0.0
        %3282 = vmatprep.subr.mxu0 0.0
        %3283 = vmatpush1.msra.mxu0 0.0
        %3284 = vmatprep.subr.mxu0 0.0
        %3285 = vmatpush1.msra.mxu0 0.0
        %3286 = vmatprep.subr.mxu0 0.0
        %3287 = vmatpush1.msra.mxu0 0.0
        %3288 = vmatprep.subr.mxu0 0.0
        %3289 = vmatpush1.msra.mxu0 0.0
        %3290 = vmatprep.subr.mxu0 0.0
        %3291 = vmatpush1.msra.mxu0 0.0
        %3292 = vmatprep.mubr.f32.mxu0 0.0
        %3293 = vmatmul.mubr.f32.gmra.mrb[0].mxu0 %v3060
        %v3294 = vpop.f32.mrb[0].mxu0
        %v3295 = vadd.f32 %v3226, %v3294
        %v3296 = vpop.f32.mrb[0].mxu0
        %3297 = vdwg.mxu0
        %v3298 = vmax.f32 %v3129, 0.0
        %v3299 = vand.u32 2147483647, %v3129
        %v3300 = vsub.f32 0.0, %v3299
        %v3301 = vmul.f32 %v3300, 1.442695
        %v3302 = vpow.pop %v3301
        %v3303 = vadd.f32 %v3302, 1.0
        %v3304 = vlog2.pop %v3303
        %v3305 = vmul.f32 %v3304, 0.6931472
        %v3306 = vadd.f32 %v3298, %v3305
        %v3307 = vtanh.pop %v3306
        %v3308 = vmul.f32 %v3129, %v3307
        %v3309 = vmul.f32 %v3308, %v3212
        %s3310 = scalar_lea.vmem %s45, 80
        %v3311 = vld [vmem:[%s3310] sm:$0xff]
        %v3312 = vld [vmem:[%s3310 + $0x8] sm:$0xff]
        %v3313 = vld [vmem:[%s3310 + $0x10] sm:$0xff]
        %v3314 = vld [vmem:[%s3310 + $0x18] sm:$0xff]
        %v3315 = vld [vmem:[%s3310 + $0x20] sm:$0xff]
        %v3316 = vld [vmem:[%s3310 + $0x28] sm:$0xff]
        %v3317 = vld [vmem:[%s3310 + $0x30] sm:$0xff]
        %v3318 = vld [vmem:[%s3310 + $0x38] sm:$0xff]
        %v3319 = vld [vmem:[%s3310 + $0x40] sm:$0xff]
        %v3320 = vld [vmem:[%s3310 + $0x48] sm:$0xff]
        %s3321 = scalar_lea.vmem [#allocation13], 1
        %v3322 = vld [vmem:[%s3321] sm:$0x1]
        %v3324 = vlaneseq
        %v3325 = vshrl.u32 %v3324, 7
        %v3326 = vsub.s32 0, %v3325
        %v3327 = vrot.slane %v3322, %v3326
        %v3330 = vsel %vm2240, %v3309, 0
        %3332 = vmatprep.subr.mxu0 0.0
        %3333 = vmatpush1.msra.mxu0 %v3311
        %3334 = vmatprep.subr.mxu0 0.0
        %3335 = vmatpush1.msra.mxu0 %v3312
        %3336 = vmatprep.subr.mxu0 0.0
        %3337 = vmatpush1.msra.mxu0 %v3313
        %3338 = vmatprep.subr.mxu0 0.0
        %3339 = vmatpush1.msra.mxu0 %v3314
        %3340 = vmatprep.subr.mxu0 0.0
        %3341 = vmatpush1.msra.mxu0 %v3315
        %3342 = vmatprep.subr.mxu0 0.0
        %3343 = vmatpush1.msra.mxu0 %v3316
        %3344 = vmatprep.subr.mxu0 0.0
        %3345 = vmatpush1.msra.mxu0 %v3317
        %3346 = vmatprep.subr.mxu0 0.0
        %3347 = vmatpush1.msra.mxu0 %v3318
        %3348 = vmatprep.subr.mxu0 0.0
        %3349 = vmatpush1.msra.mxu0 %v3319
        %3350 = vmatprep.subr.mxu0 0.0
        %3351 = vmatpush1.msra.mxu0 %v3320
        %3352 = vmatprep.subr.mxu0 0.0
        %3353 = vmatpush1.msra.mxu0 0.0
        %3354 = vmatprep.subr.mxu0 0.0
        %3355 = vmatpush1.msra.mxu0 0.0
        %3356 = vmatprep.subr.mxu0 0.0
        %3357 = vmatpush1.msra.mxu0 0.0
        %3358 = vmatprep.subr.mxu0 0.0
        %3359 = vmatpush1.msra.mxu0 0.0
        %3360 = vmatprep.subr.mxu0 0.0
        %3361 = vmatpush1.msra.mxu0 0.0
        %3362 = vmatprep.subr.mxu0 0.0
        %3363 = vmatpush1.msra.mxu0 0.0
        %3364 = vmatprep.subr.mxu0 0.0
        %3365 = vmatpush1.msra.mxu0 0.0
        %3366 = vmatprep.subr.mxu0 0.0
        %3367 = vmatpush1.msra.mxu0 0.0
        %3368 = vmatprep.subr.mxu0 0.0
        %3369 = vmatpush1.msra.mxu0 0.0
        %3370 = vmatprep.subr.mxu0 0.0
        %3371 = vmatpush1.msra.mxu0 0.0
        %3372 = vmatprep.subr.mxu0 0.0
        %3373 = vmatpush1.msra.mxu0 0.0
        %3374 = vmatprep.subr.mxu0 0.0
        %3375 = vmatpush1.msra.mxu0 0.0
        %3376 = vmatprep.subr.mxu0 0.0
        %3377 = vmatpush1.msra.mxu0 0.0
        %3378 = vmatprep.subr.mxu0 0.0
        %3379 = vmatpush1.msra.mxu0 0.0
        %3380 = vmatprep.subr.mxu0 0.0
        %3381 = vmatpush1.msra.mxu0 0.0
        %3382 = vmatprep.subr.mxu0 0.0
        %3383 = vmatpush1.msra.mxu0 0.0
        %3384 = vmatprep.subr.mxu0 0.0
        %3385 = vmatpush1.msra.mxu0 0.0
        %3386 = vmatprep.subr.mxu0 0.0
        %3387 = vmatpush1.msra.mxu0 0.0
        %3388 = vmatprep.subr.mxu0 0.0
        %3389 = vmatpush1.msra.mxu0 0.0
        %3390 = vmatprep.subr.mxu0 0.0
        %3391 = vmatpush1.msra.mxu0 0.0
        %3392 = vmatprep.subr.mxu0 0.0
        %3393 = vmatpush1.msra.mxu0 0.0
        %3394 = vmatprep.subr.mxu0 0.0
        %3395 = vmatpush1.msra.mxu0 0.0
        %3396 = vmatprep.mubr.f32.mxu0 0.0
        %3397 = vmatmul.mubr.f32.gmra.mrb[0].mxu0 %v3330
        %v3398 = vpop.f32.mrb[0].mxu0
        %v3399 = vadd.f32 %v3327, %v3398
        %v3400 = vpop.f32.mrb[0].mxu0
        %3401 = vdwg.mxu0
        %v3402 = vxor.u32 %v3295, 2147483648
        %v3403 = vmul.f32 %v3402, 1.442695
        %v3404 = vpow.pop %v3403
        %v3405 = vadd.f32 %v3404, 1.0
        %v3406 = vrcp.pop %v3405
        %v3407 = vmul.f32 1.0, %v3406
        %v3408 = vmul.f32 %v3407, %v3399
        %v3409 = vadd.f32 %v2943, %v3408
        %v3410 = vld [vmem:[%s49] sm:$0x1]
        %v3411 = vld [vmem:[%s51] sm:$0x1]
        %v3412 = vsel %vm1241, %v3409, 0.0
        %3413 = vadd.xlane.f32.xlu0 %v3412
        %v3414 = vpop.xlane.xlu0 %3413
        %v3415 = vmul.f32 %v3414, %v1245
        %v3416 = vsub.f32 %v3409, %v3415
        %v3417 = vmul.f32 %v3416, %v3416
        %v3418 = vsel %vm1241, %v3417, 0.0
        %3419 = vadd.xlane.f32.xlu0 %v3418
        %v3420 = vpop.xlane.xlu0 %3419
        %v3421 = vmul.f32 %v3420, %v1245
        %v3422 = vadd.f32 %v3421, 1e-05
        %v3423 = vrsqrt.pop %v3422
        %v3424 = vmul.f32 %v3416, %v3423
        %v3426 = vlaneseq
        %v3427 = vshrl.u32 %v3426, 7
        %v3428 = vsub.s32 0, %v3427
        %v3429 = vrot.slane %v3410, %v3428
        %v3431 = vmul.f32 %v3424, %v3429
        %v3433 = vlaneseq
        %v3434 = vshrl.u32 %v3433, 7
        %v3435 = vsub.s32 0, %v3434
        %v3436 = vrot.slane %v3411, %v3435
        %v3438 = vadd.f32 %v3431, %v3436
        %v3439 = vld [vmem:[#allocation14] sm:$0xff]
        %v3440 = vld [vmem:[#allocation14 + $0x8] sm:$0xff]
        %v3441 = vld [vmem:[#allocation14 + $0x10] sm:$0xff]
        %v3442 = vld [vmem:[#allocation14 + $0x18] sm:$0xff]
        %v3443 = vld [vmem:[#allocation14 + $0x20] sm:$0xff]
        %v3444 = vld [vmem:[#allocation14 + $0x28] sm:$0xff]
        %v3445 = vld [vmem:[#allocation14 + $0x30] sm:$0xff]
        %v3446 = vld [vmem:[#allocation14 + $0x38] sm:$0xff]
        %v3447 = vld [vmem:[%s57] sm:$0x3]
        %v3449 = vlaneseq
        %v3450 = vshrl.u32 %v3449, 7
        %v3451 = vsub.s32 0, %v3450
        %v3452 = vrot.slane %v3447, %v3451
        %v3453 = vlaneseq
        %v3454 = vshrl.u32 %v3453, 7
        %v3455 = vsub.s32 1, %v3454
        %v3456 = vrot.slane %v3447, %v3455
        %v3460 = vsel %vm1241, %v3438, 0
        %3462 = vmatprep.subr.mxu0 %v3440
        %3463 = vmatpush1.msra.mxu0 %v3439
        %3464 = vmatprep.subr.mxu0 %v3442
        %3465 = vmatpush1.msra.mxu0 %v3441
        %3466 = vmatprep.subr.mxu0 %v3444
        %3467 = vmatpush1.msra.mxu0 %v3443
        %3468 = vmatprep.subr.mxu0 %v3446
        %3469 = vmatpush1.msra.mxu0 %v3445
        %3470 = vmatprep.subr.mxu0 0.0
        %3471 = vmatpush1.msra.mxu0 0.0
        %3472 = vmatprep.subr.mxu0 0.0
        %3473 = vmatpush1.msra.mxu0 0.0
        %3474 = vmatprep.subr.mxu0 0.0
        %3475 = vmatpush1.msra.mxu0 0.0
        %3476 = vmatprep.subr.mxu0 0.0
        %3477 = vmatpush1.msra.mxu0 0.0
        %3478 = vmatprep.subr.mxu0 0.0
        %3479 = vmatpush1.msra.mxu0 0.0
        %3480 = vmatprep.subr.mxu0 0.0
        %3481 = vmatpush1.msra.mxu0 0.0
        %3482 = vmatprep.subr.mxu0 0.0
        %3483 = vmatpush1.msra.mxu0 0.0
        %3484 = vmatprep.subr.mxu0 0.0
        %3485 = vmatpush1.msra.mxu0 0.0
        %3486 = vmatprep.subr.mxu0 0.0
        %3487 = vmatpush1.msra.mxu0 0.0
        %3488 = vmatprep.subr.mxu0 0.0
        %3489 = vmatpush1.msra.mxu0 0.0
        %3490 = vmatprep.subr.mxu0 0.0
        %3491 = vmatpush1.msra.mxu0 0.0
        %3492 = vmatprep.subr.mxu0 0.0
        %3493 = vmatpush1.msra.mxu0 0.0
        %3494 = vmatprep.subr.mxu0 0.0
        %3495 = vmatpush1.msra.mxu0 0.0
        %3496 = vmatprep.subr.mxu0 0.0
        %3497 = vmatpush1.msra.mxu0 0.0
        %3498 = vmatprep.subr.mxu0 0.0
        %3499 = vmatpush1.msra.mxu0 0.0
        %3500 = vmatprep.subr.mxu0 0.0
        %3501 = vmatpush1.msra.mxu0 0.0
        %3502 = vmatprep.subr.mxu0 0.0
        %3503 = vmatpush1.msra.mxu0 0.0
        %3504 = vmatprep.subr.mxu0 0.0
        %3505 = vmatpush1.msra.mxu0 0.0
        %3506 = vmatprep.subr.mxu0 0.0
        %3507 = vmatpush1.msra.mxu0 0.0
        %3508 = vmatprep.subr.mxu0 0.0
        %3509 = vmatpush1.msra.mxu0 0.0
        %3510 = vmatprep.subr.mxu0 0.0
        %3511 = vmatpush1.msra.mxu0 0.0
        %3512 = vmatprep.subr.mxu0 0.0
        %3513 = vmatpush1.msra.mxu0 0.0
        %3514 = vmatprep.subr.mxu0 0.0
        %3515 = vmatpush1.msra.mxu0 0.0
        %3516 = vmatprep.subr.mxu0 0.0
        %3517 = vmatpush1.msra.mxu0 0.0
        %3518 = vmatprep.subr.mxu0 0.0
        %3519 = vmatpush1.msra.mxu0 0.0
        %3520 = vmatprep.subr.mxu0 0.0
        %3521 = vmatpush1.msra.mxu0 0.0
        %3522 = vmatprep.subr.mxu0 0.0
        %3523 = vmatpush1.msra.mxu0 0.0
        %3524 = vmatprep.subr.mxu0 0.0
        %3525 = vmatpush1.msra.mxu0 0.0
        %3526 = vmatprep.mubr.f32.mxu0 0.0
        %3527 = vmatmul.mubr.f32.gmra.mrb[0].mxu0 %v3460
        %v3528 = vpop.f32.mrb[0].mxu0
        %v3529 = vadd.f32 %v3452, %v3528
        %v3530 = vpop.f32.mrb[0].mxu0
        %v3531 = vadd.f32 %v3456, %v3530
        %3532 = vdwg.mxu0
        %v3533 = vld [vmem:[#allocation16] sm:$0xff]
        %v3534 = vld [vmem:[#allocation16 + $0x8] sm:$0xff]
        %v3535 = vld [vmem:[#allocation16 + $0x10] sm:$0xff]
        %v3536 = vld [vmem:[#allocation16 + $0x18] sm:$0xff]
        %v3537 = vld [vmem:[#allocation16 + $0x20] sm:$0xff]
        %v3538 = vld [vmem:[#allocation16 + $0x28] sm:$0xff]
        %v3539 = vld [vmem:[#allocation16 + $0x30] sm:$0xff]
        %v3540 = vld [vmem:[#allocation16 + $0x38] sm:$0xff]
        %v3541 = vld [vmem:[#allocation17] sm:$0x3]
        %v3543 = vlaneseq
        %v3544 = vshrl.u32 %v3543, 7
        %v3545 = vsub.s32 0, %v3544
        %v3546 = vrot.slane %v3541, %v3545
        %v3547 = vlaneseq
        %v3548 = vshrl.u32 %v3547, 7
        %v3549 = vsub.s32 1, %v3548
        %v3550 = vrot.slane %v3541, %v3549
        %3553 = vmatprep.subr.mxu0 %v3534
        %3554 = vmatpush1.msra.mxu0 %v3533
        %3555 = vmatprep.subr.mxu0 %v3536
        %3556 = vmatpush1.msra.mxu0 %v3535
        %3557 = vmatprep.subr.mxu0 %v3538
        %3558 = vmatpush1.msra.mxu0 %v3537
        %3559 = vmatprep.subr.mxu0 %v3540
        %3560 = vmatpush1.msra.mxu0 %v3539
        %3561 = vmatprep.subr.mxu0 0.0
        %3562 = vmatpush1.msra.mxu0 0.0
        %3563 = vmatprep.subr.mxu0 0.0
        %3564 = vmatpush1.msra.mxu0 0.0
        %3565 = vmatprep.subr.mxu0 0.0
        %3566 = vmatpush1.msra.mxu0 0.0
        %3567 = vmatprep.subr.mxu0 0.0
        %3568 = vmatpush1.msra.mxu0 0.0
        %3569 = vmatprep.subr.mxu0 0.0
        %3570 = vmatpush1.msra.mxu0 0.0
        %3571 = vmatprep.subr.mxu0 0.0
        %3572 = vmatpush1.msra.mxu0 0.0
        %3573 = vmatprep.subr.mxu0 0.0
        %3574 = vmatpush1.msra.mxu0 0.0
        %3575 = vmatprep.subr.mxu0 0.0
        %3576 = vmatpush1.msra.mxu0 0.0
        %3577 = vmatprep.subr.mxu0 0.0
        %3578 = vmatpush1.msra.mxu0 0.0
        %3579 = vmatprep.subr.mxu0 0.0
        %3580 = vmatpush1.msra.mxu0 0.0
        %3581 = vmatprep.subr.mxu0 0.0
        %3582 = vmatpush1.msra.mxu0 0.0
        %3583 = vmatprep.subr.mxu0 0.0
        %3584 = vmatpush1.msra.mxu0 0.0
        %3585 = vmatprep.subr.mxu0 0.0
        %3586 = vmatpush1.msra.mxu0 0.0
        %3587 = vmatprep.subr.mxu0 0.0
        %3588 = vmatpush1.msra.mxu0 0.0
        %3589 = vmatprep.subr.mxu0 0.0
        %3590 = vmatpush1.msra.mxu0 0.0
        %3591 = vmatprep.subr.mxu0 0.0
        %3592 = vmatpush1.msra.mxu0 0.0
        %3593 = vmatprep.subr.mxu0 0.0
        %3594 = vmatpush1.msra.mxu0 0.0
        %3595 = vmatprep.subr.mxu0 0.0
        %3596 = vmatpush1.msra.mxu0 0.0
        %3597 = vmatprep.subr.mxu0 0.0
        %3598 = vmatpush1.msra.mxu0 0.0
        %3599 = vmatprep.subr.mxu0 0.0
        %3600 = vmatpush1.msra.mxu0 0.0
        %3601 = vmatprep.subr.mxu0 0.0
        %3602 = vmatpush1.msra.mxu0 0.0
        %3603 = vmatprep.subr.mxu0 0.0
        %3604 = vmatpush1.msra.mxu0 0.0
        %3605 = vmatprep.subr.mxu0 0.0
        %3606 = vmatpush1.msra.mxu0 0.0
        %3607 = vmatprep.subr.mxu0 0.0
        %3608 = vmatpush1.msra.mxu0 0.0
        %3609 = vmatprep.subr.mxu0 0.0
        %3610 = vmatpush1.msra.mxu0 0.0
        %3611 = vmatprep.subr.mxu0 0.0
        %3612 = vmatpush1.msra.mxu0 0.0
        %3613 = vmatprep.subr.mxu0 0.0
        %3614 = vmatpush1.msra.mxu0 0.0
        %3615 = vmatprep.subr.mxu0 0.0
        %3616 = vmatpush1.msra.mxu0 0.0
        %3617 = vmatprep.mubr.f32.mxu0 0.0
        %3618 = vmatmul.mubr.f32.gmra.mrb[0].mxu0 %v3460
        %v3619 = vpop.f32.mrb[0].mxu0
        %v3620 = vadd.f32 %v3546, %v3619
        %v3621 = vpop.f32.mrb[0].mxu0
        %v3622 = vadd.f32 %v3550, %v3621
        %3623 = vdwg.mxu0
        %3624 = vmatprep.subr.mxu0 %v3622
        %3625 = vmatpush1.xpose.msra.mxu0 %v3620
        %3626 = vmatprep.subr.mxu0 0.0
        %3627 = vmatpush1.xpose.msra.mxu0 0.0
        %3628 = vmatprep.subr.mxu0 0.0
        %3629 = vmatpush1.xpose.msra.mxu0 0.0
        %3630 = vmatprep.subr.mxu0 0.0
        %3631 = vmatpush1.xpose.msra.mxu0 0.0
        %3632 = vmatprep.subr.mxu0 0.0
        %3633 = vmatpush1.xpose.msra.mxu0 0.0
        %3634 = vmatprep.subr.mxu0 0.0
        %3635 = vmatpush1.xpose.msra.mxu0 0.0
        %3636 = vmatprep.subr.mxu0 0.0
        %3637 = vmatpush1.xpose.msra.mxu0 0.0
        %3638 = vmatprep.subr.mxu0 0.0
        %3639 = vmatpush1.xpose.msra.mxu0 0.0
        %3640 = vmatprep.subr.mxu0 0.0
        %3641 = vmatpush1.xpose.msra.mxu0 0.0
        %3642 = vmatprep.subr.mxu0 0.0
        %3643 = vmatpush1.xpose.msra.mxu0 0.0
        %3644 = vmatprep.subr.mxu0 0.0
        %3645 = vmatpush1.xpose.msra.mxu0 0.0
        %3646 = vmatprep.subr.mxu0 0.0
        %3647 = vmatpush1.xpose.msra.mxu0 0.0
        %3648 = vmatprep.subr.mxu0 0.0
        %3649 = vmatpush1.xpose.msra.mxu0 0.0
        %3650 = vmatprep.subr.mxu0 0.0
        %3651 = vmatpush1.xpose.msra.mxu0 0.0
        %3652 = vmatprep.subr.mxu0 0.0
        %3653 = vmatpush1.xpose.msra.mxu0 0.0
        %3654 = vmatprep.subr.mxu0 0.0
        %3655 = vmatpush1.xpose.msra.mxu0 0.0
        %3656 = vmatprep.subr.mxu0 0.0
        %3657 = vmatpush1.xpose.msra.mxu0 0.0
        %3658 = vmatprep.subr.mxu0 0.0
        %3659 = vmatpush1.xpose.msra.mxu0 0.0
        %3660 = vmatprep.subr.mxu0 0.0
        %3661 = vmatpush1.xpose.msra.mxu0 0.0
        %3662 = vmatprep.subr.mxu0 0.0
        %3663 = vmatpush1.xpose.msra.mxu0 0.0
        %3664 = vmatprep.subr.mxu0 0.0
        %3665 = vmatpush1.xpose.msra.mxu0 0.0
        %3666 = vmatprep.subr.mxu0 0.0
        %3667 = vmatpush1.xpose.msra.mxu0 0.0
        %3668 = vmatprep.subr.mxu0 0.0
        %3669 = vmatpush1.xpose.msra.mxu0 0.0
        %3670 = vmatprep.subr.mxu0 0.0
        %3671 = vmatpush1.xpose.msra.mxu0 0.0
        %3672 = vmatprep.subr.mxu0 0.0
        %3673 = vmatpush1.xpose.msra.mxu0 0.0
        %3674 = vmatprep.subr.mxu0 0.0
        %3675 = vmatpush1.xpose.msra.mxu0 0.0
        %3676 = vmatprep.subr.mxu0 0.0
        %3677 = vmatpush1.xpose.msra.mxu0 0.0
        %3678 = vmatprep.subr.mxu0 0.0
        %3679 = vmatpush1.xpose.msra.mxu0 0.0
        %3680 = vmatprep.subr.mxu0 0.0
        %3681 = vmatpush1.xpose.msra.mxu0 0.0
        %3682 = vmatprep.subr.mxu0 0.0
        %3683 = vmatpush1.xpose.msra.mxu0 0.0
        %3684 = vmatprep.subr.mxu0 0.0
        %3685 = vmatpush1.xpose.msra.mxu0 0.0
        %3686 = vmatprep.subr.mxu0 0.0
        %3687 = vmatpush1.xpose.msra.mxu0 0.0
        %3688 = vmatprep.mubr.f32.mxu0 %v3531
        %3689 = vmatmul.mubr.f32.gmra.mrb[0].mxu0 %v3529
        %v3690 = vpop.f32.mrb[0].mxu0
        %v3691 = vadd.f32 0.0, %v3690
        %v3692 = vpop.f32.mrb[0].mxu0
        %3693 = vdwg.mxu0
        %v3694 = vsel %vm1144, %v3691, 0.0
        %v3695 = vmul.f32 %v3694, 0.00390625
        %v3697 = vsel %vm1270, %v3695, 0
        %3699 = vmatprep.subr.mxu0 0.0
        %3700 = vmatpush1.msra.mxu0 %v1152
        %3701 = vmatprep.subr.mxu0 0.0
        %3702 = vmatpush1.msra.mxu0 0.0
        %3703 = vmatprep.subr.mxu0 0.0
        %3704 = vmatpush1.msra.mxu0 0.0
        %3705 = vmatprep.subr.mxu0 0.0
        %3706 = vmatpush1.msra.mxu0 0.0
        %3707 = vmatprep.subr.mxu0 0.0
        %3708 = vmatpush1.msra.mxu0 0.0
        %3709 = vmatprep.subr.mxu0 0.0
        %3710 = vmatpush1.msra.mxu0 0.0
        %3711 = vmatprep.subr.mxu0 0.0
        %3712 = vmatpush1.msra.mxu0 0.0
        %3713 = vmatprep.subr.mxu0 0.0
        %3714 = vmatpush1.msra.mxu0 0.0
        %3715 = vmatprep.subr.mxu0 0.0
        %3716 = vmatpush1.msra.mxu0 0.0
        %3717 = vmatprep.subr.mxu0 0.0
        %3718 = vmatpush1.msra.mxu0 0.0
        %3719 = vmatprep.subr.mxu0 0.0
        %3720 = vmatpush1.msra.mxu0 0.0
        %3721 = vmatprep.subr.mxu0 0.0
        %3722 = vmatpush1.msra.mxu0 0.0
        %3723 = vmatprep.subr.mxu0 0.0
        %3724 = vmatpush1.msra.mxu0 0.0
        %3725 = vmatprep.subr.mxu0 0.0
        %3726 = vmatpush1.msra.mxu0 0.0
        %3727 = vmatprep.subr.mxu0 0.0
        %3728 = vmatpush1.msra.mxu0 0.0
        %3729 = vmatprep.subr.mxu0 0.0
        %3730 = vmatpush1.msra.mxu0 0.0
        %3731 = vmatprep.subr.mxu0 0.0
        %3732 = vmatpush1.msra.mxu0 0.0
        %3733 = vmatprep.subr.mxu0 0.0
        %3734 = vmatpush1.msra.mxu0 0.0
        %3735 = vmatprep.subr.mxu0 0.0
        %3736 = vmatpush1.msra.mxu0 0.0
        %3737 = vmatprep.subr.mxu0 0.0
        %3738 = vmatpush1.msra.mxu0 0.0
        %3739 = vmatprep.subr.mxu0 0.0
        %3740 = vmatpush1.msra.mxu0 0.0
        %3741 = vmatprep.subr.mxu0 0.0
        %3742 = vmatpush1.msra.mxu0 0.0
        %3743 = vmatprep.subr.mxu0 0.0
        %3744 = vmatpush1.msra.mxu0 0.0
        %3745 = vmatprep.subr.mxu0 0.0
        %3746 = vmatpush1.msra.mxu0 0.0
        %3747 = vmatprep.subr.mxu0 0.0
        %3748 = vmatpush1.msra.mxu0 0.0
        %3749 = vmatprep.subr.mxu0 0.0
        %3750 = vmatpush1.msra.mxu0 0.0
        %3751 = vmatprep.subr.mxu0 0.0
        %3752 = vmatpush1.msra.mxu0 0.0
        %3753 = vmatprep.subr.mxu0 0.0
        %3754 = vmatpush1.msra.mxu0 0.0
        %3755 = vmatprep.subr.mxu0 0.0
        %3756 = vmatpush1.msra.mxu0 0.0
        %3757 = vmatprep.subr.mxu0 0.0
        %3758 = vmatpush1.msra.mxu0 0.0
        %3759 = vmatprep.subr.mxu0 0.0
        %3760 = vmatpush1.msra.mxu0 0.0
        %3761 = vmatprep.subr.mxu0 0.0
        %3762 = vmatpush1.msra.mxu0 0.0
        %3763 = vmatprep.mubr.f32.mxu0 0.0
        %3764 = vmatmul.mubr.f32.gmra.mrb[0].mxu0 %v3697
        %v3765 = vpop.f32.mrb[0].mxu0
        %v3766 = vadd.f32 0.0, %v3765
        %v3767 = vpop.f32.mrb[0].mxu0
        %3768 = vdwg.mxu0
        %v3769 = vld [vmem:[%s53] sm:$0xff]
        %3771 = vset.pattern.permute.xlu0 0
        %3772 = vperm.xlu0 %3771, %v3769
        %v3773 = vpop.permute.xlu0 %3772
        %v3775 = vmul.f32 %v3438, %v3773
        %v3776 = vld [vmem:[#allocation19] sm:$0xff]
        %v3777 = vld [vmem:[#allocation19 + $0x8] sm:$0xff]
        %v3778 = vld [vmem:[#allocation19 + $0x10] sm:$0xff]
        %v3779 = vld [vmem:[#allocation19 + $0x18] sm:$0xff]
        %v3781 = vsel %vm1241, %v3775, 0
        %3783 = vmatprep.subr.mxu0 0.0
        %3784 = vmatpush1.msra.mxu0 %v3776
        %3785 = vmatprep.subr.mxu0 0.0
        %3786 = vmatpush1.msra.mxu0 %v3777
        %3787 = vmatprep.subr.mxu0 0.0
        %3788 = vmatpush1.msra.mxu0 %v3778
        %3789 = vmatprep.subr.mxu0 0.0
        %3790 = vmatpush1.msra.mxu0 %v3779
        %3791 = vmatprep.subr.mxu0 0.0
        %3792 = vmatpush1.msra.mxu0 0.0
        %3793 = vmatprep.subr.mxu0 0.0
        %3794 = vmatpush1.msra.mxu0 0.0
        %3795 = vmatprep.subr.mxu0 0.0
        %3796 = vmatpush1.msra.mxu0 0.0
        %3797 = vmatprep.subr.mxu0 0.0
        %3798 = vmatpush1.msra.mxu0 0.0
        %3799 = vmatprep.subr.mxu0 0.0
        %3800 = vmatpush1.msra.mxu0 0.0
        %3801 = vmatprep.subr.mxu0 0.0
        %3802 = vmatpush1.msra.mxu0 0.0
        %3803 = vmatprep.subr.mxu0 0.0
        %3804 = vmatpush1.msra.mxu0 0.0
        %3805 = vmatprep.subr.mxu0 0.0
        %3806 = vmatpush1.msra.mxu0 0.0
        %3807 = vmatprep.subr.mxu0 0.0
        %3808 = vmatpush1.msra.mxu0 0.0
        %3809 = vmatprep.subr.mxu0 0.0
        %3810 = vmatpush1.msra.mxu0 0.0
        %3811 = vmatprep.subr.mxu0 0.0
        %3812 = vmatpush1.msra.mxu0 0.0
        %3813 = vmatprep.subr.mxu0 0.0
        %3814 = vmatpush1.msra.mxu0 0.0
        %3815 = vmatprep.subr.mxu0 0.0
        %3816 = vmatpush1.msra.mxu0 0.0
        %3817 = vmatprep.subr.mxu0 0.0
        %3818 = vmatpush1.msra.mxu0 0.0
        %3819 = vmatprep.subr.mxu0 0.0
        %3820 = vmatpush1.msra.mxu0 0.0
        %3821 = vmatprep.subr.mxu0 0.0
        %3822 = vmatpush1.msra.mxu0 0.0
        %3823 = vmatprep.subr.mxu0 0.0
        %3824 = vmatpush1.msra.mxu0 0.0
        %3825 = vmatprep.subr.mxu0 0.0
        %3826 = vmatpush1.msra.mxu0 0.0
        %3827 = vmatprep.subr.mxu0 0.0
        %3828 = vmatpush1.msra.mxu0 0.0
        %3829 = vmatprep.subr.mxu0 0.0
        %3830 = vmatpush1.msra.mxu0 0.0
        %3831 = vmatprep.subr.mxu0 0.0
        %3832 = vmatpush1.msra.mxu0 0.0
        %3833 = vmatprep.subr.mxu0 0.0
        %3834 = vmatpush1.msra.mxu0 0.0
        %3835 = vmatprep.subr.mxu0 0.0
        %3836 = vmatpush1.msra.mxu0 0.0
        %3837 = vmatprep.subr.mxu0 0.0
        %3838 = vmatpush1.msra.mxu0 0.0
        %3839 = vmatprep.subr.mxu0 0.0
        %3840 = vmatpush1.msra.mxu0 0.0
        %3841 = vmatprep.subr.mxu0 0.0
        %3842 = vmatpush1.msra.mxu0 0.0
        %3843 = vmatprep.subr.mxu0 0.0
        %3844 = vmatpush1.msra.mxu0 0.0
        %3845 = vmatprep.subr.mxu0 0.0
        %3846 = vmatpush1.msra.mxu0 0.0
        %3847 = vmatprep.mubr.f32.mxu0 0.0
        %3848 = vmatmul.mubr.f32.gmra.mrb[0].mxu0 %v3781
        %v3849 = vpop.f32.mrb[0].mxu0
        %v3850 = vadd.f32 %v3766, %v3849
        %v3851 = vpop.f32.mrb[0].mxu0
        %3852 = vdwg.mxu0
        %3853 = vst [vmem:[%s1135] sm:$0xff] %v3850
        %s3854 = sand.u32 %s770, 1
        %s3855 = scalar_lea.sflag [#allocation4], %s3854
        %s3856 = sand.u32 %s770, 1
        %s3857 = smul.addr %s3856, 8
        %s3858 = scalar_lea.vmem [#allocation20], %s3857
        // Predicated region
        $region193: #{fwd.1} parent=147 // pred_check
          %p3859 = pneg %p780
        $region194: #{fwd.1} parent=147 // pred_check_branch
          %3861 = sbr.rel (%p3859) target = $region196
        $region195: #{fwd.1} parent=147 // pred_region
          %s3863 = ssub.s32 128, 128
          %3864 = vsyncadd %s3855, %s3863
          %s3865 = smul.addr %s85, 128
          %s3866 = scalar_lea.hbm %s65, %s3865
          %s3868 = sshll.u32 %s3858, 4
          %s3869 = int_to_ptr.vmem [resolvable:$true] %s3868
          %3871 = dma.vmem_to_hbm [thread:$0]  %s3869, 128, %s3866, %s3855
        $region196: #{fwd.1} parent=147 // pred_fallthru
          _
      $region148: #{fwd.1} parent=5 // pred_fallthru
        _
      %p3872 = scmp.le.s32.totalorder 2, %s80
      // Predicated region
      $region197: #{fwd.1} parent=5 // pred_check
        %p3873 = pneg %p3872
      $region198: #{fwd.1} parent=5 // pred_check_branch
        %3875 = sbr.rel (%p3873) target = $region200
      $region199: #{fwd.1} parent=5 // pred_region
        %s3876 = ssub.s32 %s80, 2
        // Predicated region
        $region201: #{fwd.1} parent=199 // pred_check
          %p3877 = pneg %p786
        $region202: #{fwd.1} parent=199 // pred_check_branch
          %3879 = sbr.rel (%p3877) target = $region204
        $region203: #{fwd.1} parent=199 // pred_region
          %s3880 = sand.u32 %s771, 1
          %s3881 = scalar_lea.sflag [#allocation4], %s3880
          %s3882 = sand.u32 %s771, 1
          %s3883 = smul.addr %s3882, 8
          %s3884 = scalar_lea.vmem [#allocation20], %s3883
          %3885 = dma.done %s3881, 128
        $region204: #{fwd.1} parent=199 // pred_fallthru
          _
      $region200: #{fwd.1} parent=5 // pred_fallthru
        _
    $region6: #{fwd.1} parent=1 // loop_footer
      %s84 = sadd.s32 1, %s80
    $region7: #{fwd.1} parent=1 // loop_footer_branch
      %79 = sbr.rel target = $region3
    $region8: #{fwd.1} parent=1 // loop_exit
      _
    %3886 = vsyncpa [#allocation3], 1
    %s3887 = scalar_lea.sflag [#allocation3], 1
    %3888 = vsyncpa %s3887, 1
    %3889 = vsyncpa [#allocation6], 1
    %3890 = vsyncpa [#allocation9], 1
    %3891 = vsyncpa [#allocation12], 1
    %3892 = vsyncpa [#allocation15], 1
    %3893 = vsyncpa [#allocation18], 1
    %3894 = vsyncpa [#allocation4], 1
    %s3895 = scalar_lea.sflag [#allocation4], 1
    %3896 = vsyncpa %s3895, 1

</llo_original>
